<compile_context>
chip_gen: v7x
topology: tpu7x:2x2x1
jax: 0.10.0
libtpu: 0.0.40
codegen_flags: <defaults>
</compile_context>

<pallas_src>
import numpy as np
import jax
import jax.numpy as jnp
from jax.experimental import pallas as pl
from jax.experimental.pallas import tpu as pltpu

BN_EPS = 1e-5
CP = 8      # channel rows padded to one full sublane tile
G = 128     # lane-aligned guard band on each side of the flat frame


def _make_kernel(N, C, H, W):
    assert C <= CP
    HW = H * W
    P = N * HW                        # flat interior positions (lane axis)
    assert G >= W + 2, "guard band must cover the largest tap shift"
    inv_cnt = 1.0 / float(P)          # BN averages over N*H*W per channel
    shifts = [(dy - 1) * W + (dx - 1) for dy in range(3) for dx in range(3)]

    def conv_bn(buf, w_ref, b, g, be, mask):
        """BN(conv3x3(buf) + b) in the channel-major flat (CP, P) layout.

        buf  : (CP, 2G+P) guard-banded channel-major activations (guards zero)
        w_ref: (CP, 9*CP) weights, columns ordered (tap, channel)
        mask : (9*CP, P)  per-tap validity (realizes the conv zero padding)
        """
        pieces = [buf[:, G + s:G + s + P] for s in shifts]    # 9 x (CP, P)
        slab = jnp.concatenate(pieces, axis=0) * mask         # (9*CP, P)
        acc = jnp.dot(w_ref[...], slab,
                      preferred_element_type=jnp.float32,
                      precision=jax.lax.Precision.HIGHEST) + b
        mean = jnp.sum(acc, axis=1, keepdims=True) * inv_cnt
        diff = acc - mean
        var = jnp.sum(diff * diff, axis=1, keepdims=True) * inv_cnt
        return diff * jax.lax.rsqrt(var + BN_EPS) * g + be

    def kernel(x_ref, w1_ref, b1_ref, g1_ref, be1_ref,
               w2_ref, b2_ref, g2_ref, be2_ref, mask_ref,
               o_ref, xbuf, y1buf):
        # ---- NCHW (viewed as (N*C, H*W)) -> channel-major flat + guards.
        xbuf[...] = jnp.zeros_like(xbuf)          # guards + zero channel rows
        for n in range(N):
            xbuf[0:C, G + n * HW:G + (n + 1) * HW] = x_ref[n * C:(n + 1) * C, :]

        mask = mask_ref[...]                      # (9*CP, P)

        # ---- Block 1: y1 = relu(bn1(conv1(x)))
        y1 = jnp.maximum(
            conv_bn(xbuf, w1_ref, b1_ref[...], g1_ref[...], be1_ref[...], mask),
            0.0)
        y1buf[:, :G] = jnp.zeros((CP, G), jnp.float32)        # guards only
        y1buf[:, G + P:] = jnp.zeros((CP, G), jnp.float32)
        y1buf[:, G:G + P] = y1                                # stays in VMEM

        # ---- Block 2: out = relu(bn2(conv2(y1)) + x)
        bn2 = conv_bn(y1buf, w2_ref, b2_ref[...], g2_ref[...], be2_ref[...],
                      mask)
        out = jnp.maximum(bn2 + xbuf[:, G:G + P], 0.0)        # (CP, P)

        # ---- channel-major flat -> NCHW row layout (reshape outside is free).
        for n in range(N):
            o_ref[n * C:(n + 1) * C, :] = out[0:C, n * HW:(n + 1) * HW]

    return kernel, P


def _tap_mask(N, C, H, W):
    """(9*CP, P) validity mask: 1 where the tap's source pixel is in-bounds."""
    P = N * H * W
    pos = np.arange(P)
    h = (pos // W) % H
    w = pos % W
    rows = []
    for dy in range(3):
        for dx in range(3):
            ody, odx = dy - 1, dx - 1
            valid = ((h + ody >= 0) & (h + ody < H) &
                     (w + odx >= 0) & (w + odx < W)).astype(np.float32)
            rows.append(np.broadcast_to(valid[None, :], (CP, P)))
    return jnp.asarray(np.concatenate(rows, axis=0))


def _pack_conv(w):
    """PyTorch (Cout, Cin, 3, 3) -> (CP, 9*CP), columns ordered (tap, ci)."""
    C = w.shape[0]
    wn = np.asarray(w)
    wm = np.zeros((CP, 9 * CP), np.float32)
    for dy in range(3):
        for dx in range(3):
            t = dy * 3 + dx
            wm[:C, t * CP:t * CP + C] = wn[:, :, dy, dx]
    return jnp.asarray(wm)


def _pad_col(v):
    out = np.zeros((CP, 1), np.float32)
    out[:v.shape[0], 0] = np.asarray(v)
    return jnp.asarray(out)


def residual_block(x_nchw, params):
    """Pallas implementation of ResidualBlock.forward (NCHW in, NCHW out)."""
    w1, b1, g1, be1, w2, b2, g2, be2 = params
    N, C, H, W = x_nchw.shape
    HW = H * W
    kernel, P = _make_kernel(N, C, H, W)

    packed = (_pack_conv(w1), _pad_col(b1), _pad_col(g1), _pad_col(be1),
              _pack_conv(w2), _pad_col(b2), _pad_col(g2), _pad_col(be2))
    mask = _tap_mask(N, C, H, W)

    x2d = x_nchw.reshape(N * C, HW)            # zero-copy reshape

    def full(shape):
        return pl.BlockSpec(shape, lambda i: (0,) * len(shape))

    args = (x2d,) + packed + (mask,)
    out2d = pl.pallas_call(
        kernel,
        grid=(1,),
        in_specs=[full(a.shape) for a in args],
        out_specs=full((N * C, HW)),
        out_shape=jax.ShapeDtypeStruct((N * C, HW), jnp.float32),
        scratch_shapes=[pltpu.VMEM((CP, 2 * G + P), jnp.float32),   # x (guarded)
                        pltpu.VMEM((CP, 2 * G + P), jnp.float32)],  # y1 (fused)
        compiler_params=pltpu.CompilerParams(
            dimension_semantics=("arbitrary",)),
    )(*args)

    return out2d.reshape(N, C, H, W)           # zero-copy reshape


def init_params(key, C):
    k1, k2, k3, k4 = jax.random.split(key, 4)
    w1 = jax.random.normal(k1, (C, C, 3, 3), jnp.float32) * 0.1
    w2 = jax.random.normal(k2, (C, C, 3, 3), jnp.float32) * 0.1
    b1 = jax.random.normal(k3, (C,), jnp.float32) * 0.1
    b2 = jax.random.normal(k4, (C,), jnp.float32) * 0.1
    # nn.BatchNorm2d defaults: gamma = 1, beta = 0
    g1 = jnp.ones((C,), jnp.float32); be1 = jnp.zeros((C,), jnp.float32)
    g2 = jnp.ones((C,), jnp.float32); be2 = jnp.zeros((C,), jnp.float32)
    return (w1, b1, g1, be1, w2, b2, g2, be2)
    # TODO(synk): BatchNorm running-stats update (training bookkeeping) is not
    # modeled; it does not affect this forward output.


def reference(x_nchw, params):
    """Pure-JAX reference mirroring the PyTorch forward (training-mode BN)."""
    w1, b1, g1, be1, w2, b2, g2, be2 = params
    N, C, H, W = x_nchw.shape

    def conv(x, w, b):
        wh = jnp.transpose(w, (2, 3, 1, 0))                   # OIHW -> HWIO
        y = jax.lax.conv_general_dilated(
            jnp.transpose(x, (0, 2, 3, 1)), wh, (1, 1), "SAME",
            dimension_numbers=("NHWC", "HWIO", "NHWC"),
            precision=jax.lax.Precision.HIGHEST)
        return jnp.transpose(y, (0, 3, 1, 2)) + b.reshape(1, C, 1, 1)

    def bn(x, g, be):
        mean = jnp.mean(x, axis=(0, 2, 3), keepdims=True)
        var = jnp.mean((x - mean) ** 2, axis=(0, 2, 3), keepdims=True)
        return ((x - mean) * jax.lax.rsqrt(var + BN_EPS)
                * g.reshape(1, C, 1, 1) + be.reshape(1, C, 1, 1))

    y = jax.nn.relu(bn(conv(x_nchw, w1, b1), g1, be1))
    y = bn(conv(y, w2, b2), g2, be2) + x_nchw
    return jax.nn.relu(y)


if __name__ == "__main__":
    key = jax.random.PRNGKey(0)
    kx, kp = jax.random.split(key)
    N, C, H, W = 2, 4, 16, 16
    x = jax.random.normal(kx, (N, C, H, W), jnp.float32)
    params = init_params(kp, C)

    out = jax.block_until_ready(residual_block(x, params))
    ref = jax.block_until_ready(reference(x, params))

    assert out.shape == (N, C, H, W)
    # Both the kernel and the reference run the convs at Precision.HIGHEST, so
    # agreement is at f32 level.
    np.testing.assert_allclose(np.asarray(out), np.asarray(ref),
                               rtol=1e-3, atol=1e-4)
    print("KERNEL_OK")
</pallas_src>

<mosaic_0001>
module attributes {stable_mosaic.version = 11 : i64} {
  func.func @kernel(%arg0: i32, %arg1: memref<8x256xf32, #tpu.memory_space<vmem>>, %arg2: memref<8x72xf32, #tpu.memory_space<vmem>>, %arg3: memref<8x1xf32, #tpu.memory_space<vmem>>, %arg4: memref<8x1xf32, #tpu.memory_space<vmem>>, %arg5: memref<8x1xf32, #tpu.memory_space<vmem>>, %arg6: memref<8x72xf32, #tpu.memory_space<vmem>>, %arg7: memref<8x1xf32, #tpu.memory_space<vmem>>, %arg8: memref<8x1xf32, #tpu.memory_space<vmem>>, %arg9: memref<8x1xf32, #tpu.memory_space<vmem>>, %arg10: memref<72x512xf32, #tpu.memory_space<vmem>>, %arg11: memref<8x256xf32, #tpu.memory_space<vmem>>, %arg12: memref<8x768xf32, #tpu.memory_space<vmem>>, %arg13: memref<8x768xf32, #tpu.memory_space<vmem>>) attributes {dimension_semantics = [#tpu.dimension_semantics<arbitrary>], iteration_bounds = array<i64: 1>, scalar_prefetch = 0 : i64, scratch_operands = 2 : i64, tpu.core_type = #tpu.core_type<tc>, window_params = [{pipeline_mode = #tpu.pipeline_mode<synchronous>, transform_indices = @transform_0, window_bounds = array<i64: 8, 256>}, {pipeline_mode = #tpu.pipeline_mode<synchronous>, transform_indices = @transform_1, window_bounds = array<i64: 8, 72>}, {pipeline_mode = #tpu.pipeline_mode<synchronous>, transform_indices = @transform_2, window_bounds = array<i64: 8, 1>}, {pipeline_mode = #tpu.pipeline_mode<synchronous>, transform_indices = @transform_3, window_bounds = array<i64: 8, 1>}, {pipeline_mode = #tpu.pipeline_mode<synchronous>, transform_indices = @transform_4, window_bounds = array<i64: 8, 1>}, {pipeline_mode = #tpu.pipeline_mode<synchronous>, transform_indices = @transform_5, window_bounds = array<i64: 8, 72>}, {pipeline_mode = #tpu.pipeline_mode<synchronous>, transform_indices = @transform_6, window_bounds = array<i64: 8, 1>}, {pipeline_mode = #tpu.pipeline_mode<synchronous>, transform_indices = @transform_7, window_bounds = array<i64: 8, 1>}, {pipeline_mode = #tpu.pipeline_mode<synchronous>, transform_indices = @transform_8, window_bounds = array<i64: 8, 1>}, {pipeline_mode = #tpu.pipeline_mode<synchronous>, transform_indices = @transform_9, window_bounds = array<i64: 72, 512>}, {pipeline_mode = #tpu.pipeline_mode<synchronous>, transform_indices = @transform_10, window_bounds = array<i64: 8, 256>}]} {
    %cst = arith.constant 0.000000e+00 : f32
    %0 = vector.broadcast %cst : f32 to vector<8x768xf32>
    %c0 = arith.constant 0 : index
    %c0_0 = arith.constant 0 : index
    %1 = vector.load %arg12[%c0, %c0_0] : memref<8x768xf32, #tpu.memory_space<vmem>>, vector<8x768xf32>
    tpu.vector_store %arg12[%c0, %c0_0], %0 {strides = array<i32>} : memref<8x768xf32, #tpu.memory_space<vmem>>, vector<8x768xf32>,
    %c0_1 = arith.constant 0 : index
    %c0_2 = arith.constant 0 : index
    %2 = vector.load %arg1[%c0_1, %c0_2] : memref<8x256xf32, #tpu.memory_space<vmem>>, vector<4x256xf32>
    %c0_3 = arith.constant 0 : index
    %c128 = arith.constant 128 : index
    %3 = vector.load %arg12[%c0_3, %c128] : memref<8x768xf32, #tpu.memory_space<vmem>>, vector<4x256xf32>
    tpu.vector_store %arg12[%c0_3, %c128], %2 {strides = array<i32>} : memref<8x768xf32, #tpu.memory_space<vmem>>, vector<4x256xf32>,
    %c4 = arith.constant 4 : index
    %c0_4 = arith.constant 0 : index
    %4 = vector.load %arg1[%c4, %c0_4] : memref<8x256xf32, #tpu.memory_space<vmem>>, vector<4x256xf32>
    %c0_5 = arith.constant 0 : index
    %c384 = arith.constant 384 : index
    %5 = vector.load %arg12[%c0_5, %c384] : memref<8x768xf32, #tpu.memory_space<vmem>>, vector<4x256xf32>
    tpu.vector_store %arg12[%c0_5, %c384], %4 {strides = array<i32>} : memref<8x768xf32, #tpu.memory_space<vmem>>, vector<4x256xf32>,
    %c0_6 = arith.constant 0 : index
    %c0_7 = arith.constant 0 : index
    %6 = vector.load %arg10[%c0_6, %c0_7] : memref<72x512xf32, #tpu.memory_space<vmem>>, vector<72x512xf32>
    %c0_8 = arith.constant 0 : index
    %c0_9 = arith.constant 0 : index
    %7 = vector.load %arg3[%c0_8, %c0_9] : memref<8x1xf32, #tpu.memory_space<vmem>>, vector<8x1xf32>
    %c0_10 = arith.constant 0 : index
    %c0_11 = arith.constant 0 : index
    %8 = vector.load %arg4[%c0_10, %c0_11] : memref<8x1xf32, #tpu.memory_space<vmem>>, vector<8x1xf32>
    %c0_12 = arith.constant 0 : index
    %c0_13 = arith.constant 0 : index
    %9 = vector.load %arg5[%c0_12, %c0_13] : memref<8x1xf32, #tpu.memory_space<vmem>>, vector<8x1xf32>
    %c0_14 = arith.constant 0 : index
    %c111 = arith.constant 111 : index
    %10 = vector.load %arg12[%c0_14, %c111] : memref<8x768xf32, #tpu.memory_space<vmem>>, vector<8x512xf32>
    %c0_15 = arith.constant 0 : index
    %c112 = arith.constant 112 : index
    %11 = vector.load %arg12[%c0_15, %c112] : memref<8x768xf32, #tpu.memory_space<vmem>>, vector<8x512xf32>
    %c0_16 = arith.constant 0 : index
    %c113 = arith.constant 113 : index
    %12 = vector.load %arg12[%c0_16, %c113] : memref<8x768xf32, #tpu.memory_space<vmem>>, vector<8x512xf32>
    %c0_17 = arith.constant 0 : index
    %c127 = arith.constant 127 : index
    %13 = vector.load %arg12[%c0_17, %c127] : memref<8x768xf32, #tpu.memory_space<vmem>>, vector<8x512xf32>
    %c0_18 = arith.constant 0 : index
    %c128_19 = arith.constant 128 : index
    %14 = vector.load %arg12[%c0_18, %c128_19] : memref<8x768xf32, #tpu.memory_space<vmem>>, vector<8x512xf32>
    %c0_20 = arith.constant 0 : index
    %c129 = arith.constant 129 : index
    %15 = vector.load %arg12[%c0_20, %c129] : memref<8x768xf32, #tpu.memory_space<vmem>>, vector<8x512xf32>
    %c0_21 = arith.constant 0 : index
    %c143 = arith.constant 143 : index
    %16 = vector.load %arg12[%c0_21, %c143] : memref<8x768xf32, #tpu.memory_space<vmem>>, vector<8x512xf32>
    %c0_22 = arith.constant 0 : index
    %c144 = arith.constant 144 : index
    %17 = vector.load %arg12[%c0_22, %c144] : memref<8x768xf32, #tpu.memory_space<vmem>>, vector<8x512xf32>
    %c0_23 = arith.constant 0 : index
    %c145 = arith.constant 145 : index
    %18 = vector.load %arg12[%c0_23, %c145] : memref<8x768xf32, #tpu.memory_space<vmem>>, vector<8x512xf32>
    %19 = tpu.concatenate %10, %11, %12, %13, %14, %15, %16, %17, %18 in 0 : vector<8x512xf32>, vector<8x512xf32>, vector<8x512xf32>, vector<8x512xf32>, vector<8x512xf32>, vector<8x512xf32>, vector<8x512xf32>, vector<8x512xf32>, vector<8x512xf32> -> vector<72x512xf32>
    %20 = arith.mulf %19, %6 : vector<72x512xf32>
    %c0_24 = arith.constant 0 : index
    %c0_25 = arith.constant 0 : index
    %21 = vector.load %arg2[%c0_24, %c0_25] : memref<8x72xf32, #tpu.memory_space<vmem>>, vector<8x72xf32>
    %cst_26 = arith.constant dense<0.000000e+00> : vector<8x512xf32>
    %22 = tpu.matmul %21, %20, %cst_26 {dimension_numbers = #tpu.dot_dimension_numbers<[1], [0], [0], [1], [0, 0, 1, 1], [], []>, precision = #tpu.contract_precision<fp32>} : vector<8x72xf32>, vector<72x512xf32>, vector<8x512xf32> -> vector<8x512xf32>
    %23 = vector.broadcast %7 : vector<8x1xf32> to vector<8x512xf32>
    %24 = arith.addf %22, %23 : vector<8x512xf32>
    %cst_27 = arith.constant dense<0.000000e+00> : vector<8xf32>
    %25 = vector.multi_reduction <add>, %24, %cst_27 [1] : vector<8x512xf32> to vector<8xf32>
    %26 = vector.shape_cast %25 : vector<8xf32> to vector<8x1xf32>
    %cst_28 = arith.constant 0.001953125 : f32
    %27 = vector.broadcast %cst_28 : f32 to vector<8x1xf32>
    %28 = arith.mulf %26, %27 : vector<8x1xf32>
    %29 = vector.broadcast %28 : vector<8x1xf32> to vector<8x512xf32>
    %30 = arith.subf %24, %29 : vector<8x512xf32>
    %31 = arith.mulf %30, %30 : vector<8x512xf32>
    %cst_29 = arith.constant dense<0.000000e+00> : vector<8xf32>
    %32 = vector.multi_reduction <add>, %31, %cst_29 [1] : vector<8x512xf32> to vector<8xf32>
    %33 = vector.shape_cast %32 : vector<8xf32> to vector<8x1xf32>
    %cst_30 = arith.constant 0.001953125 : f32
    %34 = vector.broadcast %cst_30 : f32 to vector<8x1xf32>
    %35 = arith.mulf %33, %34 : vector<8x1xf32>
    %cst_31 = arith.constant 9.99999974E-6 : f32
    %36 = vector.broadcast %cst_31 : f32 to vector<8x1xf32>
    %37 = arith.addf %35, %36 : vector<8x1xf32>
    %38 = math.rsqrt %37 : vector<8x1xf32>
    %39 = vector.broadcast %38 : vector<8x1xf32> to vector<8x512xf32>
    %40 = arith.mulf %30, %39 : vector<8x512xf32>
    %41 = vector.broadcast %8 : vector<8x1xf32> to vector<8x512xf32>
    %42 = arith.mulf %40, %41 : vector<8x512xf32>
    %43 = vector.broadcast %9 : vector<8x1xf32> to vector<8x512xf32>
    %44 = arith.addf %42, %43 : vector<8x512xf32>
    %cst_32 = arith.constant 0.000000e+00 : f32
    %45 = vector.broadcast %cst_32 : f32 to vector<8x512xf32>
    %46 = arith.maximumf %44, %45 : vector<8x512xf32>
    %cst_33 = arith.constant 0.000000e+00 : f32
    %47 = vector.broadcast %cst_33 : f32 to vector<8x128xf32>
    %c0_34 = arith.constant 0 : index
    %c0_35 = arith.constant 0 : index
    %48 = vector.load %arg13[%c0_34, %c0_35] : memref<8x768xf32, #tpu.memory_space<vmem>>, vector<8x128xf32>
    tpu.vector_store %arg13[%c0_34, %c0_35], %47 {strides = array<i32>} : memref<8x768xf32, #tpu.memory_space<vmem>>, vector<8x128xf32>,
    %cst_36 = arith.constant 0.000000e+00 : f32
    %49 = vector.broadcast %cst_36 : f32 to vector<8x128xf32>
    %c0_37 = arith.constant 0 : index
    %c640 = arith.constant 640 : index
    %50 = vector.load %arg13[%c0_37, %c640] : memref<8x768xf32, #tpu.memory_space<vmem>>, vector<8x128xf32>
    tpu.vector_store %arg13[%c0_37, %c640], %49 {strides = array<i32>} : memref<8x768xf32, #tpu.memory_space<vmem>>, vector<8x128xf32>,
    %c0_38 = arith.constant 0 : index
    %c128_39 = arith.constant 128 : index
    %51 = vector.load %arg13[%c0_38, %c128_39] : memref<8x768xf32, #tpu.memory_space<vmem>>, vector<8x512xf32>
    tpu.vector_store %arg13[%c0_38, %c128_39], %46 {strides = array<i32>} : memref<8x768xf32, #tpu.memory_space<vmem>>, vector<8x512xf32>,
    %c0_40 = arith.constant 0 : index
    %c0_41 = arith.constant 0 : index
    %52 = vector.load %arg7[%c0_40, %c0_41] : memref<8x1xf32, #tpu.memory_space<vmem>>, vector<8x1xf32>
    %c0_42 = arith.constant 0 : index
    %c0_43 = arith.constant 0 : index
    %53 = vector.load %arg8[%c0_42, %c0_43] : memref<8x1xf32, #tpu.memory_space<vmem>>, vector<8x1xf32>
    %c0_44 = arith.constant 0 : index
    %c0_45 = arith.constant 0 : index
    %54 = vector.load %arg9[%c0_44, %c0_45] : memref<8x1xf32, #tpu.memory_space<vmem>>, vector<8x1xf32>
    %c0_46 = arith.constant 0 : index
    %c111_47 = arith.constant 111 : index
    %55 = vector.load %arg13[%c0_46, %c111_47] : memref<8x768xf32, #tpu.memory_space<vmem>>, vector<8x512xf32>
    %c0_48 = arith.constant 0 : index
    %c112_49 = arith.constant 112 : index
    %56 = vector.load %arg13[%c0_48, %c112_49] : memref<8x768xf32, #tpu.memory_space<vmem>>, vector<8x512xf32>
    %c0_50 = arith.constant 0 : index
    %c113_51 = arith.constant 113 : index
    %57 = vector.load %arg13[%c0_50, %c113_51] : memref<8x768xf32, #tpu.memory_space<vmem>>, vector<8x512xf32>
    %c0_52 = arith.constant 0 : index
    %c127_53 = arith.constant 127 : index
    %58 = vector.load %arg13[%c0_52, %c127_53] : memref<8x768xf32, #tpu.memory_space<vmem>>, vector<8x512xf32>
    %c0_54 = arith.constant 0 : index
    %c128_55 = arith.constant 128 : index
    %59 = vector.load %arg13[%c0_54, %c128_55] : memref<8x768xf32, #tpu.memory_space<vmem>>, vector<8x512xf32>
    %c0_56 = arith.constant 0 : index
    %c129_57 = arith.constant 129 : index
    %60 = vector.load %arg13[%c0_56, %c129_57] : memref<8x768xf32, #tpu.memory_space<vmem>>, vector<8x512xf32>
    %c0_58 = arith.constant 0 : index
    %c143_59 = arith.constant 143 : index
    %61 = vector.load %arg13[%c0_58, %c143_59] : memref<8x768xf32, #tpu.memory_space<vmem>>, vector<8x512xf32>
    %c0_60 = arith.constant 0 : index
    %c144_61 = arith.constant 144 : index
    %62 = vector.load %arg13[%c0_60, %c144_61] : memref<8x768xf32, #tpu.memory_space<vmem>>, vector<8x512xf32>
    %c0_62 = arith.constant 0 : index
    %c145_63 = arith.constant 145 : index
    %63 = vector.load %arg13[%c0_62, %c145_63] : memref<8x768xf32, #tpu.memory_space<vmem>>, vector<8x512xf32>
    %64 = tpu.concatenate %55, %56, %57, %58, %59, %60, %61, %62, %63 in 0 : vector<8x512xf32>, vector<8x512xf32>, vector<8x512xf32>, vector<8x512xf32>, vector<8x512xf32>, vector<8x512xf32>, vector<8x512xf32>, vector<8x512xf32>, vector<8x512xf32> -> vector<72x512xf32>
    %65 = arith.mulf %64, %6 : vector<72x512xf32>
    %c0_64 = arith.constant 0 : index
    %c0_65 = arith.constant 0 : index
    %66 = vector.load %arg6[%c0_64, %c0_65] : memref<8x72xf32, #tpu.memory_space<vmem>>, vector<8x72xf32>
    %cst_66 = arith.constant dense<0.000000e+00> : vector<8x512xf32>
    %67 = tpu.matmul %66, %65, %cst_66 {dimension_numbers = #tpu.dot_dimension_numbers<[1], [0], [0], [1], [0, 0, 1, 1], [], []>, precision = #tpu.contract_precision<fp32>} : vector<8x72xf32>, vector<72x512xf32>, vector<8x512xf32> -> vector<8x512xf32>
    %68 = vector.broadcast %52 : vector<8x1xf32> to vector<8x512xf32>
    %69 = arith.addf %67, %68 : vector<8x512xf32>
    %cst_67 = arith.constant dense<0.000000e+00> : vector<8xf32>
    %70 = vector.multi_reduction <add>, %69, %cst_67 [1] : vector<8x512xf32> to vector<8xf32>
    %71 = vector.shape_cast %70 : vector<8xf32> to vector<8x1xf32>
    %cst_68 = arith.constant 0.001953125 : f32
    %72 = vector.broadcast %cst_68 : f32 to vector<8x1xf32>
    %73 = arith.mulf %71, %72 : vector<8x1xf32>
    %74 = vector.broadcast %73 : vector<8x1xf32> to vector<8x512xf32>
    %75 = arith.subf %69, %74 : vector<8x512xf32>
    %76 = arith.mulf %75, %75 : vector<8x512xf32>
    %cst_69 = arith.constant dense<0.000000e+00> : vector<8xf32>
    %77 = vector.multi_reduction <add>, %76, %cst_69 [1] : vector<8x512xf32> to vector<8xf32>
    %78 = vector.shape_cast %77 : vector<8xf32> to vector<8x1xf32>
    %cst_70 = arith.constant 0.001953125 : f32
    %79 = vector.broadcast %cst_70 : f32 to vector<8x1xf32>
    %80 = arith.mulf %78, %79 : vector<8x1xf32>
    %cst_71 = arith.constant 9.99999974E-6 : f32
    %81 = vector.broadcast %cst_71 : f32 to vector<8x1xf32>
    %82 = arith.addf %80, %81 : vector<8x1xf32>
    %83 = math.rsqrt %82 : vector<8x1xf32>
    %84 = vector.broadcast %83 : vector<8x1xf32> to vector<8x512xf32>
    %85 = arith.mulf %75, %84 : vector<8x512xf32>
    %86 = vector.broadcast %53 : vector<8x1xf32> to vector<8x512xf32>
    %87 = arith.mulf %85, %86 : vector<8x512xf32>
    %88 = vector.broadcast %54 : vector<8x1xf32> to vector<8x512xf32>
    %89 = arith.addf %87, %88 : vector<8x512xf32>
    %c0_72 = arith.constant 0 : index
    %c128_73 = arith.constant 128 : index
    %90 = vector.load %arg12[%c0_72, %c128_73] : memref<8x768xf32, #tpu.memory_space<vmem>>, vector<8x512xf32>
    %91 = arith.addf %89, %90 : vector<8x512xf32>
    %cst_74 = arith.constant 0.000000e+00 : f32
    %92 = vector.broadcast %cst_74 : f32 to vector<8x512xf32>
    %93 = arith.maximumf %91, %92 : vector<8x512xf32>
    %94 = vector.extract_strided_slice %93 {offsets = [0, 0], sizes = [4, 256], strides = [1, 1]} : vector<8x512xf32> to vector<4x256xf32>
    %c0_75 = arith.constant 0 : index
    %c0_76 = arith.constant 0 : index
    %95 = vector.load %arg11[%c0_75, %c0_76] : memref<8x256xf32, #tpu.memory_space<vmem>>, vector<4x256xf32>
    tpu.vector_store %arg11[%c0_75, %c0_76], %94 {strides = array<i32>} : memref<8x256xf32, #tpu.memory_space<vmem>>, vector<4x256xf32>,
    %96 = vector.extract_strided_slice %93 {offsets = [0, 256], sizes = [4, 256], strides = [1, 1]} : vector<8x512xf32> to vector<4x256xf32>
    %c4_77 = arith.constant 4 : index
    %c0_78 = arith.constant 0 : index
    %97 = vector.load %arg11[%c4_77, %c0_78] : memref<8x256xf32, #tpu.memory_space<vmem>>, vector<4x256xf32>
    tpu.vector_store %arg11[%c4_77, %c0_78], %96 {strides = array<i32>} : memref<8x256xf32, #tpu.memory_space<vmem>>, vector<4x256xf32>,
    return
  }
  func.func @transform_0(%arg0: i32) -> (i32, i32) {
    %c0_i32 = arith.constant 0 : i32
    %c0_i32_0 = arith.constant 0 : i32
    %c0_i32_1 = arith.constant 0 : i32
    return %c0_i32, %c0_i32_0 : i32, i32
  }
  func.func @transform_1(%arg0: i32) -> (i32, i32) {
    %c0_i32 = arith.constant 0 : i32
    %c0_i32_0 = arith.constant 0 : i32
    %c0_i32_1 = arith.constant 0 : i32
    return %c0_i32, %c0_i32_0 : i32, i32
  }
  func.func @transform_2(%arg0: i32) -> (i32, i32) {
    %c0_i32 = arith.constant 0 : i32
    %c0_i32_0 = arith.constant 0 : i32
    %c0_i32_1 = arith.constant 0 : i32
    return %c0_i32, %c0_i32_0 : i32, i32
  }
  func.func @transform_3(%arg0: i32) -> (i32, i32) {
    %c0_i32 = arith.constant 0 : i32
    %c0_i32_0 = arith.constant 0 : i32
    %c0_i32_1 = arith.constant 0 : i32
    return %c0_i32, %c0_i32_0 : i32, i32
  }
  func.func @transform_4(%arg0: i32) -> (i32, i32) {
    %c0_i32 = arith.constant 0 : i32
    %c0_i32_0 = arith.constant 0 : i32
    %c0_i32_1 = arith.constant 0 : i32
    return %c0_i32, %c0_i32_0 : i32, i32
  }
  func.func @transform_5(%arg0: i32) -> (i32, i32) {
    %c0_i32 = arith.constant 0 : i32
    %c0_i32_0 = arith.constant 0 : i32
    %c0_i32_1 = arith.constant 0 : i32
    return %c0_i32, %c0_i32_0 : i32, i32
  }
  func.func @transform_6(%arg0: i32) -> (i32, i32) {
    %c0_i32 = arith.constant 0 : i32
    %c0_i32_0 = arith.constant 0 : i32
    %c0_i32_1 = arith.constant 0 : i32
    return %c0_i32, %c0_i32_0 : i32, i32
  }
  func.func @transform_7(%arg0: i32) -> (i32, i32) {
    %c0_i32 = arith.constant 0 : i32
    %c0_i32_0 = arith.constant 0 : i32
    %c0_i32_1 = arith.constant 0 : i32
    return %c0_i32, %c0_i32_0 : i32, i32
  }
  func.func @transform_8(%arg0: i32) -> (i32, i32) {
    %c0_i32 = arith.constant 0 : i32
    %c0_i32_0 = arith.constant 0 : i32
    %c0_i32_1 = arith.constant 0 : i32
    return %c0_i32, %c0_i32_0 : i32, i32
  }
  func.func @transform_9(%arg0: i32) -> (i32, i32) {
    %c0_i32 = arith.constant 0 : i32
    %c0_i32_0 = arith.constant 0 : i32
    %c0_i32_1 = arith.constant 0 : i32
    return %c0_i32, %c0_i32_0 : i32, i32
  }
  func.func @transform_10(%arg0: i32) -> (i32, i32) {
    %c0_i32 = arith.constant 0 : i32
    %c0_i32_0 = arith.constant 0 : i32
    %c0_i32_1 = arith.constant 0 : i32
    return %c0_i32, %c0_i32_0 : i32, i32
  }
}

</mosaic_0001>

<llo_original>
// kernel: tpu_custom_call.1
$region0: #{tpu_custom_call.1}
  #allocation0 [shape = 'u32[]', space=smem, size = 0x4, offset = 0x4, fixed_abs, tag = 'smem constant byte address 0x4 - core index']
  #allocation1 [shape = 'u32[144,128]{1,0:T(1,128)}', space=vmem, size = 0x12000, scoped, tag = 'internal scratch']
  #allocation2 [shape = 'f32[8,768]{1,0:T(8,128)}', space=vmem, size = 0x6000, scoped, tag = 'scratch operand']
  #allocation3 [shape = 'f32[8,768]{1,0:T(8,128)}', space=vmem, size = 0x6000, scoped, tag = 'scratch operand']
  %s0 = inlined_call_operand.vmem [shape: f32[8,256], index: 0, kind: input, shape index: {}]
  %s1 = inlined_call_operand.vmem [shape: f32[8,72], index: 1, kind: input, shape index: {}]
  %s2 = inlined_call_operand.vmem [shape: f32[8,1], index: 2, kind: input, shape index: {}]
  %s3 = inlined_call_operand.vmem [shape: f32[8,1], index: 3, kind: input, shape index: {}]
  %s4 = inlined_call_operand.vmem [shape: f32[8,1], index: 4, kind: input, shape index: {}]
  %s5 = inlined_call_operand.vmem [shape: f32[8,72], index: 5, kind: input, shape index: {}]
  %s6 = inlined_call_operand.vmem [shape: f32[8,1], index: 6, kind: input, shape index: {}]
  %s7 = inlined_call_operand.vmem [shape: f32[8,1], index: 7, kind: input, shape index: {}]
  %s8 = inlined_call_operand.vmem [shape: f32[8,1], index: 8, kind: input, shape index: {}]
  %s9 = inlined_call_operand.hbm [shape: f32[72,512], index: 9, kind: input, shape index: {}]
  %s10 = inlined_call_operand.hbm [shape: f32[8,256], index: 10, kind: output, shape index: {}]
  %s11 = sld [smem:[#allocation0]]
  $region54: #{tpu_custom_call.1} parent=0
    _
  %s13 = ssub.s32 1, %s11
  %s14 = scalar_select 0, %s13, %s11
  $region1: #{tpu_custom_call.1} parent=0
    #allocation4 [shape = 'u8[147456]{0}', space=vmem, size = 0x24000, scoped, tag = 'input window, operand 9, single buffered']
    #allocation5 [shape = 's32[1]{0}', space=sflag, size = 0x4, scoped, tag = 'scoped memory for tpu_custom_call.1']
    #allocation6 [shape = 's32[1]{0}', space=sflag, size = 0x4, scoped, tag = 'scoped memory for tpu_custom_call.1']
    #allocation7 [shape = 'u8[8192]{0}', space=vmem, size = 0x2000, scoped, tag = 'output window, operand 0, single buffered']
    %15 = vsyncpa [#allocation5], 0
    %16 = vsyncpa [#allocation6], 0
    // Predicated region
    $region2: #{tpu_custom_call.1} parent=1 // pred_check
      _
    $region3: #{tpu_custom_call.1} parent=1 // pred_check_branch
      %18 = sbr.rel (0) target = $region5
    $region4: #{tpu_custom_call.1} parent=1 // pred_region
      _
    $region5: #{tpu_custom_call.1} parent=1 // pred_fallthru
      _
    // Predicated region
    $region6: #{tpu_custom_call.1} parent=1 // pred_check
      _
    $region7: #{tpu_custom_call.1} parent=1 // pred_check_branch
      %20 = sbr.rel (0) target = $region9
    $region8: #{tpu_custom_call.1} parent=1 // pred_region
      _
    $region9: #{tpu_custom_call.1} parent=1 // pred_fallthru
      _
    // Predicated region
    $region10: #{tpu_custom_call.1} parent=1 // pred_check
      _
    $region11: #{tpu_custom_call.1} parent=1 // pred_check_branch
      %22 = sbr.rel (0) target = $region13
    $region12: #{tpu_custom_call.1} parent=1 // pred_region
      _
    $region13: #{tpu_custom_call.1} parent=1 // pred_fallthru
      _
    // Predicated region
    $region14: #{tpu_custom_call.1} parent=1 // pred_check
      _
    $region15: #{tpu_custom_call.1} parent=1 // pred_check_branch
      %24 = sbr.rel (0) target = $region17
    $region16: #{tpu_custom_call.1} parent=1 // pred_region
      _
    $region17: #{tpu_custom_call.1} parent=1 // pred_fallthru
      _
    // Predicated region
    $region18: #{tpu_custom_call.1} parent=1 // pred_check
      _
    $region19: #{tpu_custom_call.1} parent=1 // pred_check_branch
      %26 = sbr.rel (0) target = $region21
    $region20: #{tpu_custom_call.1} parent=1 // pred_region
      _
    $region21: #{tpu_custom_call.1} parent=1 // pred_fallthru
      _
    // Predicated region
    $region22: #{tpu_custom_call.1} parent=1 // pred_check
      _
    $region23: #{tpu_custom_call.1} parent=1 // pred_check_branch
      %28 = sbr.rel (0) target = $region25
    $region24: #{tpu_custom_call.1} parent=1 // pred_region
      _
    $region25: #{tpu_custom_call.1} parent=1 // pred_fallthru
      _
    // Predicated region
    $region26: #{tpu_custom_call.1} parent=1 // pred_check
      _
    $region27: #{tpu_custom_call.1} parent=1 // pred_check_branch
      %30 = sbr.rel (0) target = $region29
    $region28: #{tpu_custom_call.1} parent=1 // pred_region
      _
    $region29: #{tpu_custom_call.1} parent=1 // pred_fallthru
      _
    // Predicated region
    $region30: #{tpu_custom_call.1} parent=1 // pred_check
      _
    $region31: #{tpu_custom_call.1} parent=1 // pred_check_branch
      %32 = sbr.rel (0) target = $region33
    $region32: #{tpu_custom_call.1} parent=1 // pred_region
      _
    $region33: #{tpu_custom_call.1} parent=1 // pred_fallthru
      _
    // Predicated region
    $region34: #{tpu_custom_call.1} parent=1 // pred_check
      _
    $region35: #{tpu_custom_call.1} parent=1 // pred_check_branch
      %34 = sbr.rel (0) target = $region37
    $region36: #{tpu_custom_call.1} parent=1 // pred_region
      _
    $region37: #{tpu_custom_call.1} parent=1 // pred_fallthru
      _
    // Predicated region
    $region38: #{tpu_custom_call.1} parent=1 // pred_check
      _
    $region39: #{tpu_custom_call.1} parent=1 // pred_check_branch
      %36 = sbr.rel (0) target = $region41
    $region40: #{tpu_custom_call.1} parent=1 // pred_region
      %s38 = ssub.s32 4608, 4608
      %39 = vsyncadd [#allocation5], %s38
      %s40 = sshll.u32 [#allocation4], 4
      %s41 = int_to_ptr.vmem [resolvable:$true] %s40
      %46 = dma.hbm_to_vmem [thread:$0]  %s9, 4608, %s41, [#allocation5], 512, 512, 32
    $region41: #{tpu_custom_call.1} parent=1 // pred_fallthru
      _
    // Predicated region
    $region42: #{tpu_custom_call.1} parent=1 // pred_check
      _
    $region43: #{tpu_custom_call.1} parent=1 // pred_check_branch
      %48 = sbr.rel (0) target = $region45
    $region44: #{tpu_custom_call.1} parent=1 // pred_region
      %49 = dma.done [#allocation5], 4608
    $region45: #{tpu_custom_call.1} parent=1 // pred_fallthru
      _
    %50 = vst [vmem:[#allocation2] sm:$0xff] 0.0
    %51 = vst [vmem:[#allocation2 + $0x8] sm:$0xff] 0.0
    %52 = vst [vmem:[#allocation2 + $0x10] sm:$0xff] 0.0
    %53 = vst [vmem:[#allocation2 + $0x18] sm:$0xff] 0.0
    %54 = vst [vmem:[#allocation2 + $0x20] sm:$0xff] 0.0
    %55 = vst [vmem:[#allocation2 + $0x28] sm:$0xff] 0.0
    %v56 = vld [vmem:[%s0] sm:$0xf]
    %v57 = vld [vmem:[%s0 + $0x8] sm:$0xf]
    %58 = vst [vmem:[#allocation2 + $0x8] sm:$0xf] %v56
    %59 = vst [vmem:[#allocation2 + $0x10] sm:$0xf] %v57
    %v60 = vld [vmem:[%s0] sm:$0xf0]
    %v61 = vld [vmem:[%s0 + $0x8] sm:$0xf0]
    %v64 = vrot.slane %v60, 4
    %v65 = vrot.slane %v61, 4
    %68 = vst [vmem:[#allocation2 + $0x18] sm:$0xf] %v64
    %69 = vst [vmem:[#allocation2 + $0x20] sm:$0xf] %v65
    %v70 = vld [vmem:[#allocation4] sm:$0xff]
    %v71 = vld [vmem:[#allocation4 + $0x8] sm:$0xff]
    %v72 = vld [vmem:[#allocation4 + $0x10] sm:$0xff]
    %v73 = vld [vmem:[#allocation4 + $0x18] sm:$0xff]
    %v74 = vld [vmem:[#allocation4 + $0x20] sm:$0xff]
    %v75 = vld [vmem:[#allocation4 + $0x28] sm:$0xff]
    %v76 = vld [vmem:[#allocation4 + $0x30] sm:$0xff]
    %v77 = vld [vmem:[#allocation4 + $0x38] sm:$0xff]
    %v78 = vld [vmem:[#allocation4 + $0x40] sm:$0xff]
    %v79 = vld [vmem:[#allocation4 + $0x48] sm:$0xff]
    %v80 = vld [vmem:[#allocation4 + $0x50] sm:$0xff]
    %v81 = vld [vmem:[#allocation4 + $0x58] sm:$0xff]
    %v82 = vld [vmem:[#allocation4 + $0x60] sm:$0xff]
    %v83 = vld [vmem:[#allocation4 + $0x68] sm:$0xff]
    %v84 = vld [vmem:[#allocation4 + $0x70] sm:$0xff]
    %v85 = vld [vmem:[#allocation4 + $0x78] sm:$0xff]
    %v86 = vld [vmem:[#allocation4 + $0x80] sm:$0xff]
    %v87 = vld [vmem:[#allocation4 + $0x88] sm:$0xff]
    %v88 = vld [vmem:[#allocation4 + $0x90] sm:$0xff]
    %v89 = vld [vmem:[#allocation4 + $0x98] sm:$0xff]
    %v90 = vld [vmem:[#allocation4 + $0xa0] sm:$0xff]
    %v91 = vld [vmem:[#allocation4 + $0xa8] sm:$0xff]
    %v92 = vld [vmem:[#allocation4 + $0xb0] sm:$0xff]
    %v93 = vld [vmem:[#allocation4 + $0xb8] sm:$0xff]
    %v94 = vld [vmem:[#allocation4 + $0xc0] sm:$0xff]
    %v95 = vld [vmem:[#allocation4 + $0xc8] sm:$0xff]
    %v96 = vld [vmem:[#allocation4 + $0xd0] sm:$0xff]
    %v97 = vld [vmem:[#allocation4 + $0xd8] sm:$0xff]
    %v98 = vld [vmem:[#allocation4 + $0xe0] sm:$0xff]
    %v99 = vld [vmem:[#allocation4 + $0xe8] sm:$0xff]
    %v100 = vld [vmem:[#allocation4 + $0xf0] sm:$0xff]
    %v101 = vld [vmem:[#allocation4 + $0xf8] sm:$0xff]
    %v102 = vld [vmem:[#allocation4 + $0x100] sm:$0xff]
    %v103 = vld [vmem:[#allocation4 + $0x108] sm:$0xff]
    %v104 = vld [vmem:[#allocation4 + $0x110] sm:$0xff]
    %v105 = vld [vmem:[#allocation4 + $0x118] sm:$0xff]
    %v106 = vld [vmem:[%s2] sm:$0xff]
    %v107 = vld [vmem:[%s3] sm:$0xff]
    %v108 = vld [vmem:[%s4] sm:$0xff]
    %v109 = vld [vmem:[#allocation2] sm:$0xff]
    %v110 = vld [vmem:[#allocation2 + $0x8] sm:$0xff]
    %v111 = vld [vmem:[#allocation2 + $0x10] sm:$0xff]
    %v112 = vld [vmem:[#allocation2 + $0x18] sm:$0xff]
    %v113 = vld [vmem:[#allocation2 + $0x20] sm:$0xff]
    %v114 = vld [vmem:[#allocation2 + $0x8] sm:$0xff]
    %v115 = vld [vmem:[#allocation2 + $0x10] sm:$0xff]
    %v116 = vld [vmem:[#allocation2 + $0x18] sm:$0xff]
    %v117 = vld [vmem:[#allocation2 + $0x20] sm:$0xff]
    %v118 = vld [vmem:[#allocation2 + $0x28] sm:$0xff]
    %124 = vrot.lane.b32.xlu0 %v109, 127
    %v125 = vpop.permute.xlu0 %124
    %126 = vrot.lane.b32.xlu0 %v110, 127
    %v127 = vpop.permute.xlu0 %126
    %128 = vrot.lane.b32.xlu0 %v111, 127
    %v129 = vpop.permute.xlu0 %128
    %130 = vrot.lane.b32.xlu0 %v112, 127
    %v131 = vpop.permute.xlu0 %130
    %132 = vrot.lane.b32.xlu0 %v113, 127
    %v133 = vpop.permute.xlu0 %132
    %vm134 = vcmask 1039360
    %v135 = vsel %vm134, %v125, %v127
    %v136 = vsel %vm134, %v127, %v129
    %v137 = vsel %vm134, %v129, %v131
    %v138 = vsel %vm134, %v131, %v133
    %144 = vrot.lane.b32.xlu0 %v109, 126
    %v145 = vpop.permute.xlu0 %144
    %146 = vrot.lane.b32.xlu0 %v110, 126
    %v147 = vpop.permute.xlu0 %146
    %148 = vrot.lane.b32.xlu0 %v111, 126
    %v149 = vpop.permute.xlu0 %148
    %150 = vrot.lane.b32.xlu0 %v112, 126
    %v151 = vpop.permute.xlu0 %150
    %152 = vrot.lane.b32.xlu0 %v113, 126
    %v153 = vpop.permute.xlu0 %152
    %vm154 = vcmask 1031168
    %v155 = vsel %vm154, %v145, %v147
    %v156 = vsel %vm154, %v147, %v149
    %v157 = vsel %vm154, %v149, %v151
    %v158 = vsel %vm154, %v151, %v153
    %164 = vrot.lane.b32.xlu0 %v109, 112
    %v165 = vpop.permute.xlu0 %164
    %166 = vrot.lane.b32.xlu0 %v110, 112
    %v167 = vpop.permute.xlu0 %166
    %168 = vrot.lane.b32.xlu0 %v111, 112
    %v169 = vpop.permute.xlu0 %168
    %170 = vrot.lane.b32.xlu0 %v112, 112
    %v171 = vpop.permute.xlu0 %170
    %172 = vrot.lane.b32.xlu0 %v113, 112
    %v173 = vpop.permute.xlu0 %172
    %vm174 = vcmask 916480
    %v175 = vsel %vm174, %v165, %v167
    %v176 = vsel %vm174, %v167, %v169
    %v177 = vsel %vm174, %v169, %v171
    %v178 = vsel %vm174, %v171, %v173
    %184 = vrot.lane.b32.xlu0 %v110, 111
    %v185 = vpop.permute.xlu0 %184
    %186 = vrot.lane.b32.xlu0 %v111, 111
    %v187 = vpop.permute.xlu0 %186
    %188 = vrot.lane.b32.xlu0 %v112, 111
    %v189 = vpop.permute.xlu0 %188
    %190 = vrot.lane.b32.xlu0 %v113, 111
    %v191 = vpop.permute.xlu0 %190
    %vm192 = vcmask 908288
    %v193 = vsel %vm192, %v185, %v187
    %v194 = vsel %vm192, %v187, %v189
    %v195 = vsel %vm192, %v189, %v191
    %206 = vrot.lane.b32.xlu0 %v114, 110
    %v207 = vpop.permute.xlu0 %206
    %208 = vrot.lane.b32.xlu0 %v115, 110
    %v209 = vpop.permute.xlu0 %208
    %210 = vrot.lane.b32.xlu0 %v116, 110
    %v211 = vpop.permute.xlu0 %210
    %212 = vrot.lane.b32.xlu0 %v117, 110
    %v213 = vpop.permute.xlu0 %212
    %214 = vrot.lane.b32.xlu0 %v118, 110
    %v215 = vpop.permute.xlu0 %214
    %vm216 = vcmask 900096
    %v217 = vsel %vm216, %v207, %v209
    %v218 = vsel %vm216, %v209, %v211
    %v219 = vsel %vm216, %v211, %v213
    %v220 = vsel %vm216, %v213, %v215
    %226 = vrot.lane.b32.xlu0 %v114, 96
    %v227 = vpop.permute.xlu0 %226
    %228 = vrot.lane.b32.xlu0 %v115, 96
    %v229 = vpop.permute.xlu0 %228
    %230 = vrot.lane.b32.xlu0 %v116, 96
    %v231 = vpop.permute.xlu0 %230
    %232 = vrot.lane.b32.xlu0 %v117, 96
    %v233 = vpop.permute.xlu0 %232
    %234 = vrot.lane.b32.xlu0 %v118, 96
    %v235 = vpop.permute.xlu0 %234
    %vm236 = vcmask 785408
    %v237 = vsel %vm236, %v227, %v229
    %v238 = vsel %vm236, %v229, %v231
    %v239 = vsel %vm236, %v231, %v233
    %v240 = vsel %vm236, %v233, %v235
    %246 = vrot.lane.b32.xlu0 %v114, 95
    %v247 = vpop.permute.xlu0 %246
    %248 = vrot.lane.b32.xlu0 %v115, 95
    %v249 = vpop.permute.xlu0 %248
    %250 = vrot.lane.b32.xlu0 %v116, 95
    %v251 = vpop.permute.xlu0 %250
    %252 = vrot.lane.b32.xlu0 %v117, 95
    %v253 = vpop.permute.xlu0 %252
    %254 = vrot.lane.b32.xlu0 %v118, 95
    %v255 = vpop.permute.xlu0 %254
    %vm256 = vcmask 777216
    %v257 = vsel %vm256, %v247, %v249
    %v258 = vsel %vm256, %v249, %v251
    %v259 = vsel %vm256, %v251, %v253
    %v260 = vsel %vm256, %v253, %v255
    %266 = vrot.lane.b32.xlu0 %v114, 94
    %v267 = vpop.permute.xlu0 %266
    %268 = vrot.lane.b32.xlu0 %v115, 94
    %v269 = vpop.permute.xlu0 %268
    %270 = vrot.lane.b32.xlu0 %v116, 94
    %v271 = vpop.permute.xlu0 %270
    %272 = vrot.lane.b32.xlu0 %v117, 94
    %v273 = vpop.permute.xlu0 %272
    %274 = vrot.lane.b32.xlu0 %v118, 94
    %v275 = vpop.permute.xlu0 %274
    %vm276 = vcmask 769024
    %v277 = vsel %vm276, %v267, %v269
    %v278 = vsel %vm276, %v269, %v271
    %v279 = vsel %vm276, %v271, %v273
    %v280 = vsel %vm276, %v273, %v275
    %322 = vrot.lane.b32.xlu0 %v70, 111
    %v323 = vpop.permute.xlu0 %322
    %324 = vrot.lane.b32.xlu0 %v71, 111
    %v325 = vpop.permute.xlu0 %324
    %326 = vrot.lane.b32.xlu0 %v72, 111
    %v327 = vpop.permute.xlu0 %326
    %328 = vrot.lane.b32.xlu0 %v73, 111
    %v329 = vpop.permute.xlu0 %328
    %330 = vrot.lane.b32.xlu0 %v74, 111
    %v331 = vpop.permute.xlu0 %330
    %332 = vrot.lane.b32.xlu0 %v75, 111
    %v333 = vpop.permute.xlu0 %332
    %334 = vrot.lane.b32.xlu0 %v76, 111
    %v335 = vpop.permute.xlu0 %334
    %336 = vrot.lane.b32.xlu0 %v77, 111
    %v337 = vpop.permute.xlu0 %336
    %338 = vrot.lane.b32.xlu0 %v78, 111
    %v339 = vpop.permute.xlu0 %338
    %340 = vrot.lane.b32.xlu0 %v79, 111
    %v341 = vpop.permute.xlu0 %340
    %342 = vrot.lane.b32.xlu0 %v80, 111
    %v343 = vpop.permute.xlu0 %342
    %344 = vrot.lane.b32.xlu0 %v81, 111
    %v345 = vpop.permute.xlu0 %344
    %346 = vrot.lane.b32.xlu0 %v82, 111
    %v347 = vpop.permute.xlu0 %346
    %348 = vrot.lane.b32.xlu0 %v83, 111
    %v349 = vpop.permute.xlu0 %348
    %350 = vrot.lane.b32.xlu0 %v84, 111
    %v351 = vpop.permute.xlu0 %350
    %352 = vrot.lane.b32.xlu0 %v85, 111
    %v353 = vpop.permute.xlu0 %352
    %354 = vrot.lane.b32.xlu0 %v86, 111
    %v355 = vpop.permute.xlu0 %354
    %356 = vrot.lane.b32.xlu0 %v87, 111
    %v357 = vpop.permute.xlu0 %356
    %358 = vrot.lane.b32.xlu0 %v88, 111
    %v359 = vpop.permute.xlu0 %358
    %360 = vrot.lane.b32.xlu0 %v89, 111
    %v361 = vpop.permute.xlu0 %360
    %362 = vrot.lane.b32.xlu0 %v90, 111
    %v363 = vpop.permute.xlu0 %362
    %364 = vrot.lane.b32.xlu0 %v91, 111
    %v365 = vpop.permute.xlu0 %364
    %366 = vrot.lane.b32.xlu0 %v92, 111
    %v367 = vpop.permute.xlu0 %366
    %368 = vrot.lane.b32.xlu0 %v93, 111
    %v369 = vpop.permute.xlu0 %368
    %370 = vrot.lane.b32.xlu0 %v94, 111
    %v371 = vpop.permute.xlu0 %370
    %372 = vrot.lane.b32.xlu0 %v95, 111
    %v373 = vpop.permute.xlu0 %372
    %374 = vrot.lane.b32.xlu0 %v96, 111
    %v375 = vpop.permute.xlu0 %374
    %376 = vrot.lane.b32.xlu0 %v97, 111
    %v377 = vpop.permute.xlu0 %376
    %378 = vrot.lane.b32.xlu0 %v98, 111
    %v379 = vpop.permute.xlu0 %378
    %380 = vrot.lane.b32.xlu0 %v99, 111
    %v381 = vpop.permute.xlu0 %380
    %382 = vrot.lane.b32.xlu0 %v100, 111
    %v383 = vpop.permute.xlu0 %382
    %384 = vrot.lane.b32.xlu0 %v101, 111
    %v385 = vpop.permute.xlu0 %384
    %386 = vrot.lane.b32.xlu0 %v102, 111
    %v387 = vpop.permute.xlu0 %386
    %388 = vrot.lane.b32.xlu0 %v103, 111
    %v389 = vpop.permute.xlu0 %388
    %390 = vrot.lane.b32.xlu0 %v104, 111
    %v391 = vpop.permute.xlu0 %390
    %392 = vrot.lane.b32.xlu0 %v105, 111
    %v393 = vpop.permute.xlu0 %392
    %v394 = vsel %vm192, %v323, %v325
    %v395 = vsel %vm192, %v325, %v327
    %v396 = vsel %vm192, %v327, %v329
    %v397 = vsel %vm192, %v331, %v333
    %v398 = vsel %vm192, %v333, %v335
    %v399 = vsel %vm192, %v335, %v337
    %v400 = vsel %vm192, %v339, %v341
    %v401 = vsel %vm192, %v341, %v343
    %v402 = vsel %vm192, %v343, %v345
    %v403 = vsel %vm192, %v347, %v349
    %v404 = vsel %vm192, %v349, %v351
    %v405 = vsel %vm192, %v351, %v353
    %v406 = vsel %vm192, %v355, %v357
    %v407 = vsel %vm192, %v357, %v359
    %v408 = vsel %vm192, %v359, %v361
    %v409 = vsel %vm192, %v363, %v365
    %v410 = vsel %vm192, %v365, %v367
    %v411 = vsel %vm192, %v367, %v369
    %v412 = vsel %vm192, %v371, %v373
    %v413 = vsel %vm192, %v373, %v375
    %v414 = vsel %vm192, %v375, %v377
    %v415 = vsel %vm192, %v379, %v381
    %v416 = vsel %vm192, %v381, %v383
    %v417 = vsel %vm192, %v383, %v385
    %v418 = vsel %vm192, %v387, %v389
    %v419 = vsel %vm192, %v389, %v391
    %v420 = vsel %vm192, %v391, %v393
    %v466 = vmul.f32 %v109, %v323
    %v467 = vmul.f32 %v110, %v394
    %v468 = vmul.f32 %v111, %v395
    %v469 = vmul.f32 %v112, %v396
    %v470 = vmul.f32 %v113, %v329
    %v471 = vmul.f32 %v135, %v331
    %v472 = vmul.f32 %v136, %v397
    %v473 = vmul.f32 %v137, %v398
    %v474 = vmul.f32 %v138, %v399
    %v475 = vmul.f32 %v133, %v337
    %v476 = vmul.f32 %v155, %v339
    %v477 = vmul.f32 %v156, %v400
    %v478 = vmul.f32 %v157, %v401
    %v479 = vmul.f32 %v158, %v402
    %v480 = vmul.f32 %v153, %v345
    %v481 = vmul.f32 %v175, %v347
    %v482 = vmul.f32 %v176, %v403
    %v483 = vmul.f32 %v177, %v404
    %v484 = vmul.f32 %v178, %v405
    %v485 = vmul.f32 %v173, %v353
    %v486 = vmul.f32 %v185, %v355
    %v487 = vmul.f32 %v193, %v406
    %v488 = vmul.f32 %v194, %v407
    %v489 = vmul.f32 %v195, %v408
    %v490 = vmul.f32 %v191, %v361
    %v491 = vmul.f32 %v207, %v363
    %v492 = vmul.f32 %v217, %v409
    %v493 = vmul.f32 %v218, %v410
    %v494 = vmul.f32 %v219, %v411
    %v495 = vmul.f32 %v220, %v369
    %v496 = vmul.f32 %v227, %v371
    %v497 = vmul.f32 %v237, %v412
    %v498 = vmul.f32 %v238, %v413
    %v499 = vmul.f32 %v239, %v414
    %v500 = vmul.f32 %v240, %v377
    %v501 = vmul.f32 %v247, %v379
    %v502 = vmul.f32 %v257, %v415
    %v503 = vmul.f32 %v258, %v416
    %v504 = vmul.f32 %v259, %v417
    %v505 = vmul.f32 %v260, %v385
    %v506 = vmul.f32 %v267, %v387
    %v507 = vmul.f32 %v277, %v418
    %v508 = vmul.f32 %v278, %v419
    %v509 = vmul.f32 %v279, %v420
    %v510 = vmul.f32 %v280, %v393
    %v511 = vld [vmem:[%s1] sm:$0xff]
    %513 = vset.pattern.permute.xlu0 0
    %514 = vperm.xlu0 %513, %v106
    %v515 = vpop.permute.xlu0 %514
    %562 = vrot.lane.b32.xlu0 %v466, 17
    %v563 = vpop.permute.xlu0 %562
    %564 = vrot.lane.b32.xlu0 %v467, 17
    %v565 = vpop.permute.xlu0 %564
    %566 = vrot.lane.b32.xlu0 %v468, 17
    %v567 = vpop.permute.xlu0 %566
    %568 = vrot.lane.b32.xlu0 %v469, 17
    %v569 = vpop.permute.xlu0 %568
    %570 = vrot.lane.b32.xlu0 %v470, 17
    %v571 = vpop.permute.xlu0 %570
    %572 = vrot.lane.b32.xlu0 %v471, 17
    %v573 = vpop.permute.xlu0 %572
    %574 = vrot.lane.b32.xlu0 %v472, 17
    %v575 = vpop.permute.xlu0 %574
    %576 = vrot.lane.b32.xlu0 %v473, 17
    %v577 = vpop.permute.xlu0 %576
    %578 = vrot.lane.b32.xlu0 %v474, 17
    %v579 = vpop.permute.xlu0 %578
    %580 = vrot.lane.b32.xlu0 %v475, 17
    %v581 = vpop.permute.xlu0 %580
    %582 = vrot.lane.b32.xlu0 %v476, 17
    %v583 = vpop.permute.xlu0 %582
    %584 = vrot.lane.b32.xlu0 %v477, 17
    %v585 = vpop.permute.xlu0 %584
    %586 = vrot.lane.b32.xlu0 %v478, 17
    %v587 = vpop.permute.xlu0 %586
    %588 = vrot.lane.b32.xlu0 %v479, 17
    %v589 = vpop.permute.xlu0 %588
    %590 = vrot.lane.b32.xlu0 %v480, 17
    %v591 = vpop.permute.xlu0 %590
    %592 = vrot.lane.b32.xlu0 %v481, 17
    %v593 = vpop.permute.xlu0 %592
    %594 = vrot.lane.b32.xlu0 %v482, 17
    %v595 = vpop.permute.xlu0 %594
    %596 = vrot.lane.b32.xlu0 %v483, 17
    %v597 = vpop.permute.xlu0 %596
    %598 = vrot.lane.b32.xlu0 %v484, 17
    %v599 = vpop.permute.xlu0 %598
    %600 = vrot.lane.b32.xlu0 %v485, 17
    %v601 = vpop.permute.xlu0 %600
    %602 = vrot.lane.b32.xlu0 %v486, 17
    %v603 = vpop.permute.xlu0 %602
    %604 = vrot.lane.b32.xlu0 %v487, 17
    %v605 = vpop.permute.xlu0 %604
    %606 = vrot.lane.b32.xlu0 %v488, 17
    %v607 = vpop.permute.xlu0 %606
    %608 = vrot.lane.b32.xlu0 %v489, 17
    %v609 = vpop.permute.xlu0 %608
    %610 = vrot.lane.b32.xlu0 %v490, 17
    %v611 = vpop.permute.xlu0 %610
    %612 = vrot.lane.b32.xlu0 %v491, 17
    %v613 = vpop.permute.xlu0 %612
    %614 = vrot.lane.b32.xlu0 %v492, 17
    %v615 = vpop.permute.xlu0 %614
    %616 = vrot.lane.b32.xlu0 %v493, 17
    %v617 = vpop.permute.xlu0 %616
    %618 = vrot.lane.b32.xlu0 %v494, 17
    %v619 = vpop.permute.xlu0 %618
    %620 = vrot.lane.b32.xlu0 %v495, 17
    %v621 = vpop.permute.xlu0 %620
    %622 = vrot.lane.b32.xlu0 %v496, 17
    %v623 = vpop.permute.xlu0 %622
    %624 = vrot.lane.b32.xlu0 %v497, 17
    %v625 = vpop.permute.xlu0 %624
    %626 = vrot.lane.b32.xlu0 %v498, 17
    %v627 = vpop.permute.xlu0 %626
    %628 = vrot.lane.b32.xlu0 %v499, 17
    %v629 = vpop.permute.xlu0 %628
    %630 = vrot.lane.b32.xlu0 %v500, 17
    %v631 = vpop.permute.xlu0 %630
    %632 = vrot.lane.b32.xlu0 %v501, 17
    %v633 = vpop.permute.xlu0 %632
    %634 = vrot.lane.b32.xlu0 %v502, 17
    %v635 = vpop.permute.xlu0 %634
    %636 = vrot.lane.b32.xlu0 %v503, 17
    %v637 = vpop.permute.xlu0 %636
    %638 = vrot.lane.b32.xlu0 %v504, 17
    %v639 = vpop.permute.xlu0 %638
    %640 = vrot.lane.b32.xlu0 %v505, 17
    %v641 = vpop.permute.xlu0 %640
    %642 = vrot.lane.b32.xlu0 %v506, 17
    %v643 = vpop.permute.xlu0 %642
    %644 = vrot.lane.b32.xlu0 %v507, 17
    %v645 = vpop.permute.xlu0 %644
    %646 = vrot.lane.b32.xlu0 %v508, 17
    %v647 = vpop.permute.xlu0 %646
    %648 = vrot.lane.b32.xlu0 %v509, 17
    %v649 = vpop.permute.xlu0 %648
    %650 = vrot.lane.b32.xlu0 %v510, 17
    %v651 = vpop.permute.xlu0 %650
    %vm652 = vcmask 138240
    %v653 = vsel %vm652, %v563, %v565
    %v654 = vsel %vm652, %v565, %v567
    %v655 = vsel %vm652, %v567, %v569
    %v656 = vsel %vm652, %v569, %v571
    %v657 = vsel %vm652, %v573, %v575
    %v658 = vsel %vm652, %v575, %v577
    %v659 = vsel %vm652, %v577, %v579
    %v660 = vsel %vm652, %v579, %v581
    %v661 = vsel %vm652, %v583, %v585
    %v662 = vsel %vm652, %v585, %v587
    %v663 = vsel %vm652, %v587, %v589
    %v664 = vsel %vm652, %v589, %v591
    %v665 = vsel %vm652, %v593, %v595
    %v666 = vsel %vm652, %v595, %v597
    %v667 = vsel %vm652, %v597, %v599
    %v668 = vsel %vm652, %v599, %v601
    %v669 = vsel %vm652, %v603, %v605
    %v670 = vsel %vm652, %v605, %v607
    %v671 = vsel %vm652, %v607, %v609
    %v672 = vsel %vm652, %v609, %v611
    %v673 = vsel %vm652, %v613, %v615
    %v674 = vsel %vm652, %v615, %v617
    %v675 = vsel %vm652, %v617, %v619
    %v676 = vsel %vm652, %v619, %v621
    %v677 = vsel %vm652, %v623, %v625
    %v678 = vsel %vm652, %v625, %v627
    %v679 = vsel %vm652, %v627, %v629
    %v680 = vsel %vm652, %v629, %v631
    %v681 = vsel %vm652, %v633, %v635
    %v682 = vsel %vm652, %v635, %v637
    %v683 = vsel %vm652, %v637, %v639
    %v684 = vsel %vm652, %v639, %v641
    %v685 = vsel %vm652, %v643, %v645
    %v686 = vsel %vm652, %v645, %v647
    %v687 = vsel %vm652, %v647, %v649
    %v688 = vsel %vm652, %v649, %v651
    %vm725 = vcmask 588800
    %v727 = vsel %vm725, %v511, 0
    %v729 = vand.u32 %v654, 4294901760
    %730 = vmatprep.subr.mxu0 %v729
    %v731 = vand.u32 %v653, 4294901760
    %732 = vmatpush1.msra.mxu0 %v731
    %v733 = vand.u32 %v658, 4294901760
    %734 = vmatprep.subr.mxu0 %v733
    %v735 = vand.u32 %v657, 4294901760
    %736 = vmatpush1.msra.mxu0 %v735
    %v737 = vand.u32 %v662, 4294901760
    %738 = vmatprep.subr.mxu0 %v737
    %v739 = vand.u32 %v661, 4294901760
    %740 = vmatpush1.msra.mxu0 %v739
    %v741 = vand.u32 %v666, 4294901760
    %742 = vmatprep.subr.mxu0 %v741
    %v743 = vand.u32 %v665, 4294901760
    %744 = vmatpush1.msra.mxu0 %v743
    %v745 = vand.u32 %v670, 4294901760
    %746 = vmatprep.subr.mxu0 %v745
    %v747 = vand.u32 %v669, 4294901760
    %748 = vmatpush1.msra.mxu0 %v747
    %v749 = vand.u32 %v674, 4294901760
    %750 = vmatprep.subr.mxu0 %v749
    %v751 = vand.u32 %v673, 4294901760
    %752 = vmatpush1.msra.mxu0 %v751
    %v753 = vand.u32 %v678, 4294901760
    %754 = vmatprep.subr.mxu0 %v753
    %v755 = vand.u32 %v677, 4294901760
    %756 = vmatpush1.msra.mxu0 %v755
    %v757 = vand.u32 %v682, 4294901760
    %758 = vmatprep.subr.mxu0 %v757
    %v759 = vand.u32 %v681, 4294901760
    %760 = vmatpush1.msra.mxu0 %v759
    %v761 = vand.u32 %v686, 4294901760
    %762 = vmatprep.subr.mxu0 %v761
    %v763 = vand.u32 %v685, 4294901760
    %764 = vmatpush1.msra.mxu0 %v763
    %765 = vmatprep.subr.mxu0 0.0
    %766 = vmatpush1.msra.mxu0 0.0
    %767 = vmatprep.subr.mxu0 0.0
    %768 = vmatpush1.msra.mxu0 0.0
    %769 = vmatprep.subr.mxu0 0.0
    %770 = vmatpush1.msra.mxu0 0.0
    %771 = vmatprep.subr.mxu0 0.0
    %772 = vmatpush1.msra.mxu0 0.0
    %773 = vmatprep.subr.mxu0 0.0
    %774 = vmatpush1.msra.mxu0 0.0
    %775 = vmatprep.subr.mxu0 0.0
    %776 = vmatpush1.msra.mxu0 0.0
    %777 = vmatprep.subr.mxu0 0.0
    %778 = vmatpush1.msra.mxu0 0.0
    %779 = vmatprep.subr.mxu0 0.0
    %780 = vmatpush1.msra.mxu0 0.0
    %781 = vmatprep.subr.mxu0 0.0
    %782 = vmatpush1.msra.mxu0 0.0
    %783 = vmatprep.subr.mxu0 0.0
    %784 = vmatpush1.msra.mxu0 0.0
    %785 = vmatprep.subr.mxu0 0.0
    %786 = vmatpush1.msra.mxu0 0.0
    %787 = vmatprep.subr.mxu0 0.0
    %788 = vmatpush1.msra.mxu0 0.0
    %789 = vmatprep.subr.mxu0 0.0
    %790 = vmatpush1.msra.mxu0 0.0
    %791 = vmatprep.subr.mxu0 0.0
    %792 = vmatpush1.msra.mxu0 0.0
    %793 = vmatprep.subr.mxu0 0.0
    %794 = vmatpush1.msra.mxu0 0.0
    %795 = vmatprep.subr.mxu0 0.0
    %796 = vmatpush1.msra.mxu0 0.0
    %797 = vmatprep.subr.mxu0 0.0
    %798 = vmatpush1.msra.mxu0 0.0
    %799 = vmatprep.subr.mxu0 0.0
    %800 = vmatpush1.msra.mxu0 0.0
    %801 = vmatprep.subr.mxu0 0.0
    %802 = vmatpush1.msra.mxu0 0.0
    %803 = vmatprep.subr.mxu0 0.0
    %804 = vmatpush1.msra.mxu0 0.0
    %805 = vmatprep.subr.mxu0 0.0
    %806 = vmatpush1.msra.mxu0 0.0
    %807 = vmatprep.subr.mxu0 0.0
    %808 = vmatpush1.msra.mxu0 0.0
    %809 = vmatprep.subr.mxu0 0.0
    %810 = vmatpush1.msra.mxu0 0.0
    %811 = vmatprep.mubr.f32.mxu0 0.0
    %v812 = vand.u32 %v727, 4294901760
    %v813 = vsub.f32 %v727, %v812
    %v814 = vand.u32 %v813, 4294901760
    %v815 = vsub.f32 %v813, %v814
    %v816 = vand.u32 %v815, 4294901760
    %817 = vmatmul.mubr.f32.gmra.mrb[0].mxu0 %v816
    %v818 = vpop.f32.mrb[0].mxu0
    %v819 = vadd.f32 %v515, %v818
    %v820 = vpop.f32.mrb[0].mxu0
    %v821 = vadd.f32 %v515, %v820
    %822 = vdwg.mxu0
    %v823 = vand.u32 %v654, 4294901760
    %v824 = vsub.f32 %v654, %v823
    %v825 = vand.u32 %v824, 4294901760
    %v826 = vsub.f32 %v824, %v825
    %v827 = vand.u32 %v826, 4294901760
    %828 = vmatprep.subr.mxu0 %v827
    %v829 = vand.u32 %v653, 4294901760
    %v830 = vsub.f32 %v653, %v829
    %v831 = vand.u32 %v830, 4294901760
    %v832 = vsub.f32 %v830, %v831
    %v833 = vand.u32 %v832, 4294901760
    %834 = vmatpush1.msra.mxu0 %v833
    %v835 = vand.u32 %v658, 4294901760
    %v836 = vsub.f32 %v658, %v835
    %v837 = vand.u32 %v836, 4294901760
    %v838 = vsub.f32 %v836, %v837
    %v839 = vand.u32 %v838, 4294901760
    %840 = vmatprep.subr.mxu0 %v839
    %v841 = vand.u32 %v657, 4294901760
    %v842 = vsub.f32 %v657, %v841
    %v843 = vand.u32 %v842, 4294901760
    %v844 = vsub.f32 %v842, %v843
    %v845 = vand.u32 %v844, 4294901760
    %846 = vmatpush1.msra.mxu0 %v845
    %v847 = vand.u32 %v662, 4294901760
    %v848 = vsub.f32 %v662, %v847
    %v849 = vand.u32 %v848, 4294901760
    %v850 = vsub.f32 %v848, %v849
    %v851 = vand.u32 %v850, 4294901760
    %852 = vmatprep.subr.mxu0 %v851
    %v853 = vand.u32 %v661, 4294901760
    %v854 = vsub.f32 %v661, %v853
    %v855 = vand.u32 %v854, 4294901760
    %v856 = vsub.f32 %v854, %v855
    %v857 = vand.u32 %v856, 4294901760
    %858 = vmatpush1.msra.mxu0 %v857
    %v859 = vand.u32 %v666, 4294901760
    %v860 = vsub.f32 %v666, %v859
    %v861 = vand.u32 %v860, 4294901760
    %v862 = vsub.f32 %v860, %v861
    %v863 = vand.u32 %v862, 4294901760
    %864 = vmatprep.subr.mxu0 %v863
    %v865 = vand.u32 %v665, 4294901760
    %v866 = vsub.f32 %v665, %v865
    %v867 = vand.u32 %v866, 4294901760
    %v868 = vsub.f32 %v866, %v867
    %v869 = vand.u32 %v868, 4294901760
    %870 = vmatpush1.msra.mxu0 %v869
    %v871 = vand.u32 %v670, 4294901760
    %v872 = vsub.f32 %v670, %v871
    %v873 = vand.u32 %v872, 4294901760
    %v874 = vsub.f32 %v872, %v873
    %v875 = vand.u32 %v874, 4294901760
    %876 = vmatprep.subr.mxu0 %v875
    %v877 = vand.u32 %v669, 4294901760
    %v878 = vsub.f32 %v669, %v877
    %v879 = vand.u32 %v878, 4294901760
    %v880 = vsub.f32 %v878, %v879
    %v881 = vand.u32 %v880, 4294901760
    %882 = vmatpush1.msra.mxu0 %v881
    %v883 = vand.u32 %v674, 4294901760
    %v884 = vsub.f32 %v674, %v883
    %v885 = vand.u32 %v884, 4294901760
    %v886 = vsub.f32 %v884, %v885
    %v887 = vand.u32 %v886, 4294901760
    %888 = vmatprep.subr.mxu0 %v887
    %v889 = vand.u32 %v673, 4294901760
    %v890 = vsub.f32 %v673, %v889
    %v891 = vand.u32 %v890, 4294901760
    %v892 = vsub.f32 %v890, %v891
    %v893 = vand.u32 %v892, 4294901760
    %894 = vmatpush1.msra.mxu0 %v893
    %v895 = vand.u32 %v678, 4294901760
    %v896 = vsub.f32 %v678, %v895
    %v897 = vand.u32 %v896, 4294901760
    %v898 = vsub.f32 %v896, %v897
    %v899 = vand.u32 %v898, 4294901760
    %900 = vmatprep.subr.mxu0 %v899
    %v901 = vand.u32 %v677, 4294901760
    %v902 = vsub.f32 %v677, %v901
    %v903 = vand.u32 %v902, 4294901760
    %v904 = vsub.f32 %v902, %v903
    %v905 = vand.u32 %v904, 4294901760
    %906 = vmatpush1.msra.mxu0 %v905
    %v907 = vand.u32 %v682, 4294901760
    %v908 = vsub.f32 %v682, %v907
    %v909 = vand.u32 %v908, 4294901760
    %v910 = vsub.f32 %v908, %v909
    %v911 = vand.u32 %v910, 4294901760
    %912 = vmatprep.subr.mxu0 %v911
    %v913 = vand.u32 %v681, 4294901760
    %v914 = vsub.f32 %v681, %v913
    %v915 = vand.u32 %v914, 4294901760
    %v916 = vsub.f32 %v914, %v915
    %v917 = vand.u32 %v916, 4294901760
    %918 = vmatpush1.msra.mxu0 %v917
    %v919 = vand.u32 %v686, 4294901760
    %v920 = vsub.f32 %v686, %v919
    %v921 = vand.u32 %v920, 4294901760
    %v922 = vsub.f32 %v920, %v921
    %v923 = vand.u32 %v922, 4294901760
    %924 = vmatprep.subr.mxu0 %v923
    %v925 = vand.u32 %v685, 4294901760
    %v926 = vsub.f32 %v685, %v925
    %v927 = vand.u32 %v926, 4294901760
    %v928 = vsub.f32 %v926, %v927
    %v929 = vand.u32 %v928, 4294901760
    %930 = vmatpush1.msra.mxu0 %v929
    %931 = vmatprep.subr.mxu0 0.0
    %932 = vmatpush1.msra.mxu0 0.0
    %933 = vmatprep.subr.mxu0 0.0
    %934 = vmatpush1.msra.mxu0 0.0
    %935 = vmatprep.subr.mxu0 0.0
    %936 = vmatpush1.msra.mxu0 0.0
    %937 = vmatprep.subr.mxu0 0.0
    %938 = vmatpush1.msra.mxu0 0.0
    %939 = vmatprep.subr.mxu0 0.0
    %940 = vmatpush1.msra.mxu0 0.0
    %941 = vmatprep.subr.mxu0 0.0
    %942 = vmatpush1.msra.mxu0 0.0
    %943 = vmatprep.subr.mxu0 0.0
    %944 = vmatpush1.msra.mxu0 0.0
    %945 = vmatprep.subr.mxu0 0.0
    %946 = vmatpush1.msra.mxu0 0.0
    %947 = vmatprep.subr.mxu0 0.0
    %948 = vmatpush1.msra.mxu0 0.0
    %949 = vmatprep.subr.mxu0 0.0
    %950 = vmatpush1.msra.mxu0 0.0
    %951 = vmatprep.subr.mxu0 0.0
    %952 = vmatpush1.msra.mxu0 0.0
    %953 = vmatprep.subr.mxu0 0.0
    %954 = vmatpush1.msra.mxu0 0.0
    %955 = vmatprep.subr.mxu0 0.0
    %956 = vmatpush1.msra.mxu0 0.0
    %957 = vmatprep.subr.mxu0 0.0
    %958 = vmatpush1.msra.mxu0 0.0
    %959 = vmatprep.subr.mxu0 0.0
    %960 = vmatpush1.msra.mxu0 0.0
    %961 = vmatprep.subr.mxu0 0.0
    %962 = vmatpush1.msra.mxu0 0.0
    %963 = vmatprep.subr.mxu0 0.0
    %964 = vmatpush1.msra.mxu0 0.0
    %965 = vmatprep.subr.mxu0 0.0
    %966 = vmatpush1.msra.mxu0 0.0
    %967 = vmatprep.subr.mxu0 0.0
    %968 = vmatpush1.msra.mxu0 0.0
    %969 = vmatprep.subr.mxu0 0.0
    %970 = vmatpush1.msra.mxu0 0.0
    %971 = vmatprep.subr.mxu0 0.0
    %972 = vmatpush1.msra.mxu0 0.0
    %973 = vmatprep.subr.mxu0 0.0
    %974 = vmatpush1.msra.mxu0 0.0
    %975 = vmatprep.subr.mxu0 0.0
    %976 = vmatpush1.msra.mxu0 0.0
    %977 = vmatprep.mubr.f32.mxu0 0.0
    %v978 = vand.u32 %v727, 4294901760
    %979 = vmatmul.mubr.f32.gmra.mrb[0].mxu0 %v978
    %v980 = vpop.f32.mrb[0].mxu0
    %v981 = vadd.f32 %v819, %v980
    %v982 = vpop.f32.mrb[0].mxu0
    %v983 = vadd.f32 %v821, %v982
    %984 = vdwg.mxu0
    %v985 = vand.u32 %v654, 4294901760
    %v986 = vsub.f32 %v654, %v985
    %987 = vmatprep.subr.mxu0 %v986
    %v988 = vand.u32 %v653, 4294901760
    %v989 = vsub.f32 %v653, %v988
    %990 = vmatpush1.msra.mxu0 %v989
    %v991 = vand.u32 %v658, 4294901760
    %v992 = vsub.f32 %v658, %v991
    %993 = vmatprep.subr.mxu0 %v992
    %v994 = vand.u32 %v657, 4294901760
    %v995 = vsub.f32 %v657, %v994
    %996 = vmatpush1.msra.mxu0 %v995
    %v997 = vand.u32 %v662, 4294901760
    %v998 = vsub.f32 %v662, %v997
    %999 = vmatprep.subr.mxu0 %v998
    %v1000 = vand.u32 %v661, 4294901760
    %v1001 = vsub.f32 %v661, %v1000
    %1002 = vmatpush1.msra.mxu0 %v1001
    %v1003 = vand.u32 %v666, 4294901760
    %v1004 = vsub.f32 %v666, %v1003
    %1005 = vmatprep.subr.mxu0 %v1004
    %v1006 = vand.u32 %v665, 4294901760
    %v1007 = vsub.f32 %v665, %v1006
    %1008 = vmatpush1.msra.mxu0 %v1007
    %v1009 = vand.u32 %v670, 4294901760
    %v1010 = vsub.f32 %v670, %v1009
    %1011 = vmatprep.subr.mxu0 %v1010
    %v1012 = vand.u32 %v669, 4294901760
    %v1013 = vsub.f32 %v669, %v1012
    %1014 = vmatpush1.msra.mxu0 %v1013
    %v1015 = vand.u32 %v674, 4294901760
    %v1016 = vsub.f32 %v674, %v1015
    %1017 = vmatprep.subr.mxu0 %v1016
    %v1018 = vand.u32 %v673, 4294901760
    %v1019 = vsub.f32 %v673, %v1018
    %1020 = vmatpush1.msra.mxu0 %v1019
    %v1021 = vand.u32 %v678, 4294901760
    %v1022 = vsub.f32 %v678, %v1021
    %1023 = vmatprep.subr.mxu0 %v1022
    %v1024 = vand.u32 %v677, 4294901760
    %v1025 = vsub.f32 %v677, %v1024
    %1026 = vmatpush1.msra.mxu0 %v1025
    %v1027 = vand.u32 %v682, 4294901760
    %v1028 = vsub.f32 %v682, %v1027
    %1029 = vmatprep.subr.mxu0 %v1028
    %v1030 = vand.u32 %v681, 4294901760
    %v1031 = vsub.f32 %v681, %v1030
    %1032 = vmatpush1.msra.mxu0 %v1031
    %v1033 = vand.u32 %v686, 4294901760
    %v1034 = vsub.f32 %v686, %v1033
    %1035 = vmatprep.subr.mxu0 %v1034
    %v1036 = vand.u32 %v685, 4294901760
    %v1037 = vsub.f32 %v685, %v1036
    %1038 = vmatpush1.msra.mxu0 %v1037
    %1039 = vmatprep.subr.mxu0 0.0
    %1040 = vmatpush1.msra.mxu0 0.0
    %1041 = vmatprep.subr.mxu0 0.0
    %1042 = vmatpush1.msra.mxu0 0.0
    %1043 = vmatprep.subr.mxu0 0.0
    %1044 = vmatpush1.msra.mxu0 0.0
    %1045 = vmatprep.subr.mxu0 0.0
    %1046 = vmatpush1.msra.mxu0 0.0
    %1047 = vmatprep.subr.mxu0 0.0
    %1048 = vmatpush1.msra.mxu0 0.0
    %1049 = vmatprep.subr.mxu0 0.0
    %1050 = vmatpush1.msra.mxu0 0.0
    %1051 = vmatprep.subr.mxu0 0.0
    %1052 = vmatpush1.msra.mxu0 0.0
    %1053 = vmatprep.subr.mxu0 0.0
    %1054 = vmatpush1.msra.mxu0 0.0
    %1055 = vmatprep.subr.mxu0 0.0
    %1056 = vmatpush1.msra.mxu0 0.0
    %1057 = vmatprep.subr.mxu0 0.0
    %1058 = vmatpush1.msra.mxu0 0.0
    %1059 = vmatprep.subr.mxu0 0.0
    %1060 = vmatpush1.msra.mxu0 0.0
    %1061 = vmatprep.subr.mxu0 0.0
    %1062 = vmatpush1.msra.mxu0 0.0
    %1063 = vmatprep.subr.mxu0 0.0
    %1064 = vmatpush1.msra.mxu0 0.0
    %1065 = vmatprep.subr.mxu0 0.0
    %1066 = vmatpush1.msra.mxu0 0.0
    %1067 = vmatprep.subr.mxu0 0.0
    %1068 = vmatpush1.msra.mxu0 0.0
    %1069 = vmatprep.subr.mxu0 0.0
    %1070 = vmatpush1.msra.mxu0 0.0
    %1071 = vmatprep.subr.mxu0 0.0
    %1072 = vmatpush1.msra.mxu0 0.0
    %1073 = vmatprep.subr.mxu0 0.0
    %1074 = vmatpush1.msra.mxu0 0.0
    %1075 = vmatprep.subr.mxu0 0.0
    %1076 = vmatpush1.msra.mxu0 0.0
    %1077 = vmatprep.subr.mxu0 0.0
    %1078 = vmatpush1.msra.mxu0 0.0
    %1079 = vmatprep.subr.mxu0 0.0
    %1080 = vmatpush1.msra.mxu0 0.0
    %1081 = vmatprep.subr.mxu0 0.0
    %1082 = vmatpush1.msra.mxu0 0.0
    %1083 = vmatprep.subr.mxu0 0.0
    %1084 = vmatpush1.msra.mxu0 0.0
    %1085 = vmatprep.mubr.f32.mxu0 0.0
    %v1086 = vand.u32 %v727, 4294901760
    %v1087 = vsub.f32 %v727, %v1086
    %1088 = vmatmul.mubr.f32.gmra.mrb[0].mxu0 %v1087
    %v1089 = vpop.f32.mrb[0].mxu0
    %v1090 = vadd.f32 %v981, %v1089
    %v1091 = vpop.f32.mrb[0].mxu0
    %v1092 = vadd.f32 %v983, %v1091
    %1093 = vdwg.mxu0
    %v1094 = vand.u32 %v654, 4294901760
    %1095 = vmatprep.subr.mxu0 %v1094
    %v1096 = vand.u32 %v653, 4294901760
    %1097 = vmatpush1.msra.mxu0 %v1096
    %v1098 = vand.u32 %v658, 4294901760
    %1099 = vmatprep.subr.mxu0 %v1098
    %v1100 = vand.u32 %v657, 4294901760
    %1101 = vmatpush1.msra.mxu0 %v1100
    %v1102 = vand.u32 %v662, 4294901760
    %1103 = vmatprep.subr.mxu0 %v1102
    %v1104 = vand.u32 %v661, 4294901760
    %1105 = vmatpush1.msra.mxu0 %v1104
    %v1106 = vand.u32 %v666, 4294901760
    %1107 = vmatprep.subr.mxu0 %v1106
    %v1108 = vand.u32 %v665, 4294901760
    %1109 = vmatpush1.msra.mxu0 %v1108
    %v1110 = vand.u32 %v670, 4294901760
    %1111 = vmatprep.subr.mxu0 %v1110
    %v1112 = vand.u32 %v669, 4294901760
    %1113 = vmatpush1.msra.mxu0 %v1112
    %v1114 = vand.u32 %v674, 4294901760
    %1115 = vmatprep.subr.mxu0 %v1114
    %v1116 = vand.u32 %v673, 4294901760
    %1117 = vmatpush1.msra.mxu0 %v1116
    %v1118 = vand.u32 %v678, 4294901760
    %1119 = vmatprep.subr.mxu0 %v1118
    %v1120 = vand.u32 %v677, 4294901760
    %1121 = vmatpush1.msra.mxu0 %v1120
    %v1122 = vand.u32 %v682, 4294901760
    %1123 = vmatprep.subr.mxu0 %v1122
    %v1124 = vand.u32 %v681, 4294901760
    %1125 = vmatpush1.msra.mxu0 %v1124
    %v1126 = vand.u32 %v686, 4294901760
    %1127 = vmatprep.subr.mxu0 %v1126
    %v1128 = vand.u32 %v685, 4294901760
    %1129 = vmatpush1.msra.mxu0 %v1128
    %1130 = vmatprep.subr.mxu0 0.0
    %1131 = vmatpush1.msra.mxu0 0.0
    %1132 = vmatprep.subr.mxu0 0.0
    %1133 = vmatpush1.msra.mxu0 0.0
    %1134 = vmatprep.subr.mxu0 0.0
    %1135 = vmatpush1.msra.mxu0 0.0
    %1136 = vmatprep.subr.mxu0 0.0
    %1137 = vmatpush1.msra.mxu0 0.0
    %1138 = vmatprep.subr.mxu0 0.0
    %1139 = vmatpush1.msra.mxu0 0.0
    %1140 = vmatprep.subr.mxu0 0.0
    %1141 = vmatpush1.msra.mxu0 0.0
    %1142 = vmatprep.subr.mxu0 0.0
    %1143 = vmatpush1.msra.mxu0 0.0
    %1144 = vmatprep.subr.mxu0 0.0
    %1145 = vmatpush1.msra.mxu0 0.0
    %1146 = vmatprep.subr.mxu0 0.0
    %1147 = vmatpush1.msra.mxu0 0.0
    %1148 = vmatprep.subr.mxu0 0.0
    %1149 = vmatpush1.msra.mxu0 0.0
    %1150 = vmatprep.subr.mxu0 0.0
    %1151 = vmatpush1.msra.mxu0 0.0
    %1152 = vmatprep.subr.mxu0 0.0
    %1153 = vmatpush1.msra.mxu0 0.0
    %1154 = vmatprep.subr.mxu0 0.0
    %1155 = vmatpush1.msra.mxu0 0.0
    %1156 = vmatprep.subr.mxu0 0.0
    %1157 = vmatpush1.msra.mxu0 0.0
    %1158 = vmatprep.subr.mxu0 0.0
    %1159 = vmatpush1.msra.mxu0 0.0
    %1160 = vmatprep.subr.mxu0 0.0
    %1161 = vmatpush1.msra.mxu0 0.0
    %1162 = vmatprep.subr.mxu0 0.0
    %1163 = vmatpush1.msra.mxu0 0.0
    %1164 = vmatprep.subr.mxu0 0.0
    %1165 = vmatpush1.msra.mxu0 0.0
    %1166 = vmatprep.subr.mxu0 0.0
    %1167 = vmatpush1.msra.mxu0 0.0
    %1168 = vmatprep.subr.mxu0 0.0
    %1169 = vmatpush1.msra.mxu0 0.0
    %1170 = vmatprep.subr.mxu0 0.0
    %1171 = vmatpush1.msra.mxu0 0.0
    %1172 = vmatprep.subr.mxu0 0.0
    %1173 = vmatpush1.msra.mxu0 0.0
    %1174 = vmatprep.subr.mxu0 0.0
    %1175 = vmatpush1.msra.mxu0 0.0
    %1176 = vmatprep.mubr.f32.mxu0 0.0
    %v1177 = vand.u32 %v727, 4294901760
    %v1178 = vsub.f32 %v727, %v1177
    %v1179 = vand.u32 %v1178, 4294901760
    %1180 = vmatmul.mubr.f32.gmra.mrb[0].mxu0 %v1179
    %v1181 = vpop.f32.mrb[0].mxu0
    %v1182 = vadd.f32 %v1090, %v1181
    %v1183 = vpop.f32.mrb[0].mxu0
    %v1184 = vadd.f32 %v1092, %v1183
    %1185 = vdwg.mxu0
    %v1186 = vand.u32 %v654, 4294901760
    %v1187 = vsub.f32 %v654, %v1186
    %v1188 = vand.u32 %v1187, 4294901760
    %1189 = vmatprep.subr.mxu0 %v1188
    %v1190 = vand.u32 %v653, 4294901760
    %v1191 = vsub.f32 %v653, %v1190
    %v1192 = vand.u32 %v1191, 4294901760
    %1193 = vmatpush1.msra.mxu0 %v1192
    %v1194 = vand.u32 %v658, 4294901760
    %v1195 = vsub.f32 %v658, %v1194
    %v1196 = vand.u32 %v1195, 4294901760
    %1197 = vmatprep.subr.mxu0 %v1196
    %v1198 = vand.u32 %v657, 4294901760
    %v1199 = vsub.f32 %v657, %v1198
    %v1200 = vand.u32 %v1199, 4294901760
    %1201 = vmatpush1.msra.mxu0 %v1200
    %v1202 = vand.u32 %v662, 4294901760
    %v1203 = vsub.f32 %v662, %v1202
    %v1204 = vand.u32 %v1203, 4294901760
    %1205 = vmatprep.subr.mxu0 %v1204
    %v1206 = vand.u32 %v661, 4294901760
    %v1207 = vsub.f32 %v661, %v1206
    %v1208 = vand.u32 %v1207, 4294901760
    %1209 = vmatpush1.msra.mxu0 %v1208
    %v1210 = vand.u32 %v666, 4294901760
    %v1211 = vsub.f32 %v666, %v1210
    %v1212 = vand.u32 %v1211, 4294901760
    %1213 = vmatprep.subr.mxu0 %v1212
    %v1214 = vand.u32 %v665, 4294901760
    %v1215 = vsub.f32 %v665, %v1214
    %v1216 = vand.u32 %v1215, 4294901760
    %1217 = vmatpush1.msra.mxu0 %v1216
    %v1218 = vand.u32 %v670, 4294901760
    %v1219 = vsub.f32 %v670, %v1218
    %v1220 = vand.u32 %v1219, 4294901760
    %1221 = vmatprep.subr.mxu0 %v1220
    %v1222 = vand.u32 %v669, 4294901760
    %v1223 = vsub.f32 %v669, %v1222
    %v1224 = vand.u32 %v1223, 4294901760
    %1225 = vmatpush1.msra.mxu0 %v1224
    %v1226 = vand.u32 %v674, 4294901760
    %v1227 = vsub.f32 %v674, %v1226
    %v1228 = vand.u32 %v1227, 4294901760
    %1229 = vmatprep.subr.mxu0 %v1228
    %v1230 = vand.u32 %v673, 4294901760
    %v1231 = vsub.f32 %v673, %v1230
    %v1232 = vand.u32 %v1231, 4294901760
    %1233 = vmatpush1.msra.mxu0 %v1232
    %v1234 = vand.u32 %v678, 4294901760
    %v1235 = vsub.f32 %v678, %v1234
    %v1236 = vand.u32 %v1235, 4294901760
    %1237 = vmatprep.subr.mxu0 %v1236
    %v1238 = vand.u32 %v677, 4294901760
    %v1239 = vsub.f32 %v677, %v1238
    %v1240 = vand.u32 %v1239, 4294901760
    %1241 = vmatpush1.msra.mxu0 %v1240
    %v1242 = vand.u32 %v682, 4294901760
    %v1243 = vsub.f32 %v682, %v1242
    %v1244 = vand.u32 %v1243, 4294901760
    %1245 = vmatprep.subr.mxu0 %v1244
    %v1246 = vand.u32 %v681, 4294901760
    %v1247 = vsub.f32 %v681, %v1246
    %v1248 = vand.u32 %v1247, 4294901760
    %1249 = vmatpush1.msra.mxu0 %v1248
    %v1250 = vand.u32 %v686, 4294901760
    %v1251 = vsub.f32 %v686, %v1250
    %v1252 = vand.u32 %v1251, 4294901760
    %1253 = vmatprep.subr.mxu0 %v1252
    %v1254 = vand.u32 %v685, 4294901760
    %v1255 = vsub.f32 %v685, %v1254
    %v1256 = vand.u32 %v1255, 4294901760
    %1257 = vmatpush1.msra.mxu0 %v1256
    %1258 = vmatprep.subr.mxu0 0.0
    %1259 = vmatpush1.msra.mxu0 0.0
    %1260 = vmatprep.subr.mxu0 0.0
    %1261 = vmatpush1.msra.mxu0 0.0
    %1262 = vmatprep.subr.mxu0 0.0
    %1263 = vmatpush1.msra.mxu0 0.0
    %1264 = vmatprep.subr.mxu0 0.0
    %1265 = vmatpush1.msra.mxu0 0.0
    %1266 = vmatprep.subr.mxu0 0.0
    %1267 = vmatpush1.msra.mxu0 0.0
    %1268 = vmatprep.subr.mxu0 0.0
    %1269 = vmatpush1.msra.mxu0 0.0
    %1270 = vmatprep.subr.mxu0 0.0
    %1271 = vmatpush1.msra.mxu0 0.0
    %1272 = vmatprep.subr.mxu0 0.0
    %1273 = vmatpush1.msra.mxu0 0.0
    %1274 = vmatprep.subr.mxu0 0.0
    %1275 = vmatpush1.msra.mxu0 0.0
    %1276 = vmatprep.subr.mxu0 0.0
    %1277 = vmatpush1.msra.mxu0 0.0
    %1278 = vmatprep.subr.mxu0 0.0
    %1279 = vmatpush1.msra.mxu0 0.0
    %1280 = vmatprep.subr.mxu0 0.0
    %1281 = vmatpush1.msra.mxu0 0.0
    %1282 = vmatprep.subr.mxu0 0.0
    %1283 = vmatpush1.msra.mxu0 0.0
    %1284 = vmatprep.subr.mxu0 0.0
    %1285 = vmatpush1.msra.mxu0 0.0
    %1286 = vmatprep.subr.mxu0 0.0
    %1287 = vmatpush1.msra.mxu0 0.0
    %1288 = vmatprep.subr.mxu0 0.0
    %1289 = vmatpush1.msra.mxu0 0.0
    %1290 = vmatprep.subr.mxu0 0.0
    %1291 = vmatpush1.msra.mxu0 0.0
    %1292 = vmatprep.subr.mxu0 0.0
    %1293 = vmatpush1.msra.mxu0 0.0
    %1294 = vmatprep.subr.mxu0 0.0
    %1295 = vmatpush1.msra.mxu0 0.0
    %1296 = vmatprep.subr.mxu0 0.0
    %1297 = vmatpush1.msra.mxu0 0.0
    %1298 = vmatprep.subr.mxu0 0.0
    %1299 = vmatpush1.msra.mxu0 0.0
    %1300 = vmatprep.subr.mxu0 0.0
    %1301 = vmatpush1.msra.mxu0 0.0
    %1302 = vmatprep.subr.mxu0 0.0
    %1303 = vmatpush1.msra.mxu0 0.0
    %1304 = vmatprep.mubr.f32.mxu0 0.0
    %v1305 = vand.u32 %v727, 4294901760
    %1306 = vmatmul.mubr.f32.gmra.mrb[0].mxu0 %v1305
    %v1307 = vpop.f32.mrb[0].mxu0
    %v1308 = vadd.f32 %v1182, %v1307
    %v1309 = vpop.f32.mrb[0].mxu0
    %v1310 = vadd.f32 %v1184, %v1309
    %1311 = vdwg.mxu0
    %v1312 = vand.u32 %v654, 4294901760
    %1313 = vmatprep.subr.mxu0 %v1312
    %v1314 = vand.u32 %v653, 4294901760
    %1315 = vmatpush1.msra.mxu0 %v1314
    %v1316 = vand.u32 %v658, 4294901760
    %1317 = vmatprep.subr.mxu0 %v1316
    %v1318 = vand.u32 %v657, 4294901760
    %1319 = vmatpush1.msra.mxu0 %v1318
    %v1320 = vand.u32 %v662, 4294901760
    %1321 = vmatprep.subr.mxu0 %v1320
    %v1322 = vand.u32 %v661, 4294901760
    %1323 = vmatpush1.msra.mxu0 %v1322
    %v1324 = vand.u32 %v666, 4294901760
    %1325 = vmatprep.subr.mxu0 %v1324
    %v1326 = vand.u32 %v665, 4294901760
    %1327 = vmatpush1.msra.mxu0 %v1326
    %v1328 = vand.u32 %v670, 4294901760
    %1329 = vmatprep.subr.mxu0 %v1328
    %v1330 = vand.u32 %v669, 4294901760
    %1331 = vmatpush1.msra.mxu0 %v1330
    %v1332 = vand.u32 %v674, 4294901760
    %1333 = vmatprep.subr.mxu0 %v1332
    %v1334 = vand.u32 %v673, 4294901760
    %1335 = vmatpush1.msra.mxu0 %v1334
    %v1336 = vand.u32 %v678, 4294901760
    %1337 = vmatprep.subr.mxu0 %v1336
    %v1338 = vand.u32 %v677, 4294901760
    %1339 = vmatpush1.msra.mxu0 %v1338
    %v1340 = vand.u32 %v682, 4294901760
    %1341 = vmatprep.subr.mxu0 %v1340
    %v1342 = vand.u32 %v681, 4294901760
    %1343 = vmatpush1.msra.mxu0 %v1342
    %v1344 = vand.u32 %v686, 4294901760
    %1345 = vmatprep.subr.mxu0 %v1344
    %v1346 = vand.u32 %v685, 4294901760
    %1347 = vmatpush1.msra.mxu0 %v1346
    %1348 = vmatprep.subr.mxu0 0.0
    %1349 = vmatpush1.msra.mxu0 0.0
    %1350 = vmatprep.subr.mxu0 0.0
    %1351 = vmatpush1.msra.mxu0 0.0
    %1352 = vmatprep.subr.mxu0 0.0
    %1353 = vmatpush1.msra.mxu0 0.0
    %1354 = vmatprep.subr.mxu0 0.0
    %1355 = vmatpush1.msra.mxu0 0.0
    %1356 = vmatprep.subr.mxu0 0.0
    %1357 = vmatpush1.msra.mxu0 0.0
    %1358 = vmatprep.subr.mxu0 0.0
    %1359 = vmatpush1.msra.mxu0 0.0
    %1360 = vmatprep.subr.mxu0 0.0
    %1361 = vmatpush1.msra.mxu0 0.0
    %1362 = vmatprep.subr.mxu0 0.0
    %1363 = vmatpush1.msra.mxu0 0.0
    %1364 = vmatprep.subr.mxu0 0.0
    %1365 = vmatpush1.msra.mxu0 0.0
    %1366 = vmatprep.subr.mxu0 0.0
    %1367 = vmatpush1.msra.mxu0 0.0
    %1368 = vmatprep.subr.mxu0 0.0
    %1369 = vmatpush1.msra.mxu0 0.0
    %1370 = vmatprep.subr.mxu0 0.0
    %1371 = vmatpush1.msra.mxu0 0.0
    %1372 = vmatprep.subr.mxu0 0.0
    %1373 = vmatpush1.msra.mxu0 0.0
    %1374 = vmatprep.subr.mxu0 0.0
    %1375 = vmatpush1.msra.mxu0 0.0
    %1376 = vmatprep.subr.mxu0 0.0
    %1377 = vmatpush1.msra.mxu0 0.0
    %1378 = vmatprep.subr.mxu0 0.0
    %1379 = vmatpush1.msra.mxu0 0.0
    %1380 = vmatprep.subr.mxu0 0.0
    %1381 = vmatpush1.msra.mxu0 0.0
    %1382 = vmatprep.subr.mxu0 0.0
    %1383 = vmatpush1.msra.mxu0 0.0
    %1384 = vmatprep.subr.mxu0 0.0
    %1385 = vmatpush1.msra.mxu0 0.0
    %1386 = vmatprep.subr.mxu0 0.0
    %1387 = vmatpush1.msra.mxu0 0.0
    %1388 = vmatprep.subr.mxu0 0.0
    %1389 = vmatpush1.msra.mxu0 0.0
    %1390 = vmatprep.subr.mxu0 0.0
    %1391 = vmatpush1.msra.mxu0 0.0
    %1392 = vmatprep.subr.mxu0 0.0
    %1393 = vmatpush1.msra.mxu0 0.0
    %1394 = vmatprep.mubr.f32.mxu0 0.0
    %v1395 = vand.u32 %v727, 4294901760
    %1396 = vmatmul.mubr.f32.gmra.mrb[0].mxu0 %v1395
    %v1397 = vpop.f32.mrb[0].mxu0
    %v1398 = vadd.f32 %v1308, %v1397
    %v1399 = vpop.f32.mrb[0].mxu0
    %v1400 = vadd.f32 %v1310, %v1399
    %1401 = vdwg.mxu0
    %v1402 = vand.u32 %v656, 4294901760
    %1403 = vmatprep.subr.mxu0 %v1402
    %v1404 = vand.u32 %v655, 4294901760
    %1405 = vmatpush1.msra.mxu0 %v1404
    %v1406 = vand.u32 %v660, 4294901760
    %1407 = vmatprep.subr.mxu0 %v1406
    %v1408 = vand.u32 %v659, 4294901760
    %1409 = vmatpush1.msra.mxu0 %v1408
    %v1410 = vand.u32 %v664, 4294901760
    %1411 = vmatprep.subr.mxu0 %v1410
    %v1412 = vand.u32 %v663, 4294901760
    %1413 = vmatpush1.msra.mxu0 %v1412
    %v1414 = vand.u32 %v668, 4294901760
    %1415 = vmatprep.subr.mxu0 %v1414
    %v1416 = vand.u32 %v667, 4294901760
    %1417 = vmatpush1.msra.mxu0 %v1416
    %v1418 = vand.u32 %v672, 4294901760
    %1419 = vmatprep.subr.mxu0 %v1418
    %v1420 = vand.u32 %v671, 4294901760
    %1421 = vmatpush1.msra.mxu0 %v1420
    %v1422 = vand.u32 %v676, 4294901760
    %1423 = vmatprep.subr.mxu0 %v1422
    %v1424 = vand.u32 %v675, 4294901760
    %1425 = vmatpush1.msra.mxu0 %v1424
    %v1426 = vand.u32 %v680, 4294901760
    %1427 = vmatprep.subr.mxu0 %v1426
    %v1428 = vand.u32 %v679, 4294901760
    %1429 = vmatpush1.msra.mxu0 %v1428
    %v1430 = vand.u32 %v684, 4294901760
    %1431 = vmatprep.subr.mxu0 %v1430
    %v1432 = vand.u32 %v683, 4294901760
    %1433 = vmatpush1.msra.mxu0 %v1432
    %v1434 = vand.u32 %v688, 4294901760
    %1435 = vmatprep.subr.mxu0 %v1434
    %v1436 = vand.u32 %v687, 4294901760
    %1437 = vmatpush1.msra.mxu0 %v1436
    %1438 = vmatprep.subr.mxu0 0.0
    %1439 = vmatpush1.msra.mxu0 0.0
    %1440 = vmatprep.subr.mxu0 0.0
    %1441 = vmatpush1.msra.mxu0 0.0
    %1442 = vmatprep.subr.mxu0 0.0
    %1443 = vmatpush1.msra.mxu0 0.0
    %1444 = vmatprep.subr.mxu0 0.0
    %1445 = vmatpush1.msra.mxu0 0.0
    %1446 = vmatprep.subr.mxu0 0.0
    %1447 = vmatpush1.msra.mxu0 0.0
    %1448 = vmatprep.subr.mxu0 0.0
    %1449 = vmatpush1.msra.mxu0 0.0
    %1450 = vmatprep.subr.mxu0 0.0
    %1451 = vmatpush1.msra.mxu0 0.0
    %1452 = vmatprep.subr.mxu0 0.0
    %1453 = vmatpush1.msra.mxu0 0.0
    %1454 = vmatprep.subr.mxu0 0.0
    %1455 = vmatpush1.msra.mxu0 0.0
    %1456 = vmatprep.subr.mxu0 0.0
    %1457 = vmatpush1.msra.mxu0 0.0
    %1458 = vmatprep.subr.mxu0 0.0
    %1459 = vmatpush1.msra.mxu0 0.0
    %1460 = vmatprep.subr.mxu0 0.0
    %1461 = vmatpush1.msra.mxu0 0.0
    %1462 = vmatprep.subr.mxu0 0.0
    %1463 = vmatpush1.msra.mxu0 0.0
    %1464 = vmatprep.subr.mxu0 0.0
    %1465 = vmatpush1.msra.mxu0 0.0
    %1466 = vmatprep.subr.mxu0 0.0
    %1467 = vmatpush1.msra.mxu0 0.0
    %1468 = vmatprep.subr.mxu0 0.0
    %1469 = vmatpush1.msra.mxu0 0.0
    %1470 = vmatprep.subr.mxu0 0.0
    %1471 = vmatpush1.msra.mxu0 0.0
    %1472 = vmatprep.subr.mxu0 0.0
    %1473 = vmatpush1.msra.mxu0 0.0
    %1474 = vmatprep.subr.mxu0 0.0
    %1475 = vmatpush1.msra.mxu0 0.0
    %1476 = vmatprep.subr.mxu0 0.0
    %1477 = vmatpush1.msra.mxu0 0.0
    %1478 = vmatprep.subr.mxu0 0.0
    %1479 = vmatpush1.msra.mxu0 0.0
    %1480 = vmatprep.subr.mxu0 0.0
    %1481 = vmatpush1.msra.mxu0 0.0
    %1482 = vmatprep.subr.mxu0 0.0
    %1483 = vmatpush1.msra.mxu0 0.0
    %1484 = vmatprep.mubr.f32.mxu0 0.0
    %v1485 = vand.u32 %v727, 4294901760
    %v1486 = vsub.f32 %v727, %v1485
    %v1487 = vand.u32 %v1486, 4294901760
    %v1488 = vsub.f32 %v1486, %v1487
    %v1489 = vand.u32 %v1488, 4294901760
    %1490 = vmatmul.mubr.f32.gmra.mrb[0].mxu0 %v1489
    %v1491 = vpop.f32.mrb[0].mxu0
    %v1492 = vadd.f32 %v515, %v1491
    %v1493 = vpop.f32.mrb[0].mxu0
    %v1494 = vadd.f32 %v515, %v1493
    %1495 = vdwg.mxu0
    %v1496 = vand.u32 %v656, 4294901760
    %v1497 = vsub.f32 %v656, %v1496
    %v1498 = vand.u32 %v1497, 4294901760
    %v1499 = vsub.f32 %v1497, %v1498
    %v1500 = vand.u32 %v1499, 4294901760
    %1501 = vmatprep.subr.mxu0 %v1500
    %v1502 = vand.u32 %v655, 4294901760
    %v1503 = vsub.f32 %v655, %v1502
    %v1504 = vand.u32 %v1503, 4294901760
    %v1505 = vsub.f32 %v1503, %v1504
    %v1506 = vand.u32 %v1505, 4294901760
    %1507 = vmatpush1.msra.mxu0 %v1506
    %v1508 = vand.u32 %v660, 4294901760
    %v1509 = vsub.f32 %v660, %v1508
    %v1510 = vand.u32 %v1509, 4294901760
    %v1511 = vsub.f32 %v1509, %v1510
    %v1512 = vand.u32 %v1511, 4294901760
    %1513 = vmatprep.subr.mxu0 %v1512
    %v1514 = vand.u32 %v659, 4294901760
    %v1515 = vsub.f32 %v659, %v1514
    %v1516 = vand.u32 %v1515, 4294901760
    %v1517 = vsub.f32 %v1515, %v1516
    %v1518 = vand.u32 %v1517, 4294901760
    %1519 = vmatpush1.msra.mxu0 %v1518
    %v1520 = vand.u32 %v664, 4294901760
    %v1521 = vsub.f32 %v664, %v1520
    %v1522 = vand.u32 %v1521, 4294901760
    %v1523 = vsub.f32 %v1521, %v1522
    %v1524 = vand.u32 %v1523, 4294901760
    %1525 = vmatprep.subr.mxu0 %v1524
    %v1526 = vand.u32 %v663, 4294901760
    %v1527 = vsub.f32 %v663, %v1526
    %v1528 = vand.u32 %v1527, 4294901760
    %v1529 = vsub.f32 %v1527, %v1528
    %v1530 = vand.u32 %v1529, 4294901760
    %1531 = vmatpush1.msra.mxu0 %v1530
    %v1532 = vand.u32 %v668, 4294901760
    %v1533 = vsub.f32 %v668, %v1532
    %v1534 = vand.u32 %v1533, 4294901760
    %v1535 = vsub.f32 %v1533, %v1534
    %v1536 = vand.u32 %v1535, 4294901760
    %1537 = vmatprep.subr.mxu0 %v1536
    %v1538 = vand.u32 %v667, 4294901760
    %v1539 = vsub.f32 %v667, %v1538
    %v1540 = vand.u32 %v1539, 4294901760
    %v1541 = vsub.f32 %v1539, %v1540
    %v1542 = vand.u32 %v1541, 4294901760
    %1543 = vmatpush1.msra.mxu0 %v1542
    %v1544 = vand.u32 %v672, 4294901760
    %v1545 = vsub.f32 %v672, %v1544
    %v1546 = vand.u32 %v1545, 4294901760
    %v1547 = vsub.f32 %v1545, %v1546
    %v1548 = vand.u32 %v1547, 4294901760
    %1549 = vmatprep.subr.mxu0 %v1548
    %v1550 = vand.u32 %v671, 4294901760
    %v1551 = vsub.f32 %v671, %v1550
    %v1552 = vand.u32 %v1551, 4294901760
    %v1553 = vsub.f32 %v1551, %v1552
    %v1554 = vand.u32 %v1553, 4294901760
    %1555 = vmatpush1.msra.mxu0 %v1554
    %v1556 = vand.u32 %v676, 4294901760
    %v1557 = vsub.f32 %v676, %v1556
    %v1558 = vand.u32 %v1557, 4294901760
    %v1559 = vsub.f32 %v1557, %v1558
    %v1560 = vand.u32 %v1559, 4294901760
    %1561 = vmatprep.subr.mxu0 %v1560
    %v1562 = vand.u32 %v675, 4294901760
    %v1563 = vsub.f32 %v675, %v1562
    %v1564 = vand.u32 %v1563, 4294901760
    %v1565 = vsub.f32 %v1563, %v1564
    %v1566 = vand.u32 %v1565, 4294901760
    %1567 = vmatpush1.msra.mxu0 %v1566
    %v1568 = vand.u32 %v680, 4294901760
    %v1569 = vsub.f32 %v680, %v1568
    %v1570 = vand.u32 %v1569, 4294901760
    %v1571 = vsub.f32 %v1569, %v1570
    %v1572 = vand.u32 %v1571, 4294901760
    %1573 = vmatprep.subr.mxu0 %v1572
    %v1574 = vand.u32 %v679, 4294901760
    %v1575 = vsub.f32 %v679, %v1574
    %v1576 = vand.u32 %v1575, 4294901760
    %v1577 = vsub.f32 %v1575, %v1576
    %v1578 = vand.u32 %v1577, 4294901760
    %1579 = vmatpush1.msra.mxu0 %v1578
    %v1580 = vand.u32 %v684, 4294901760
    %v1581 = vsub.f32 %v684, %v1580
    %v1582 = vand.u32 %v1581, 4294901760
    %v1583 = vsub.f32 %v1581, %v1582
    %v1584 = vand.u32 %v1583, 4294901760
    %1585 = vmatprep.subr.mxu0 %v1584
    %v1586 = vand.u32 %v683, 4294901760
    %v1587 = vsub.f32 %v683, %v1586
    %v1588 = vand.u32 %v1587, 4294901760
    %v1589 = vsub.f32 %v1587, %v1588
    %v1590 = vand.u32 %v1589, 4294901760
    %1591 = vmatpush1.msra.mxu0 %v1590
    %v1592 = vand.u32 %v688, 4294901760
    %v1593 = vsub.f32 %v688, %v1592
    %v1594 = vand.u32 %v1593, 4294901760
    %v1595 = vsub.f32 %v1593, %v1594
    %v1596 = vand.u32 %v1595, 4294901760
    %1597 = vmatprep.subr.mxu0 %v1596
    %v1598 = vand.u32 %v687, 4294901760
    %v1599 = vsub.f32 %v687, %v1598
    %v1600 = vand.u32 %v1599, 4294901760
    %v1601 = vsub.f32 %v1599, %v1600
    %v1602 = vand.u32 %v1601, 4294901760
    %1603 = vmatpush1.msra.mxu0 %v1602
    %1604 = vmatprep.subr.mxu0 0.0
    %1605 = vmatpush1.msra.mxu0 0.0
    %1606 = vmatprep.subr.mxu0 0.0
    %1607 = vmatpush1.msra.mxu0 0.0
    %1608 = vmatprep.subr.mxu0 0.0
    %1609 = vmatpush1.msra.mxu0 0.0
    %1610 = vmatprep.subr.mxu0 0.0
    %1611 = vmatpush1.msra.mxu0 0.0
    %1612 = vmatprep.subr.mxu0 0.0
    %1613 = vmatpush1.msra.mxu0 0.0
    %1614 = vmatprep.subr.mxu0 0.0
    %1615 = vmatpush1.msra.mxu0 0.0
    %1616 = vmatprep.subr.mxu0 0.0
    %1617 = vmatpush1.msra.mxu0 0.0
    %1618 = vmatprep.subr.mxu0 0.0
    %1619 = vmatpush1.msra.mxu0 0.0
    %1620 = vmatprep.subr.mxu0 0.0
    %1621 = vmatpush1.msra.mxu0 0.0
    %1622 = vmatprep.subr.mxu0 0.0
    %1623 = vmatpush1.msra.mxu0 0.0
    %1624 = vmatprep.subr.mxu0 0.0
    %1625 = vmatpush1.msra.mxu0 0.0
    %1626 = vmatprep.subr.mxu0 0.0
    %1627 = vmatpush1.msra.mxu0 0.0
    %1628 = vmatprep.subr.mxu0 0.0
    %1629 = vmatpush1.msra.mxu0 0.0
    %1630 = vmatprep.subr.mxu0 0.0
    %1631 = vmatpush1.msra.mxu0 0.0
    %1632 = vmatprep.subr.mxu0 0.0
    %1633 = vmatpush1.msra.mxu0 0.0
    %1634 = vmatprep.subr.mxu0 0.0
    %1635 = vmatpush1.msra.mxu0 0.0
    %1636 = vmatprep.subr.mxu0 0.0
    %1637 = vmatpush1.msra.mxu0 0.0
    %1638 = vmatprep.subr.mxu0 0.0
    %1639 = vmatpush1.msra.mxu0 0.0
    %1640 = vmatprep.subr.mxu0 0.0
    %1641 = vmatpush1.msra.mxu0 0.0
    %1642 = vmatprep.subr.mxu0 0.0
    %1643 = vmatpush1.msra.mxu0 0.0
    %1644 = vmatprep.subr.mxu0 0.0
    %1645 = vmatpush1.msra.mxu0 0.0
    %1646 = vmatprep.subr.mxu0 0.0
    %1647 = vmatpush1.msra.mxu0 0.0
    %1648 = vmatprep.subr.mxu0 0.0
    %1649 = vmatpush1.msra.mxu0 0.0
    %1650 = vmatprep.mubr.f32.mxu0 0.0
    %v1651 = vand.u32 %v727, 4294901760
    %1652 = vmatmul.mubr.f32.gmra.mrb[0].mxu0 %v1651
    %v1653 = vpop.f32.mrb[0].mxu0
    %v1654 = vadd.f32 %v1492, %v1653
    %v1655 = vpop.f32.mrb[0].mxu0
    %v1656 = vadd.f32 %v1494, %v1655
    %1657 = vdwg.mxu0
    %v1658 = vand.u32 %v656, 4294901760
    %v1659 = vsub.f32 %v656, %v1658
    %1660 = vmatprep.subr.mxu0 %v1659
    %v1661 = vand.u32 %v655, 4294901760
    %v1662 = vsub.f32 %v655, %v1661
    %1663 = vmatpush1.msra.mxu0 %v1662
    %v1664 = vand.u32 %v660, 4294901760
    %v1665 = vsub.f32 %v660, %v1664
    %1666 = vmatprep.subr.mxu0 %v1665
    %v1667 = vand.u32 %v659, 4294901760
    %v1668 = vsub.f32 %v659, %v1667
    %1669 = vmatpush1.msra.mxu0 %v1668
    %v1670 = vand.u32 %v664, 4294901760
    %v1671 = vsub.f32 %v664, %v1670
    %1672 = vmatprep.subr.mxu0 %v1671
    %v1673 = vand.u32 %v663, 4294901760
    %v1674 = vsub.f32 %v663, %v1673
    %1675 = vmatpush1.msra.mxu0 %v1674
    %v1676 = vand.u32 %v668, 4294901760
    %v1677 = vsub.f32 %v668, %v1676
    %1678 = vmatprep.subr.mxu0 %v1677
    %v1679 = vand.u32 %v667, 4294901760
    %v1680 = vsub.f32 %v667, %v1679
    %1681 = vmatpush1.msra.mxu0 %v1680
    %v1682 = vand.u32 %v672, 4294901760
    %v1683 = vsub.f32 %v672, %v1682
    %1684 = vmatprep.subr.mxu0 %v1683
    %v1685 = vand.u32 %v671, 4294901760
    %v1686 = vsub.f32 %v671, %v1685
    %1687 = vmatpush1.msra.mxu0 %v1686
    %v1688 = vand.u32 %v676, 4294901760
    %v1689 = vsub.f32 %v676, %v1688
    %1690 = vmatprep.subr.mxu0 %v1689
    %v1691 = vand.u32 %v675, 4294901760
    %v1692 = vsub.f32 %v675, %v1691
    %1693 = vmatpush1.msra.mxu0 %v1692
    %v1694 = vand.u32 %v680, 4294901760
    %v1695 = vsub.f32 %v680, %v1694
    %1696 = vmatprep.subr.mxu0 %v1695
    %v1697 = vand.u32 %v679, 4294901760
    %v1698 = vsub.f32 %v679, %v1697
    %1699 = vmatpush1.msra.mxu0 %v1698
    %v1700 = vand.u32 %v684, 4294901760
    %v1701 = vsub.f32 %v684, %v1700
    %1702 = vmatprep.subr.mxu0 %v1701
    %v1703 = vand.u32 %v683, 4294901760
    %v1704 = vsub.f32 %v683, %v1703
    %1705 = vmatpush1.msra.mxu0 %v1704
    %v1706 = vand.u32 %v688, 4294901760
    %v1707 = vsub.f32 %v688, %v1706
    %1708 = vmatprep.subr.mxu0 %v1707
    %v1709 = vand.u32 %v687, 4294901760
    %v1710 = vsub.f32 %v687, %v1709
    %1711 = vmatpush1.msra.mxu0 %v1710
    %1712 = vmatprep.subr.mxu0 0.0
    %1713 = vmatpush1.msra.mxu0 0.0
    %1714 = vmatprep.subr.mxu0 0.0
    %1715 = vmatpush1.msra.mxu0 0.0
    %1716 = vmatprep.subr.mxu0 0.0
    %1717 = vmatpush1.msra.mxu0 0.0
    %1718 = vmatprep.subr.mxu0 0.0
    %1719 = vmatpush1.msra.mxu0 0.0
    %1720 = vmatprep.subr.mxu0 0.0
    %1721 = vmatpush1.msra.mxu0 0.0
    %1722 = vmatprep.subr.mxu0 0.0
    %1723 = vmatpush1.msra.mxu0 0.0
    %1724 = vmatprep.subr.mxu0 0.0
    %1725 = vmatpush1.msra.mxu0 0.0
    %1726 = vmatprep.subr.mxu0 0.0
    %1727 = vmatpush1.msra.mxu0 0.0
    %1728 = vmatprep.subr.mxu0 0.0
    %1729 = vmatpush1.msra.mxu0 0.0
    %1730 = vmatprep.subr.mxu0 0.0
    %1731 = vmatpush1.msra.mxu0 0.0
    %1732 = vmatprep.subr.mxu0 0.0
    %1733 = vmatpush1.msra.mxu0 0.0
    %1734 = vmatprep.subr.mxu0 0.0
    %1735 = vmatpush1.msra.mxu0 0.0
    %1736 = vmatprep.subr.mxu0 0.0
    %1737 = vmatpush1.msra.mxu0 0.0
    %1738 = vmatprep.subr.mxu0 0.0
    %1739 = vmatpush1.msra.mxu0 0.0
    %1740 = vmatprep.subr.mxu0 0.0
    %1741 = vmatpush1.msra.mxu0 0.0
    %1742 = vmatprep.subr.mxu0 0.0
    %1743 = vmatpush1.msra.mxu0 0.0
    %1744 = vmatprep.subr.mxu0 0.0
    %1745 = vmatpush1.msra.mxu0 0.0
    %1746 = vmatprep.subr.mxu0 0.0
    %1747 = vmatpush1.msra.mxu0 0.0
    %1748 = vmatprep.subr.mxu0 0.0
    %1749 = vmatpush1.msra.mxu0 0.0
    %1750 = vmatprep.subr.mxu0 0.0
    %1751 = vmatpush1.msra.mxu0 0.0
    %1752 = vmatprep.subr.mxu0 0.0
    %1753 = vmatpush1.msra.mxu0 0.0
    %1754 = vmatprep.subr.mxu0 0.0
    %1755 = vmatpush1.msra.mxu0 0.0
    %1756 = vmatprep.subr.mxu0 0.0
    %1757 = vmatpush1.msra.mxu0 0.0
    %1758 = vmatprep.mubr.f32.mxu0 0.0
    %v1759 = vand.u32 %v727, 4294901760
    %v1760 = vsub.f32 %v727, %v1759
    %1761 = vmatmul.mubr.f32.gmra.mrb[0].mxu0 %v1760
    %v1762 = vpop.f32.mrb[0].mxu0
    %v1763 = vadd.f32 %v1654, %v1762
    %v1764 = vpop.f32.mrb[0].mxu0
    %v1765 = vadd.f32 %v1656, %v1764
    %1766 = vdwg.mxu0
    %v1767 = vand.u32 %v656, 4294901760
    %1768 = vmatprep.subr.mxu0 %v1767
    %v1769 = vand.u32 %v655, 4294901760
    %1770 = vmatpush1.msra.mxu0 %v1769
    %v1771 = vand.u32 %v660, 4294901760
    %1772 = vmatprep.subr.mxu0 %v1771
    %v1773 = vand.u32 %v659, 4294901760
    %1774 = vmatpush1.msra.mxu0 %v1773
    %v1775 = vand.u32 %v664, 4294901760
    %1776 = vmatprep.subr.mxu0 %v1775
    %v1777 = vand.u32 %v663, 4294901760
    %1778 = vmatpush1.msra.mxu0 %v1777
    %v1779 = vand.u32 %v668, 4294901760
    %1780 = vmatprep.subr.mxu0 %v1779
    %v1781 = vand.u32 %v667, 4294901760
    %1782 = vmatpush1.msra.mxu0 %v1781
    %v1783 = vand.u32 %v672, 4294901760
    %1784 = vmatprep.subr.mxu0 %v1783
    %v1785 = vand.u32 %v671, 4294901760
    %1786 = vmatpush1.msra.mxu0 %v1785
    %v1787 = vand.u32 %v676, 4294901760
    %1788 = vmatprep.subr.mxu0 %v1787
    %v1789 = vand.u32 %v675, 4294901760
    %1790 = vmatpush1.msra.mxu0 %v1789
    %v1791 = vand.u32 %v680, 4294901760
    %1792 = vmatprep.subr.mxu0 %v1791
    %v1793 = vand.u32 %v679, 4294901760
    %1794 = vmatpush1.msra.mxu0 %v1793
    %v1795 = vand.u32 %v684, 4294901760
    %1796 = vmatprep.subr.mxu0 %v1795
    %v1797 = vand.u32 %v683, 4294901760
    %1798 = vmatpush1.msra.mxu0 %v1797
    %v1799 = vand.u32 %v688, 4294901760
    %1800 = vmatprep.subr.mxu0 %v1799
    %v1801 = vand.u32 %v687, 4294901760
    %1802 = vmatpush1.msra.mxu0 %v1801
    %1803 = vmatprep.subr.mxu0 0.0
    %1804 = vmatpush1.msra.mxu0 0.0
    %1805 = vmatprep.subr.mxu0 0.0
    %1806 = vmatpush1.msra.mxu0 0.0
    %1807 = vmatprep.subr.mxu0 0.0
    %1808 = vmatpush1.msra.mxu0 0.0
    %1809 = vmatprep.subr.mxu0 0.0
    %1810 = vmatpush1.msra.mxu0 0.0
    %1811 = vmatprep.subr.mxu0 0.0
    %1812 = vmatpush1.msra.mxu0 0.0
    %1813 = vmatprep.subr.mxu0 0.0
    %1814 = vmatpush1.msra.mxu0 0.0
    %1815 = vmatprep.subr.mxu0 0.0
    %1816 = vmatpush1.msra.mxu0 0.0
    %1817 = vmatprep.subr.mxu0 0.0
    %1818 = vmatpush1.msra.mxu0 0.0
    %1819 = vmatprep.subr.mxu0 0.0
    %1820 = vmatpush1.msra.mxu0 0.0
    %1821 = vmatprep.subr.mxu0 0.0
    %1822 = vmatpush1.msra.mxu0 0.0
    %1823 = vmatprep.subr.mxu0 0.0
    %1824 = vmatpush1.msra.mxu0 0.0
    %1825 = vmatprep.subr.mxu0 0.0
    %1826 = vmatpush1.msra.mxu0 0.0
    %1827 = vmatprep.subr.mxu0 0.0
    %1828 = vmatpush1.msra.mxu0 0.0
    %1829 = vmatprep.subr.mxu0 0.0
    %1830 = vmatpush1.msra.mxu0 0.0
    %1831 = vmatprep.subr.mxu0 0.0
    %1832 = vmatpush1.msra.mxu0 0.0
    %1833 = vmatprep.subr.mxu0 0.0
    %1834 = vmatpush1.msra.mxu0 0.0
    %1835 = vmatprep.subr.mxu0 0.0
    %1836 = vmatpush1.msra.mxu0 0.0
    %1837 = vmatprep.subr.mxu0 0.0
    %1838 = vmatpush1.msra.mxu0 0.0
    %1839 = vmatprep.subr.mxu0 0.0
    %1840 = vmatpush1.msra.mxu0 0.0
    %1841 = vmatprep.subr.mxu0 0.0
    %1842 = vmatpush1.msra.mxu0 0.0
    %1843 = vmatprep.subr.mxu0 0.0
    %1844 = vmatpush1.msra.mxu0 0.0
    %1845 = vmatprep.subr.mxu0 0.0
    %1846 = vmatpush1.msra.mxu0 0.0
    %1847 = vmatprep.subr.mxu0 0.0
    %1848 = vmatpush1.msra.mxu0 0.0
    %1849 = vmatprep.mubr.f32.mxu0 0.0
    %v1850 = vand.u32 %v727, 4294901760
    %v1851 = vsub.f32 %v727, %v1850
    %v1852 = vand.u32 %v1851, 4294901760
    %1853 = vmatmul.mubr.f32.gmra.mrb[0].mxu0 %v1852
    %v1854 = vpop.f32.mrb[0].mxu0
    %v1855 = vadd.f32 %v1763, %v1854
    %v1856 = vpop.f32.mrb[0].mxu0
    %v1857 = vadd.f32 %v1765, %v1856
    %1858 = vdwg.mxu0
    %v1859 = vand.u32 %v656, 4294901760
    %v1860 = vsub.f32 %v656, %v1859
    %v1861 = vand.u32 %v1860, 4294901760
    %1862 = vmatprep.subr.mxu0 %v1861
    %v1863 = vand.u32 %v655, 4294901760
    %v1864 = vsub.f32 %v655, %v1863
    %v1865 = vand.u32 %v1864, 4294901760
    %1866 = vmatpush1.msra.mxu0 %v1865
    %v1867 = vand.u32 %v660, 4294901760
    %v1868 = vsub.f32 %v660, %v1867
    %v1869 = vand.u32 %v1868, 4294901760
    %1870 = vmatprep.subr.mxu0 %v1869
    %v1871 = vand.u32 %v659, 4294901760
    %v1872 = vsub.f32 %v659, %v1871
    %v1873 = vand.u32 %v1872, 4294901760
    %1874 = vmatpush1.msra.mxu0 %v1873
    %v1875 = vand.u32 %v664, 4294901760
    %v1876 = vsub.f32 %v664, %v1875
    %v1877 = vand.u32 %v1876, 4294901760
    %1878 = vmatprep.subr.mxu0 %v1877
    %v1879 = vand.u32 %v663, 4294901760
    %v1880 = vsub.f32 %v663, %v1879
    %v1881 = vand.u32 %v1880, 4294901760
    %1882 = vmatpush1.msra.mxu0 %v1881
    %v1883 = vand.u32 %v668, 4294901760
    %v1884 = vsub.f32 %v668, %v1883
    %v1885 = vand.u32 %v1884, 4294901760
    %1886 = vmatprep.subr.mxu0 %v1885
    %v1887 = vand.u32 %v667, 4294901760
    %v1888 = vsub.f32 %v667, %v1887
    %v1889 = vand.u32 %v1888, 4294901760
    %1890 = vmatpush1.msra.mxu0 %v1889
    %v1891 = vand.u32 %v672, 4294901760
    %v1892 = vsub.f32 %v672, %v1891
    %v1893 = vand.u32 %v1892, 4294901760
    %1894 = vmatprep.subr.mxu0 %v1893
    %v1895 = vand.u32 %v671, 4294901760
    %v1896 = vsub.f32 %v671, %v1895
    %v1897 = vand.u32 %v1896, 4294901760
    %1898 = vmatpush1.msra.mxu0 %v1897
    %v1899 = vand.u32 %v676, 4294901760
    %v1900 = vsub.f32 %v676, %v1899
    %v1901 = vand.u32 %v1900, 4294901760
    %1902 = vmatprep.subr.mxu0 %v1901
    %v1903 = vand.u32 %v675, 4294901760
    %v1904 = vsub.f32 %v675, %v1903
    %v1905 = vand.u32 %v1904, 4294901760
    %1906 = vmatpush1.msra.mxu0 %v1905
    %v1907 = vand.u32 %v680, 4294901760
    %v1908 = vsub.f32 %v680, %v1907
    %v1909 = vand.u32 %v1908, 4294901760
    %1910 = vmatprep.subr.mxu0 %v1909
    %v1911 = vand.u32 %v679, 4294901760
    %v1912 = vsub.f32 %v679, %v1911
    %v1913 = vand.u32 %v1912, 4294901760
    %1914 = vmatpush1.msra.mxu0 %v1913
    %v1915 = vand.u32 %v684, 4294901760
    %v1916 = vsub.f32 %v684, %v1915
    %v1917 = vand.u32 %v1916, 4294901760
    %1918 = vmatprep.subr.mxu0 %v1917
    %v1919 = vand.u32 %v683, 4294901760
    %v1920 = vsub.f32 %v683, %v1919
    %v1921 = vand.u32 %v1920, 4294901760
    %1922 = vmatpush1.msra.mxu0 %v1921
    %v1923 = vand.u32 %v688, 4294901760
    %v1924 = vsub.f32 %v688, %v1923
    %v1925 = vand.u32 %v1924, 4294901760
    %1926 = vmatprep.subr.mxu0 %v1925
    %v1927 = vand.u32 %v687, 4294901760
    %v1928 = vsub.f32 %v687, %v1927
    %v1929 = vand.u32 %v1928, 4294901760
    %1930 = vmatpush1.msra.mxu0 %v1929
    %1931 = vmatprep.subr.mxu0 0.0
    %1932 = vmatpush1.msra.mxu0 0.0
    %1933 = vmatprep.subr.mxu0 0.0
    %1934 = vmatpush1.msra.mxu0 0.0
    %1935 = vmatprep.subr.mxu0 0.0
    %1936 = vmatpush1.msra.mxu0 0.0
    %1937 = vmatprep.subr.mxu0 0.0
    %1938 = vmatpush1.msra.mxu0 0.0
    %1939 = vmatprep.subr.mxu0 0.0
    %1940 = vmatpush1.msra.mxu0 0.0
    %1941 = vmatprep.subr.mxu0 0.0
    %1942 = vmatpush1.msra.mxu0 0.0
    %1943 = vmatprep.subr.mxu0 0.0
    %1944 = vmatpush1.msra.mxu0 0.0
    %1945 = vmatprep.subr.mxu0 0.0
    %1946 = vmatpush1.msra.mxu0 0.0
    %1947 = vmatprep.subr.mxu0 0.0
    %1948 = vmatpush1.msra.mxu0 0.0
    %1949 = vmatprep.subr.mxu0 0.0
    %1950 = vmatpush1.msra.mxu0 0.0
    %1951 = vmatprep.subr.mxu0 0.0
    %1952 = vmatpush1.msra.mxu0 0.0
    %1953 = vmatprep.subr.mxu0 0.0
    %1954 = vmatpush1.msra.mxu0 0.0
    %1955 = vmatprep.subr.mxu0 0.0
    %1956 = vmatpush1.msra.mxu0 0.0
    %1957 = vmatprep.subr.mxu0 0.0
    %1958 = vmatpush1.msra.mxu0 0.0
    %1959 = vmatprep.subr.mxu0 0.0
    %1960 = vmatpush1.msra.mxu0 0.0
    %1961 = vmatprep.subr.mxu0 0.0
    %1962 = vmatpush1.msra.mxu0 0.0
    %1963 = vmatprep.subr.mxu0 0.0
    %1964 = vmatpush1.msra.mxu0 0.0
    %1965 = vmatprep.subr.mxu0 0.0
    %1966 = vmatpush1.msra.mxu0 0.0
    %1967 = vmatprep.subr.mxu0 0.0
    %1968 = vmatpush1.msra.mxu0 0.0
    %1969 = vmatprep.subr.mxu0 0.0
    %1970 = vmatpush1.msra.mxu0 0.0
    %1971 = vmatprep.subr.mxu0 0.0
    %1972 = vmatpush1.msra.mxu0 0.0
    %1973 = vmatprep.subr.mxu0 0.0
    %1974 = vmatpush1.msra.mxu0 0.0
    %1975 = vmatprep.subr.mxu0 0.0
    %1976 = vmatpush1.msra.mxu0 0.0
    %1977 = vmatprep.mubr.f32.mxu0 0.0
    %v1978 = vand.u32 %v727, 4294901760
    %1979 = vmatmul.mubr.f32.gmra.mrb[0].mxu0 %v1978
    %v1980 = vpop.f32.mrb[0].mxu0
    %v1981 = vadd.f32 %v1855, %v1980
    %v1982 = vpop.f32.mrb[0].mxu0
    %v1983 = vadd.f32 %v1857, %v1982
    %1984 = vdwg.mxu0
    %v1985 = vand.u32 %v656, 4294901760
    %1986 = vmatprep.subr.mxu0 %v1985
    %v1987 = vand.u32 %v655, 4294901760
    %1988 = vmatpush1.msra.mxu0 %v1987
    %v1989 = vand.u32 %v660, 4294901760
    %1990 = vmatprep.subr.mxu0 %v1989
    %v1991 = vand.u32 %v659, 4294901760
    %1992 = vmatpush1.msra.mxu0 %v1991
    %v1993 = vand.u32 %v664, 4294901760
    %1994 = vmatprep.subr.mxu0 %v1993
    %v1995 = vand.u32 %v663, 4294901760
    %1996 = vmatpush1.msra.mxu0 %v1995
    %v1997 = vand.u32 %v668, 4294901760
    %1998 = vmatprep.subr.mxu0 %v1997
    %v1999 = vand.u32 %v667, 4294901760
    %2000 = vmatpush1.msra.mxu0 %v1999
    %v2001 = vand.u32 %v672, 4294901760
    %2002 = vmatprep.subr.mxu0 %v2001
    %v2003 = vand.u32 %v671, 4294901760
    %2004 = vmatpush1.msra.mxu0 %v2003
    %v2005 = vand.u32 %v676, 4294901760
    %2006 = vmatprep.subr.mxu0 %v2005
    %v2007 = vand.u32 %v675, 4294901760
    %2008 = vmatpush1.msra.mxu0 %v2007
    %v2009 = vand.u32 %v680, 4294901760
    %2010 = vmatprep.subr.mxu0 %v2009
    %v2011 = vand.u32 %v679, 4294901760
    %2012 = vmatpush1.msra.mxu0 %v2011
    %v2013 = vand.u32 %v684, 4294901760
    %2014 = vmatprep.subr.mxu0 %v2013
    %v2015 = vand.u32 %v683, 4294901760
    %2016 = vmatpush1.msra.mxu0 %v2015
    %v2017 = vand.u32 %v688, 4294901760
    %2018 = vmatprep.subr.mxu0 %v2017
    %v2019 = vand.u32 %v687, 4294901760
    %2020 = vmatpush1.msra.mxu0 %v2019
    %2021 = vmatprep.subr.mxu0 0.0
    %2022 = vmatpush1.msra.mxu0 0.0
    %2023 = vmatprep.subr.mxu0 0.0
    %2024 = vmatpush1.msra.mxu0 0.0
    %2025 = vmatprep.subr.mxu0 0.0
    %2026 = vmatpush1.msra.mxu0 0.0
    %2027 = vmatprep.subr.mxu0 0.0
    %2028 = vmatpush1.msra.mxu0 0.0
    %2029 = vmatprep.subr.mxu0 0.0
    %2030 = vmatpush1.msra.mxu0 0.0
    %2031 = vmatprep.subr.mxu0 0.0
    %2032 = vmatpush1.msra.mxu0 0.0
    %2033 = vmatprep.subr.mxu0 0.0
    %2034 = vmatpush1.msra.mxu0 0.0
    %2035 = vmatprep.subr.mxu0 0.0
    %2036 = vmatpush1.msra.mxu0 0.0
    %2037 = vmatprep.subr.mxu0 0.0
    %2038 = vmatpush1.msra.mxu0 0.0
    %2039 = vmatprep.subr.mxu0 0.0
    %2040 = vmatpush1.msra.mxu0 0.0
    %2041 = vmatprep.subr.mxu0 0.0
    %2042 = vmatpush1.msra.mxu0 0.0
    %2043 = vmatprep.subr.mxu0 0.0
    %2044 = vmatpush1.msra.mxu0 0.0
    %2045 = vmatprep.subr.mxu0 0.0
    %2046 = vmatpush1.msra.mxu0 0.0
    %2047 = vmatprep.subr.mxu0 0.0
    %2048 = vmatpush1.msra.mxu0 0.0
    %2049 = vmatprep.subr.mxu0 0.0
    %2050 = vmatpush1.msra.mxu0 0.0
    %2051 = vmatprep.subr.mxu0 0.0
    %2052 = vmatpush1.msra.mxu0 0.0
    %2053 = vmatprep.subr.mxu0 0.0
    %2054 = vmatpush1.msra.mxu0 0.0
    %2055 = vmatprep.subr.mxu0 0.0
    %2056 = vmatpush1.msra.mxu0 0.0
    %2057 = vmatprep.subr.mxu0 0.0
    %2058 = vmatpush1.msra.mxu0 0.0
    %2059 = vmatprep.subr.mxu0 0.0
    %2060 = vmatpush1.msra.mxu0 0.0
    %2061 = vmatprep.subr.mxu0 0.0
    %2062 = vmatpush1.msra.mxu0 0.0
    %2063 = vmatprep.subr.mxu0 0.0
    %2064 = vmatpush1.msra.mxu0 0.0
    %2065 = vmatprep.subr.mxu0 0.0
    %2066 = vmatpush1.msra.mxu0 0.0
    %2067 = vmatprep.mubr.f32.mxu0 0.0
    %v2068 = vand.u32 %v727, 4294901760
    %2069 = vmatmul.mubr.f32.gmra.mrb[0].mxu0 %v2068
    %v2070 = vpop.f32.mrb[0].mxu0
    %v2071 = vadd.f32 %v1981, %v2070
    %v2072 = vpop.f32.mrb[0].mxu0
    %v2073 = vadd.f32 %v1983, %v2072
    %2074 = vdwg.mxu0
    %v2075 = vadd.f32 %v1398, %v1400
    %v2076 = vadd.f32 %v2075, %v2071
    %v2077 = vadd.f32 %v2076, %v2073
    %2078 = vadd.xlane.f32.xlu0 %v2077
    %v2079 = vpop.xlane.xlu0 %2078
    %v2080 = vmul.f32 %v2079, 0.001953125
    %v2081 = vsub.f32 %v1398, %v2080
    %v2082 = vsub.f32 %v1400, %v2080
    %v2083 = vsub.f32 %v2071, %v2080
    %v2084 = vsub.f32 %v2073, %v2080
    %v2085 = vmul.f32 %v2081, %v2081
    %v2086 = vmul.f32 %v2082, %v2082
    %v2087 = vmul.f32 %v2083, %v2083
    %v2088 = vmul.f32 %v2084, %v2084
    %v2089 = vadd.f32 %v2085, %v2086
    %v2090 = vadd.f32 %v2089, %v2087
    %v2091 = vadd.f32 %v2090, %v2088
    %2092 = vadd.xlane.f32.xlu0 %v2091
    %v2093 = vpop.xlane.xlu0 %2092
    %v2094 = vmul.f32 %v2093, 0.001953125
    %v2095 = vadd.f32 %v2094, 1e-05
    %v2096 = vrsqrt.pop %v2095
    %v2097 = vmul.f32 %v2081, %v2096
    %v2098 = vmul.f32 %v2082, %v2096
    %v2099 = vmul.f32 %v2083, %v2096
    %v2100 = vmul.f32 %v2084, %v2096
    %2102 = vset.pattern.permute.xlu0 0
    %2103 = vperm.xlu0 %2102, %v107
    %v2104 = vpop.permute.xlu0 %2103
    %v2106 = vmul.f32 %v2097, %v2104
    %v2107 = vmul.f32 %v2098, %v2104
    %v2108 = vmul.f32 %v2099, %v2104
    %v2109 = vmul.f32 %v2100, %v2104
    %2111 = vset.pattern.permute.xlu0 0
    %2112 = vperm.xlu0 %2111, %v108
    %v2113 = vpop.permute.xlu0 %2112
    %v2115 = vadd.f32 %v2106, %v2113
    %v2116 = vadd.f32 %v2107, %v2113
    %v2117 = vadd.f32 %v2108, %v2113
    %v2118 = vadd.f32 %v2109, %v2113
    %v2119 = vmax.f32 %v2115, 0.0
    %v2120 = vmax.f32 %v2116, 0.0
    %v2121 = vmax.f32 %v2117, 0.0
    %v2122 = vmax.f32 %v2118, 0.0
    %2123 = vst [vmem:[#allocation3] sm:$0xff] 0.0
    %2124 = vst [vmem:[#allocation3 + $0x28] sm:$0xff] 0.0
    %2125 = vst [vmem:[#allocation3 + $0x8] sm:$0xff] %v2119
    %2126 = vst [vmem:[#allocation3 + $0x10] sm:$0xff] %v2120
    %2127 = vst [vmem:[#allocation3 + $0x18] sm:$0xff] %v2121
    %2128 = vst [vmem:[#allocation3 + $0x20] sm:$0xff] %v2122
    %v2129 = vld [vmem:[%s6] sm:$0xff]
    %v2130 = vld [vmem:[%s7] sm:$0xff]
    %v2131 = vld [vmem:[%s8] sm:$0xff]
    %v2132 = vld [vmem:[#allocation3] sm:$0xff]
    %v2133 = vld [vmem:[#allocation3 + $0x8] sm:$0xff]
    %v2134 = vld [vmem:[#allocation3 + $0x10] sm:$0xff]
    %v2135 = vld [vmem:[#allocation3 + $0x18] sm:$0xff]
    %v2136 = vld [vmem:[#allocation3 + $0x20] sm:$0xff]
    %v2137 = vld [vmem:[#allocation3 + $0x8] sm:$0xff]
    %v2138 = vld [vmem:[#allocation3 + $0x10] sm:$0xff]
    %v2139 = vld [vmem:[#allocation3 + $0x18] sm:$0xff]
    %v2140 = vld [vmem:[#allocation3 + $0x20] sm:$0xff]
    %v2141 = vld [vmem:[#allocation3 + $0x28] sm:$0xff]
    %2147 = vrot.lane.b32.xlu0 %v2132, 127
    %v2148 = vpop.permute.xlu0 %2147
    %2149 = vrot.lane.b32.xlu0 %v2133, 127
    %v2150 = vpop.permute.xlu0 %2149
    %2151 = vrot.lane.b32.xlu0 %v2134, 127
    %v2152 = vpop.permute.xlu0 %2151
    %2153 = vrot.lane.b32.xlu0 %v2135, 127
    %v2154 = vpop.permute.xlu0 %2153
    %2155 = vrot.lane.b32.xlu0 %v2136, 127
    %v2156 = vpop.permute.xlu0 %2155
    %v2157 = vsel %vm134, %v2148, %v2150
    %v2158 = vsel %vm134, %v2150, %v2152
    %v2159 = vsel %vm134, %v2152, %v2154
    %v2160 = vsel %vm134, %v2154, %v2156
    %2166 = vrot.lane.b32.xlu0 %v2132, 126
    %v2167 = vpop.permute.xlu0 %2166
    %2168 = vrot.lane.b32.xlu0 %v2133, 126
    %v2169 = vpop.permute.xlu0 %2168
    %2170 = vrot.lane.b32.xlu0 %v2134, 126
    %v2171 = vpop.permute.xlu0 %2170
    %2172 = vrot.lane.b32.xlu0 %v2135, 126
    %v2173 = vpop.permute.xlu0 %2172
    %2174 = vrot.lane.b32.xlu0 %v2136, 126
    %v2175 = vpop.permute.xlu0 %2174
    %v2176 = vsel %vm154, %v2167, %v2169
    %v2177 = vsel %vm154, %v2169, %v2171
    %v2178 = vsel %vm154, %v2171, %v2173
    %v2179 = vsel %vm154, %v2173, %v2175
    %2185 = vrot.lane.b32.xlu0 %v2132, 112
    %v2186 = vpop.permute.xlu0 %2185
    %2187 = vrot.lane.b32.xlu0 %v2133, 112
    %v2188 = vpop.permute.xlu0 %2187
    %2189 = vrot.lane.b32.xlu0 %v2134, 112
    %v2190 = vpop.permute.xlu0 %2189
    %2191 = vrot.lane.b32.xlu0 %v2135, 112
    %v2192 = vpop.permute.xlu0 %2191
    %2193 = vrot.lane.b32.xlu0 %v2136, 112
    %v2194 = vpop.permute.xlu0 %2193
    %v2195 = vsel %vm174, %v2186, %v2188
    %v2196 = vsel %vm174, %v2188, %v2190
    %v2197 = vsel %vm174, %v2190, %v2192
    %v2198 = vsel %vm174, %v2192, %v2194
    %2204 = vrot.lane.b32.xlu0 %v2133, 111
    %v2205 = vpop.permute.xlu0 %2204
    %2206 = vrot.lane.b32.xlu0 %v2134, 111
    %v2207 = vpop.permute.xlu0 %2206
    %2208 = vrot.lane.b32.xlu0 %v2135, 111
    %v2209 = vpop.permute.xlu0 %2208
    %2210 = vrot.lane.b32.xlu0 %v2136, 111
    %v2211 = vpop.permute.xlu0 %2210
    %v2212 = vsel %vm192, %v2205, %v2207
    %v2213 = vsel %vm192, %v2207, %v2209
    %v2214 = vsel %vm192, %v2209, %v2211
    %2225 = vrot.lane.b32.xlu0 %v2137, 110
    %v2226 = vpop.permute.xlu0 %2225
    %2227 = vrot.lane.b32.xlu0 %v2138, 110
    %v2228 = vpop.permute.xlu0 %2227
    %2229 = vrot.lane.b32.xlu0 %v2139, 110
    %v2230 = vpop.permute.xlu0 %2229
    %2231 = vrot.lane.b32.xlu0 %v2140, 110
    %v2232 = vpop.permute.xlu0 %2231
    %2233 = vrot.lane.b32.xlu0 %v2141, 110
    %v2234 = vpop.permute.xlu0 %2233
    %v2235 = vsel %vm216, %v2226, %v2228
    %v2236 = vsel %vm216, %v2228, %v2230
    %v2237 = vsel %vm216, %v2230, %v2232
    %v2238 = vsel %vm216, %v2232, %v2234
    %2244 = vrot.lane.b32.xlu0 %v2137, 96
    %v2245 = vpop.permute.xlu0 %2244
    %2246 = vrot.lane.b32.xlu0 %v2138, 96
    %v2247 = vpop.permute.xlu0 %2246
    %2248 = vrot.lane.b32.xlu0 %v2139, 96
    %v2249 = vpop.permute.xlu0 %2248
    %2250 = vrot.lane.b32.xlu0 %v2140, 96
    %v2251 = vpop.permute.xlu0 %2250
    %2252 = vrot.lane.b32.xlu0 %v2141, 96
    %v2253 = vpop.permute.xlu0 %2252
    %v2254 = vsel %vm236, %v2245, %v2247
    %v2255 = vsel %vm236, %v2247, %v2249
    %v2256 = vsel %vm236, %v2249, %v2251
    %v2257 = vsel %vm236, %v2251, %v2253
    %2263 = vrot.lane.b32.xlu0 %v2137, 95
    %v2264 = vpop.permute.xlu0 %2263
    %2265 = vrot.lane.b32.xlu0 %v2138, 95
    %v2266 = vpop.permute.xlu0 %2265
    %2267 = vrot.lane.b32.xlu0 %v2139, 95
    %v2268 = vpop.permute.xlu0 %2267
    %2269 = vrot.lane.b32.xlu0 %v2140, 95
    %v2270 = vpop.permute.xlu0 %2269
    %2271 = vrot.lane.b32.xlu0 %v2141, 95
    %v2272 = vpop.permute.xlu0 %2271
    %v2273 = vsel %vm256, %v2264, %v2266
    %v2274 = vsel %vm256, %v2266, %v2268
    %v2275 = vsel %vm256, %v2268, %v2270
    %v2276 = vsel %vm256, %v2270, %v2272
    %2282 = vrot.lane.b32.xlu0 %v2137, 94
    %v2283 = vpop.permute.xlu0 %2282
    %2284 = vrot.lane.b32.xlu0 %v2138, 94
    %v2285 = vpop.permute.xlu0 %2284
    %2286 = vrot.lane.b32.xlu0 %v2139, 94
    %v2287 = vpop.permute.xlu0 %2286
    %2288 = vrot.lane.b32.xlu0 %v2140, 94
    %v2289 = vpop.permute.xlu0 %2288
    %2290 = vrot.lane.b32.xlu0 %v2141, 94
    %v2291 = vpop.permute.xlu0 %2290
    %v2292 = vsel %vm276, %v2283, %v2285
    %v2293 = vsel %vm276, %v2285, %v2287
    %v2294 = vsel %vm276, %v2287, %v2289
    %v2295 = vsel %vm276, %v2289, %v2291
    %v2301 = vmul.f32 %v2132, %v323
    %v2302 = vmul.f32 %v2133, %v394
    %v2303 = vmul.f32 %v2134, %v395
    %v2304 = vmul.f32 %v2135, %v396
    %v2305 = vmul.f32 %v2136, %v329
    %v2306 = vmul.f32 %v2157, %v331
    %v2307 = vmul.f32 %v2158, %v397
    %v2308 = vmul.f32 %v2159, %v398
    %v2309 = vmul.f32 %v2160, %v399
    %v2310 = vmul.f32 %v2156, %v337
    %v2311 = vmul.f32 %v2176, %v339
    %v2312 = vmul.f32 %v2177, %v400
    %v2313 = vmul.f32 %v2178, %v401
    %v2314 = vmul.f32 %v2179, %v402
    %v2315 = vmul.f32 %v2175, %v345
    %v2316 = vmul.f32 %v2195, %v347
    %v2317 = vmul.f32 %v2196, %v403
    %v2318 = vmul.f32 %v2197, %v404
    %v2319 = vmul.f32 %v2198, %v405
    %v2320 = vmul.f32 %v2194, %v353
    %v2321 = vmul.f32 %v2205, %v355
    %v2322 = vmul.f32 %v2212, %v406
    %v2323 = vmul.f32 %v2213, %v407
    %v2324 = vmul.f32 %v2214, %v408
    %v2325 = vmul.f32 %v2211, %v361
    %v2326 = vmul.f32 %v2226, %v363
    %v2327 = vmul.f32 %v2235, %v409
    %v2328 = vmul.f32 %v2236, %v410
    %v2329 = vmul.f32 %v2237, %v411
    %v2330 = vmul.f32 %v2238, %v369
    %v2331 = vmul.f32 %v2245, %v371
    %v2332 = vmul.f32 %v2254, %v412
    %v2333 = vmul.f32 %v2255, %v413
    %v2334 = vmul.f32 %v2256, %v414
    %v2335 = vmul.f32 %v2257, %v377
    %v2336 = vmul.f32 %v2264, %v379
    %v2337 = vmul.f32 %v2273, %v415
    %v2338 = vmul.f32 %v2274, %v416
    %v2339 = vmul.f32 %v2275, %v417
    %v2340 = vmul.f32 %v2276, %v385
    %v2341 = vmul.f32 %v2283, %v387
    %v2342 = vmul.f32 %v2292, %v418
    %v2343 = vmul.f32 %v2293, %v419
    %v2344 = vmul.f32 %v2294, %v420
    %v2345 = vmul.f32 %v2295, %v393
    %v2346 = vld [vmem:[%s5] sm:$0xff]
    %2348 = vset.pattern.permute.xlu0 0
    %2349 = vperm.xlu0 %2348, %v2129
    %v2350 = vpop.permute.xlu0 %2349
    %2397 = vrot.lane.b32.xlu0 %v2301, 17
    %v2398 = vpop.permute.xlu0 %2397
    %2399 = vrot.lane.b32.xlu0 %v2302, 17
    %v2400 = vpop.permute.xlu0 %2399
    %2401 = vrot.lane.b32.xlu0 %v2303, 17
    %v2402 = vpop.permute.xlu0 %2401
    %2403 = vrot.lane.b32.xlu0 %v2304, 17
    %v2404 = vpop.permute.xlu0 %2403
    %2405 = vrot.lane.b32.xlu0 %v2305, 17
    %v2406 = vpop.permute.xlu0 %2405
    %2407 = vrot.lane.b32.xlu0 %v2306, 17
    %v2408 = vpop.permute.xlu0 %2407
    %2409 = vrot.lane.b32.xlu0 %v2307, 17
    %v2410 = vpop.permute.xlu0 %2409
    %2411 = vrot.lane.b32.xlu0 %v2308, 17
    %v2412 = vpop.permute.xlu0 %2411
    %2413 = vrot.lane.b32.xlu0 %v2309, 17
    %v2414 = vpop.permute.xlu0 %2413
    %2415 = vrot.lane.b32.xlu0 %v2310, 17
    %v2416 = vpop.permute.xlu0 %2415
    %2417 = vrot.lane.b32.xlu0 %v2311, 17
    %v2418 = vpop.permute.xlu0 %2417
    %2419 = vrot.lane.b32.xlu0 %v2312, 17
    %v2420 = vpop.permute.xlu0 %2419
    %2421 = vrot.lane.b32.xlu0 %v2313, 17
    %v2422 = vpop.permute.xlu0 %2421
    %2423 = vrot.lane.b32.xlu0 %v2314, 17
    %v2424 = vpop.permute.xlu0 %2423
    %2425 = vrot.lane.b32.xlu0 %v2315, 17
    %v2426 = vpop.permute.xlu0 %2425
    %2427 = vrot.lane.b32.xlu0 %v2316, 17
    %v2428 = vpop.permute.xlu0 %2427
    %2429 = vrot.lane.b32.xlu0 %v2317, 17
    %v2430 = vpop.permute.xlu0 %2429
    %2431 = vrot.lane.b32.xlu0 %v2318, 17
    %v2432 = vpop.permute.xlu0 %2431
    %2433 = vrot.lane.b32.xlu0 %v2319, 17
    %v2434 = vpop.permute.xlu0 %2433
    %2435 = vrot.lane.b32.xlu0 %v2320, 17
    %v2436 = vpop.permute.xlu0 %2435
    %2437 = vrot.lane.b32.xlu0 %v2321, 17
    %v2438 = vpop.permute.xlu0 %2437
    %2439 = vrot.lane.b32.xlu0 %v2322, 17
    %v2440 = vpop.permute.xlu0 %2439
    %2441 = vrot.lane.b32.xlu0 %v2323, 17
    %v2442 = vpop.permute.xlu0 %2441
    %2443 = vrot.lane.b32.xlu0 %v2324, 17
    %v2444 = vpop.permute.xlu0 %2443
    %2445 = vrot.lane.b32.xlu0 %v2325, 17
    %v2446 = vpop.permute.xlu0 %2445
    %2447 = vrot.lane.b32.xlu0 %v2326, 17
    %v2448 = vpop.permute.xlu0 %2447
    %2449 = vrot.lane.b32.xlu0 %v2327, 17
    %v2450 = vpop.permute.xlu0 %2449
    %2451 = vrot.lane.b32.xlu0 %v2328, 17
    %v2452 = vpop.permute.xlu0 %2451
    %2453 = vrot.lane.b32.xlu0 %v2329, 17
    %v2454 = vpop.permute.xlu0 %2453
    %2455 = vrot.lane.b32.xlu0 %v2330, 17
    %v2456 = vpop.permute.xlu0 %2455
    %2457 = vrot.lane.b32.xlu0 %v2331, 17
    %v2458 = vpop.permute.xlu0 %2457
    %2459 = vrot.lane.b32.xlu0 %v2332, 17
    %v2460 = vpop.permute.xlu0 %2459
    %2461 = vrot.lane.b32.xlu0 %v2333, 17
    %v2462 = vpop.permute.xlu0 %2461
    %2463 = vrot.lane.b32.xlu0 %v2334, 17
    %v2464 = vpop.permute.xlu0 %2463
    %2465 = vrot.lane.b32.xlu0 %v2335, 17
    %v2466 = vpop.permute.xlu0 %2465
    %2467 = vrot.lane.b32.xlu0 %v2336, 17
    %v2468 = vpop.permute.xlu0 %2467
    %2469 = vrot.lane.b32.xlu0 %v2337, 17
    %v2470 = vpop.permute.xlu0 %2469
    %2471 = vrot.lane.b32.xlu0 %v2338, 17
    %v2472 = vpop.permute.xlu0 %2471
    %2473 = vrot.lane.b32.xlu0 %v2339, 17
    %v2474 = vpop.permute.xlu0 %2473
    %2475 = vrot.lane.b32.xlu0 %v2340, 17
    %v2476 = vpop.permute.xlu0 %2475
    %2477 = vrot.lane.b32.xlu0 %v2341, 17
    %v2478 = vpop.permute.xlu0 %2477
    %2479 = vrot.lane.b32.xlu0 %v2342, 17
    %v2480 = vpop.permute.xlu0 %2479
    %2481 = vrot.lane.b32.xlu0 %v2343, 17
    %v2482 = vpop.permute.xlu0 %2481
    %2483 = vrot.lane.b32.xlu0 %v2344, 17
    %v2484 = vpop.permute.xlu0 %2483
    %2485 = vrot.lane.b32.xlu0 %v2345, 17
    %v2486 = vpop.permute.xlu0 %2485
    %v2487 = vsel %vm652, %v2398, %v2400
    %v2488 = vsel %vm652, %v2400, %v2402
    %v2489 = vsel %vm652, %v2402, %v2404
    %v2490 = vsel %vm652, %v2404, %v2406
    %v2491 = vsel %vm652, %v2408, %v2410
    %v2492 = vsel %vm652, %v2410, %v2412
    %v2493 = vsel %vm652, %v2412, %v2414
    %v2494 = vsel %vm652, %v2414, %v2416
    %v2495 = vsel %vm652, %v2418, %v2420
    %v2496 = vsel %vm652, %v2420, %v2422
    %v2497 = vsel %vm652, %v2422, %v2424
    %v2498 = vsel %vm652, %v2424, %v2426
    %v2499 = vsel %vm652, %v2428, %v2430
    %v2500 = vsel %vm652, %v2430, %v2432
    %v2501 = vsel %vm652, %v2432, %v2434
    %v2502 = vsel %vm652, %v2434, %v2436
    %v2503 = vsel %vm652, %v2438, %v2440
    %v2504 = vsel %vm652, %v2440, %v2442
    %v2505 = vsel %vm652, %v2442, %v2444
    %v2506 = vsel %vm652, %v2444, %v2446
    %v2507 = vsel %vm652, %v2448, %v2450
    %v2508 = vsel %vm652, %v2450, %v2452
    %v2509 = vsel %vm652, %v2452, %v2454
    %v2510 = vsel %vm652, %v2454, %v2456
    %v2511 = vsel %vm652, %v2458, %v2460
    %v2512 = vsel %vm652, %v2460, %v2462
    %v2513 = vsel %vm652, %v2462, %v2464
    %v2514 = vsel %vm652, %v2464, %v2466
    %v2515 = vsel %vm652, %v2468, %v2470
    %v2516 = vsel %vm652, %v2470, %v2472
    %v2517 = vsel %vm652, %v2472, %v2474
    %v2518 = vsel %vm652, %v2474, %v2476
    %v2519 = vsel %vm652, %v2478, %v2480
    %v2520 = vsel %vm652, %v2480, %v2482
    %v2521 = vsel %vm652, %v2482, %v2484
    %v2522 = vsel %vm652, %v2484, %v2486
    %v2560 = vsel %vm725, %v2346, 0
    %v2562 = vand.u32 %v2488, 4294901760
    %2563 = vmatprep.subr.mxu0 %v2562
    %v2564 = vand.u32 %v2487, 4294901760
    %2565 = vmatpush1.msra.mxu0 %v2564
    %v2566 = vand.u32 %v2492, 4294901760
    %2567 = vmatprep.subr.mxu0 %v2566
    %v2568 = vand.u32 %v2491, 4294901760
    %2569 = vmatpush1.msra.mxu0 %v2568
    %v2570 = vand.u32 %v2496, 4294901760
    %2571 = vmatprep.subr.mxu0 %v2570
    %v2572 = vand.u32 %v2495, 4294901760
    %2573 = vmatpush1.msra.mxu0 %v2572
    %v2574 = vand.u32 %v2500, 4294901760
    %2575 = vmatprep.subr.mxu0 %v2574
    %v2576 = vand.u32 %v2499, 4294901760
    %2577 = vmatpush1.msra.mxu0 %v2576
    %v2578 = vand.u32 %v2504, 4294901760
    %2579 = vmatprep.subr.mxu0 %v2578
    %v2580 = vand.u32 %v2503, 4294901760
    %2581 = vmatpush1.msra.mxu0 %v2580
    %v2582 = vand.u32 %v2508, 4294901760
    %2583 = vmatprep.subr.mxu0 %v2582
    %v2584 = vand.u32 %v2507, 4294901760
    %2585 = vmatpush1.msra.mxu0 %v2584
    %v2586 = vand.u32 %v2512, 4294901760
    %2587 = vmatprep.subr.mxu0 %v2586
    %v2588 = vand.u32 %v2511, 4294901760
    %2589 = vmatpush1.msra.mxu0 %v2588
    %v2590 = vand.u32 %v2516, 4294901760
    %2591 = vmatprep.subr.mxu0 %v2590
    %v2592 = vand.u32 %v2515, 4294901760
    %2593 = vmatpush1.msra.mxu0 %v2592
    %v2594 = vand.u32 %v2520, 4294901760
    %2595 = vmatprep.subr.mxu0 %v2594
    %v2596 = vand.u32 %v2519, 4294901760
    %2597 = vmatpush1.msra.mxu0 %v2596
    %2598 = vmatprep.subr.mxu0 0.0
    %2599 = vmatpush1.msra.mxu0 0.0
    %2600 = vmatprep.subr.mxu0 0.0
    %2601 = vmatpush1.msra.mxu0 0.0
    %2602 = vmatprep.subr.mxu0 0.0
    %2603 = vmatpush1.msra.mxu0 0.0
    %2604 = vmatprep.subr.mxu0 0.0
    %2605 = vmatpush1.msra.mxu0 0.0
    %2606 = vmatprep.subr.mxu0 0.0
    %2607 = vmatpush1.msra.mxu0 0.0
    %2608 = vmatprep.subr.mxu0 0.0
    %2609 = vmatpush1.msra.mxu0 0.0
    %2610 = vmatprep.subr.mxu0 0.0
    %2611 = vmatpush1.msra.mxu0 0.0
    %2612 = vmatprep.subr.mxu0 0.0
    %2613 = vmatpush1.msra.mxu0 0.0
    %2614 = vmatprep.subr.mxu0 0.0
    %2615 = vmatpush1.msra.mxu0 0.0
    %2616 = vmatprep.subr.mxu0 0.0
    %2617 = vmatpush1.msra.mxu0 0.0
    %2618 = vmatprep.subr.mxu0 0.0
    %2619 = vmatpush1.msra.mxu0 0.0
    %2620 = vmatprep.subr.mxu0 0.0
    %2621 = vmatpush1.msra.mxu0 0.0
    %2622 = vmatprep.subr.mxu0 0.0
    %2623 = vmatpush1.msra.mxu0 0.0
    %2624 = vmatprep.subr.mxu0 0.0
    %2625 = vmatpush1.msra.mxu0 0.0
    %2626 = vmatprep.subr.mxu0 0.0
    %2627 = vmatpush1.msra.mxu0 0.0
    %2628 = vmatprep.subr.mxu0 0.0
    %2629 = vmatpush1.msra.mxu0 0.0
    %2630 = vmatprep.subr.mxu0 0.0
    %2631 = vmatpush1.msra.mxu0 0.0
    %2632 = vmatprep.subr.mxu0 0.0
    %2633 = vmatpush1.msra.mxu0 0.0
    %2634 = vmatprep.subr.mxu0 0.0
    %2635 = vmatpush1.msra.mxu0 0.0
    %2636 = vmatprep.subr.mxu0 0.0
    %2637 = vmatpush1.msra.mxu0 0.0
    %2638 = vmatprep.subr.mxu0 0.0
    %2639 = vmatpush1.msra.mxu0 0.0
    %2640 = vmatprep.subr.mxu0 0.0
    %2641 = vmatpush1.msra.mxu0 0.0
    %2642 = vmatprep.subr.mxu0 0.0
    %2643 = vmatpush1.msra.mxu0 0.0
    %2644 = vmatprep.mubr.f32.mxu0 0.0
    %v2645 = vand.u32 %v2560, 4294901760
    %v2646 = vsub.f32 %v2560, %v2645
    %v2647 = vand.u32 %v2646, 4294901760
    %v2648 = vsub.f32 %v2646, %v2647
    %v2649 = vand.u32 %v2648, 4294901760
    %2650 = vmatmul.mubr.f32.gmra.mrb[0].mxu0 %v2649
    %v2651 = vpop.f32.mrb[0].mxu0
    %v2652 = vadd.f32 %v2350, %v2651
    %v2653 = vpop.f32.mrb[0].mxu0
    %v2654 = vadd.f32 %v2350, %v2653
    %2655 = vdwg.mxu0
    %v2656 = vand.u32 %v2488, 4294901760
    %v2657 = vsub.f32 %v2488, %v2656
    %v2658 = vand.u32 %v2657, 4294901760
    %v2659 = vsub.f32 %v2657, %v2658
    %v2660 = vand.u32 %v2659, 4294901760
    %2661 = vmatprep.subr.mxu0 %v2660
    %v2662 = vand.u32 %v2487, 4294901760
    %v2663 = vsub.f32 %v2487, %v2662
    %v2664 = vand.u32 %v2663, 4294901760
    %v2665 = vsub.f32 %v2663, %v2664
    %v2666 = vand.u32 %v2665, 4294901760
    %2667 = vmatpush1.msra.mxu0 %v2666
    %v2668 = vand.u32 %v2492, 4294901760
    %v2669 = vsub.f32 %v2492, %v2668
    %v2670 = vand.u32 %v2669, 4294901760
    %v2671 = vsub.f32 %v2669, %v2670
    %v2672 = vand.u32 %v2671, 4294901760
    %2673 = vmatprep.subr.mxu0 %v2672
    %v2674 = vand.u32 %v2491, 4294901760
    %v2675 = vsub.f32 %v2491, %v2674
    %v2676 = vand.u32 %v2675, 4294901760
    %v2677 = vsub.f32 %v2675, %v2676
    %v2678 = vand.u32 %v2677, 4294901760
    %2679 = vmatpush1.msra.mxu0 %v2678
    %v2680 = vand.u32 %v2496, 4294901760
    %v2681 = vsub.f32 %v2496, %v2680
    %v2682 = vand.u32 %v2681, 4294901760
    %v2683 = vsub.f32 %v2681, %v2682
    %v2684 = vand.u32 %v2683, 4294901760
    %2685 = vmatprep.subr.mxu0 %v2684
    %v2686 = vand.u32 %v2495, 4294901760
    %v2687 = vsub.f32 %v2495, %v2686
    %v2688 = vand.u32 %v2687, 4294901760
    %v2689 = vsub.f32 %v2687, %v2688
    %v2690 = vand.u32 %v2689, 4294901760
    %2691 = vmatpush1.msra.mxu0 %v2690
    %v2692 = vand.u32 %v2500, 4294901760
    %v2693 = vsub.f32 %v2500, %v2692
    %v2694 = vand.u32 %v2693, 4294901760
    %v2695 = vsub.f32 %v2693, %v2694
    %v2696 = vand.u32 %v2695, 4294901760
    %2697 = vmatprep.subr.mxu0 %v2696
    %v2698 = vand.u32 %v2499, 4294901760
    %v2699 = vsub.f32 %v2499, %v2698
    %v2700 = vand.u32 %v2699, 4294901760
    %v2701 = vsub.f32 %v2699, %v2700
    %v2702 = vand.u32 %v2701, 4294901760
    %2703 = vmatpush1.msra.mxu0 %v2702
    %v2704 = vand.u32 %v2504, 4294901760
    %v2705 = vsub.f32 %v2504, %v2704
    %v2706 = vand.u32 %v2705, 4294901760
    %v2707 = vsub.f32 %v2705, %v2706
    %v2708 = vand.u32 %v2707, 4294901760
    %2709 = vmatprep.subr.mxu0 %v2708
    %v2710 = vand.u32 %v2503, 4294901760
    %v2711 = vsub.f32 %v2503, %v2710
    %v2712 = vand.u32 %v2711, 4294901760
    %v2713 = vsub.f32 %v2711, %v2712
    %v2714 = vand.u32 %v2713, 4294901760
    %2715 = vmatpush1.msra.mxu0 %v2714
    %v2716 = vand.u32 %v2508, 4294901760
    %v2717 = vsub.f32 %v2508, %v2716
    %v2718 = vand.u32 %v2717, 4294901760
    %v2719 = vsub.f32 %v2717, %v2718
    %v2720 = vand.u32 %v2719, 4294901760
    %2721 = vmatprep.subr.mxu0 %v2720
    %v2722 = vand.u32 %v2507, 4294901760
    %v2723 = vsub.f32 %v2507, %v2722
    %v2724 = vand.u32 %v2723, 4294901760
    %v2725 = vsub.f32 %v2723, %v2724
    %v2726 = vand.u32 %v2725, 4294901760
    %2727 = vmatpush1.msra.mxu0 %v2726
    %v2728 = vand.u32 %v2512, 4294901760
    %v2729 = vsub.f32 %v2512, %v2728
    %v2730 = vand.u32 %v2729, 4294901760
    %v2731 = vsub.f32 %v2729, %v2730
    %v2732 = vand.u32 %v2731, 4294901760
    %2733 = vmatprep.subr.mxu0 %v2732
    %v2734 = vand.u32 %v2511, 4294901760
    %v2735 = vsub.f32 %v2511, %v2734
    %v2736 = vand.u32 %v2735, 4294901760
    %v2737 = vsub.f32 %v2735, %v2736
    %v2738 = vand.u32 %v2737, 4294901760
    %2739 = vmatpush1.msra.mxu0 %v2738
    %v2740 = vand.u32 %v2516, 4294901760
    %v2741 = vsub.f32 %v2516, %v2740
    %v2742 = vand.u32 %v2741, 4294901760
    %v2743 = vsub.f32 %v2741, %v2742
    %v2744 = vand.u32 %v2743, 4294901760
    %2745 = vmatprep.subr.mxu0 %v2744
    %v2746 = vand.u32 %v2515, 4294901760
    %v2747 = vsub.f32 %v2515, %v2746
    %v2748 = vand.u32 %v2747, 4294901760
    %v2749 = vsub.f32 %v2747, %v2748
    %v2750 = vand.u32 %v2749, 4294901760
    %2751 = vmatpush1.msra.mxu0 %v2750
    %v2752 = vand.u32 %v2520, 4294901760
    %v2753 = vsub.f32 %v2520, %v2752
    %v2754 = vand.u32 %v2753, 4294901760
    %v2755 = vsub.f32 %v2753, %v2754
    %v2756 = vand.u32 %v2755, 4294901760
    %2757 = vmatprep.subr.mxu0 %v2756
    %v2758 = vand.u32 %v2519, 4294901760
    %v2759 = vsub.f32 %v2519, %v2758
    %v2760 = vand.u32 %v2759, 4294901760
    %v2761 = vsub.f32 %v2759, %v2760
    %v2762 = vand.u32 %v2761, 4294901760
    %2763 = vmatpush1.msra.mxu0 %v2762
    %2764 = vmatprep.subr.mxu0 0.0
    %2765 = vmatpush1.msra.mxu0 0.0
    %2766 = vmatprep.subr.mxu0 0.0
    %2767 = vmatpush1.msra.mxu0 0.0
    %2768 = vmatprep.subr.mxu0 0.0
    %2769 = vmatpush1.msra.mxu0 0.0
    %2770 = vmatprep.subr.mxu0 0.0
    %2771 = vmatpush1.msra.mxu0 0.0
    %2772 = vmatprep.subr.mxu0 0.0
    %2773 = vmatpush1.msra.mxu0 0.0
    %2774 = vmatprep.subr.mxu0 0.0
    %2775 = vmatpush1.msra.mxu0 0.0
    %2776 = vmatprep.subr.mxu0 0.0
    %2777 = vmatpush1.msra.mxu0 0.0
    %2778 = vmatprep.subr.mxu0 0.0
    %2779 = vmatpush1.msra.mxu0 0.0
    %2780 = vmatprep.subr.mxu0 0.0
    %2781 = vmatpush1.msra.mxu0 0.0
    %2782 = vmatprep.subr.mxu0 0.0
    %2783 = vmatpush1.msra.mxu0 0.0
    %2784 = vmatprep.subr.mxu0 0.0
    %2785 = vmatpush1.msra.mxu0 0.0
    %2786 = vmatprep.subr.mxu0 0.0
    %2787 = vmatpush1.msra.mxu0 0.0
    %2788 = vmatprep.subr.mxu0 0.0
    %2789 = vmatpush1.msra.mxu0 0.0
    %2790 = vmatprep.subr.mxu0 0.0
    %2791 = vmatpush1.msra.mxu0 0.0
    %2792 = vmatprep.subr.mxu0 0.0
    %2793 = vmatpush1.msra.mxu0 0.0
    %2794 = vmatprep.subr.mxu0 0.0
    %2795 = vmatpush1.msra.mxu0 0.0
    %2796 = vmatprep.subr.mxu0 0.0
    %2797 = vmatpush1.msra.mxu0 0.0
    %2798 = vmatprep.subr.mxu0 0.0
    %2799 = vmatpush1.msra.mxu0 0.0
    %2800 = vmatprep.subr.mxu0 0.0
    %2801 = vmatpush1.msra.mxu0 0.0
    %2802 = vmatprep.subr.mxu0 0.0
    %2803 = vmatpush1.msra.mxu0 0.0
    %2804 = vmatprep.subr.mxu0 0.0
    %2805 = vmatpush1.msra.mxu0 0.0
    %2806 = vmatprep.subr.mxu0 0.0
    %2807 = vmatpush1.msra.mxu0 0.0
    %2808 = vmatprep.subr.mxu0 0.0
    %2809 = vmatpush1.msra.mxu0 0.0
    %2810 = vmatprep.mubr.f32.mxu0 0.0
    %v2811 = vand.u32 %v2560, 4294901760
    %2812 = vmatmul.mubr.f32.gmra.mrb[0].mxu0 %v2811
    %v2813 = vpop.f32.mrb[0].mxu0
    %v2814 = vadd.f32 %v2652, %v2813
    %v2815 = vpop.f32.mrb[0].mxu0
    %v2816 = vadd.f32 %v2654, %v2815
    %2817 = vdwg.mxu0
    %v2818 = vand.u32 %v2488, 4294901760
    %v2819 = vsub.f32 %v2488, %v2818
    %2820 = vmatprep.subr.mxu0 %v2819
    %v2821 = vand.u32 %v2487, 4294901760
    %v2822 = vsub.f32 %v2487, %v2821
    %2823 = vmatpush1.msra.mxu0 %v2822
    %v2824 = vand.u32 %v2492, 4294901760
    %v2825 = vsub.f32 %v2492, %v2824
    %2826 = vmatprep.subr.mxu0 %v2825
    %v2827 = vand.u32 %v2491, 4294901760
    %v2828 = vsub.f32 %v2491, %v2827
    %2829 = vmatpush1.msra.mxu0 %v2828
    %v2830 = vand.u32 %v2496, 4294901760
    %v2831 = vsub.f32 %v2496, %v2830
    %2832 = vmatprep.subr.mxu0 %v2831
    %v2833 = vand.u32 %v2495, 4294901760
    %v2834 = vsub.f32 %v2495, %v2833
    %2835 = vmatpush1.msra.mxu0 %v2834
    %v2836 = vand.u32 %v2500, 4294901760
    %v2837 = vsub.f32 %v2500, %v2836
    %2838 = vmatprep.subr.mxu0 %v2837
    %v2839 = vand.u32 %v2499, 4294901760
    %v2840 = vsub.f32 %v2499, %v2839
    %2841 = vmatpush1.msra.mxu0 %v2840
    %v2842 = vand.u32 %v2504, 4294901760
    %v2843 = vsub.f32 %v2504, %v2842
    %2844 = vmatprep.subr.mxu0 %v2843
    %v2845 = vand.u32 %v2503, 4294901760
    %v2846 = vsub.f32 %v2503, %v2845
    %2847 = vmatpush1.msra.mxu0 %v2846
    %v2848 = vand.u32 %v2508, 4294901760
    %v2849 = vsub.f32 %v2508, %v2848
    %2850 = vmatprep.subr.mxu0 %v2849
    %v2851 = vand.u32 %v2507, 4294901760
    %v2852 = vsub.f32 %v2507, %v2851
    %2853 = vmatpush1.msra.mxu0 %v2852
    %v2854 = vand.u32 %v2512, 4294901760
    %v2855 = vsub.f32 %v2512, %v2854
    %2856 = vmatprep.subr.mxu0 %v2855
    %v2857 = vand.u32 %v2511, 4294901760
    %v2858 = vsub.f32 %v2511, %v2857
    %2859 = vmatpush1.msra.mxu0 %v2858
    %v2860 = vand.u32 %v2516, 4294901760
    %v2861 = vsub.f32 %v2516, %v2860
    %2862 = vmatprep.subr.mxu0 %v2861
    %v2863 = vand.u32 %v2515, 4294901760
    %v2864 = vsub.f32 %v2515, %v2863
    %2865 = vmatpush1.msra.mxu0 %v2864
    %v2866 = vand.u32 %v2520, 4294901760
    %v2867 = vsub.f32 %v2520, %v2866
    %2868 = vmatprep.subr.mxu0 %v2867
    %v2869 = vand.u32 %v2519, 4294901760
    %v2870 = vsub.f32 %v2519, %v2869
    %2871 = vmatpush1.msra.mxu0 %v2870
    %2872 = vmatprep.subr.mxu0 0.0
    %2873 = vmatpush1.msra.mxu0 0.0
    %2874 = vmatprep.subr.mxu0 0.0
    %2875 = vmatpush1.msra.mxu0 0.0
    %2876 = vmatprep.subr.mxu0 0.0
    %2877 = vmatpush1.msra.mxu0 0.0
    %2878 = vmatprep.subr.mxu0 0.0
    %2879 = vmatpush1.msra.mxu0 0.0
    %2880 = vmatprep.subr.mxu0 0.0
    %2881 = vmatpush1.msra.mxu0 0.0
    %2882 = vmatprep.subr.mxu0 0.0
    %2883 = vmatpush1.msra.mxu0 0.0
    %2884 = vmatprep.subr.mxu0 0.0
    %2885 = vmatpush1.msra.mxu0 0.0
    %2886 = vmatprep.subr.mxu0 0.0
    %2887 = vmatpush1.msra.mxu0 0.0
    %2888 = vmatprep.subr.mxu0 0.0
    %2889 = vmatpush1.msra.mxu0 0.0
    %2890 = vmatprep.subr.mxu0 0.0
    %2891 = vmatpush1.msra.mxu0 0.0
    %2892 = vmatprep.subr.mxu0 0.0
    %2893 = vmatpush1.msra.mxu0 0.0
    %2894 = vmatprep.subr.mxu0 0.0
    %2895 = vmatpush1.msra.mxu0 0.0
    %2896 = vmatprep.subr.mxu0 0.0
    %2897 = vmatpush1.msra.mxu0 0.0
    %2898 = vmatprep.subr.mxu0 0.0
    %2899 = vmatpush1.msra.mxu0 0.0
    %2900 = vmatprep.subr.mxu0 0.0
    %2901 = vmatpush1.msra.mxu0 0.0
    %2902 = vmatprep.subr.mxu0 0.0
    %2903 = vmatpush1.msra.mxu0 0.0
    %2904 = vmatprep.subr.mxu0 0.0
    %2905 = vmatpush1.msra.mxu0 0.0
    %2906 = vmatprep.subr.mxu0 0.0
    %2907 = vmatpush1.msra.mxu0 0.0
    %2908 = vmatprep.subr.mxu0 0.0
    %2909 = vmatpush1.msra.mxu0 0.0
    %2910 = vmatprep.subr.mxu0 0.0
    %2911 = vmatpush1.msra.mxu0 0.0
    %2912 = vmatprep.subr.mxu0 0.0
    %2913 = vmatpush1.msra.mxu0 0.0
    %2914 = vmatprep.subr.mxu0 0.0
    %2915 = vmatpush1.msra.mxu0 0.0
    %2916 = vmatprep.subr.mxu0 0.0
    %2917 = vmatpush1.msra.mxu0 0.0
    %2918 = vmatprep.mubr.f32.mxu0 0.0
    %v2919 = vand.u32 %v2560, 4294901760
    %v2920 = vsub.f32 %v2560, %v2919
    %2921 = vmatmul.mubr.f32.gmra.mrb[0].mxu0 %v2920
    %v2922 = vpop.f32.mrb[0].mxu0
    %v2923 = vadd.f32 %v2814, %v2922
    %v2924 = vpop.f32.mrb[0].mxu0
    %v2925 = vadd.f32 %v2816, %v2924
    %2926 = vdwg.mxu0
    %v2927 = vand.u32 %v2488, 4294901760
    %2928 = vmatprep.subr.mxu0 %v2927
    %v2929 = vand.u32 %v2487, 4294901760
    %2930 = vmatpush1.msra.mxu0 %v2929
    %v2931 = vand.u32 %v2492, 4294901760
    %2932 = vmatprep.subr.mxu0 %v2931
    %v2933 = vand.u32 %v2491, 4294901760
    %2934 = vmatpush1.msra.mxu0 %v2933
    %v2935 = vand.u32 %v2496, 4294901760
    %2936 = vmatprep.subr.mxu0 %v2935
    %v2937 = vand.u32 %v2495, 4294901760
    %2938 = vmatpush1.msra.mxu0 %v2937
    %v2939 = vand.u32 %v2500, 4294901760
    %2940 = vmatprep.subr.mxu0 %v2939
    %v2941 = vand.u32 %v2499, 4294901760
    %2942 = vmatpush1.msra.mxu0 %v2941
    %v2943 = vand.u32 %v2504, 4294901760
    %2944 = vmatprep.subr.mxu0 %v2943
    %v2945 = vand.u32 %v2503, 4294901760
    %2946 = vmatpush1.msra.mxu0 %v2945
    %v2947 = vand.u32 %v2508, 4294901760
    %2948 = vmatprep.subr.mxu0 %v2947
    %v2949 = vand.u32 %v2507, 4294901760
    %2950 = vmatpush1.msra.mxu0 %v2949
    %v2951 = vand.u32 %v2512, 4294901760
    %2952 = vmatprep.subr.mxu0 %v2951
    %v2953 = vand.u32 %v2511, 4294901760
    %2954 = vmatpush1.msra.mxu0 %v2953
    %v2955 = vand.u32 %v2516, 4294901760
    %2956 = vmatprep.subr.mxu0 %v2955
    %v2957 = vand.u32 %v2515, 4294901760
    %2958 = vmatpush1.msra.mxu0 %v2957
    %v2959 = vand.u32 %v2520, 4294901760
    %2960 = vmatprep.subr.mxu0 %v2959
    %v2961 = vand.u32 %v2519, 4294901760
    %2962 = vmatpush1.msra.mxu0 %v2961
    %2963 = vmatprep.subr.mxu0 0.0
    %2964 = vmatpush1.msra.mxu0 0.0
    %2965 = vmatprep.subr.mxu0 0.0
    %2966 = vmatpush1.msra.mxu0 0.0
    %2967 = vmatprep.subr.mxu0 0.0
    %2968 = vmatpush1.msra.mxu0 0.0
    %2969 = vmatprep.subr.mxu0 0.0
    %2970 = vmatpush1.msra.mxu0 0.0
    %2971 = vmatprep.subr.mxu0 0.0
    %2972 = vmatpush1.msra.mxu0 0.0
    %2973 = vmatprep.subr.mxu0 0.0
    %2974 = vmatpush1.msra.mxu0 0.0
    %2975 = vmatprep.subr.mxu0 0.0
    %2976 = vmatpush1.msra.mxu0 0.0
    %2977 = vmatprep.subr.mxu0 0.0
    %2978 = vmatpush1.msra.mxu0 0.0
    %2979 = vmatprep.subr.mxu0 0.0
    %2980 = vmatpush1.msra.mxu0 0.0
    %2981 = vmatprep.subr.mxu0 0.0
    %2982 = vmatpush1.msra.mxu0 0.0
    %2983 = vmatprep.subr.mxu0 0.0
    %2984 = vmatpush1.msra.mxu0 0.0
    %2985 = vmatprep.subr.mxu0 0.0
    %2986 = vmatpush1.msra.mxu0 0.0
    %2987 = vmatprep.subr.mxu0 0.0
    %2988 = vmatpush1.msra.mxu0 0.0
    %2989 = vmatprep.subr.mxu0 0.0
    %2990 = vmatpush1.msra.mxu0 0.0
    %2991 = vmatprep.subr.mxu0 0.0
    %2992 = vmatpush1.msra.mxu0 0.0
    %2993 = vmatprep.subr.mxu0 0.0
    %2994 = vmatpush1.msra.mxu0 0.0
    %2995 = vmatprep.subr.mxu0 0.0
    %2996 = vmatpush1.msra.mxu0 0.0
    %2997 = vmatprep.subr.mxu0 0.0
    %2998 = vmatpush1.msra.mxu0 0.0
    %2999 = vmatprep.subr.mxu0 0.0
    %3000 = vmatpush1.msra.mxu0 0.0
    %3001 = vmatprep.subr.mxu0 0.0
    %3002 = vmatpush1.msra.mxu0 0.0
    %3003 = vmatprep.subr.mxu0 0.0
    %3004 = vmatpush1.msra.mxu0 0.0
    %3005 = vmatprep.subr.mxu0 0.0
    %3006 = vmatpush1.msra.mxu0 0.0
    %3007 = vmatprep.subr.mxu0 0.0
    %3008 = vmatpush1.msra.mxu0 0.0
    %3009 = vmatprep.mubr.f32.mxu0 0.0
    %v3010 = vand.u32 %v2560, 4294901760
    %v3011 = vsub.f32 %v2560, %v3010
    %v3012 = vand.u32 %v3011, 4294901760
    %3013 = vmatmul.mubr.f32.gmra.mrb[0].mxu0 %v3012
    %v3014 = vpop.f32.mrb[0].mxu0
    %v3015 = vadd.f32 %v2923, %v3014
    %v3016 = vpop.f32.mrb[0].mxu0
    %v3017 = vadd.f32 %v2925, %v3016
    %3018 = vdwg.mxu0
    %v3019 = vand.u32 %v2488, 4294901760
    %v3020 = vsub.f32 %v2488, %v3019
    %v3021 = vand.u32 %v3020, 4294901760
    %3022 = vmatprep.subr.mxu0 %v3021
    %v3023 = vand.u32 %v2487, 4294901760
    %v3024 = vsub.f32 %v2487, %v3023
    %v3025 = vand.u32 %v3024, 4294901760
    %3026 = vmatpush1.msra.mxu0 %v3025
    %v3027 = vand.u32 %v2492, 4294901760
    %v3028 = vsub.f32 %v2492, %v3027
    %v3029 = vand.u32 %v3028, 4294901760
    %3030 = vmatprep.subr.mxu0 %v3029
    %v3031 = vand.u32 %v2491, 4294901760
    %v3032 = vsub.f32 %v2491, %v3031
    %v3033 = vand.u32 %v3032, 4294901760
    %3034 = vmatpush1.msra.mxu0 %v3033
    %v3035 = vand.u32 %v2496, 4294901760
    %v3036 = vsub.f32 %v2496, %v3035
    %v3037 = vand.u32 %v3036, 4294901760
    %3038 = vmatprep.subr.mxu0 %v3037
    %v3039 = vand.u32 %v2495, 4294901760
    %v3040 = vsub.f32 %v2495, %v3039
    %v3041 = vand.u32 %v3040, 4294901760
    %3042 = vmatpush1.msra.mxu0 %v3041
    %v3043 = vand.u32 %v2500, 4294901760
    %v3044 = vsub.f32 %v2500, %v3043
    %v3045 = vand.u32 %v3044, 4294901760
    %3046 = vmatprep.subr.mxu0 %v3045
    %v3047 = vand.u32 %v2499, 4294901760
    %v3048 = vsub.f32 %v2499, %v3047
    %v3049 = vand.u32 %v3048, 4294901760
    %3050 = vmatpush1.msra.mxu0 %v3049
    %v3051 = vand.u32 %v2504, 4294901760
    %v3052 = vsub.f32 %v2504, %v3051
    %v3053 = vand.u32 %v3052, 4294901760
    %3054 = vmatprep.subr.mxu0 %v3053
    %v3055 = vand.u32 %v2503, 4294901760
    %v3056 = vsub.f32 %v2503, %v3055
    %v3057 = vand.u32 %v3056, 4294901760
    %3058 = vmatpush1.msra.mxu0 %v3057
    %v3059 = vand.u32 %v2508, 4294901760
    %v3060 = vsub.f32 %v2508, %v3059
    %v3061 = vand.u32 %v3060, 4294901760
    %3062 = vmatprep.subr.mxu0 %v3061
    %v3063 = vand.u32 %v2507, 4294901760
    %v3064 = vsub.f32 %v2507, %v3063
    %v3065 = vand.u32 %v3064, 4294901760
    %3066 = vmatpush1.msra.mxu0 %v3065
    %v3067 = vand.u32 %v2512, 4294901760
    %v3068 = vsub.f32 %v2512, %v3067
    %v3069 = vand.u32 %v3068, 4294901760
    %3070 = vmatprep.subr.mxu0 %v3069
    %v3071 = vand.u32 %v2511, 4294901760
    %v3072 = vsub.f32 %v2511, %v3071
    %v3073 = vand.u32 %v3072, 4294901760
    %3074 = vmatpush1.msra.mxu0 %v3073
    %v3075 = vand.u32 %v2516, 4294901760
    %v3076 = vsub.f32 %v2516, %v3075
    %v3077 = vand.u32 %v3076, 4294901760
    %3078 = vmatprep.subr.mxu0 %v3077
    %v3079 = vand.u32 %v2515, 4294901760
    %v3080 = vsub.f32 %v2515, %v3079
    %v3081 = vand.u32 %v3080, 4294901760
    %3082 = vmatpush1.msra.mxu0 %v3081
    %v3083 = vand.u32 %v2520, 4294901760
    %v3084 = vsub.f32 %v2520, %v3083
    %v3085 = vand.u32 %v3084, 4294901760
    %3086 = vmatprep.subr.mxu0 %v3085
    %v3087 = vand.u32 %v2519, 4294901760
    %v3088 = vsub.f32 %v2519, %v3087
    %v3089 = vand.u32 %v3088, 4294901760
    %3090 = vmatpush1.msra.mxu0 %v3089
    %3091 = vmatprep.subr.mxu0 0.0
    %3092 = vmatpush1.msra.mxu0 0.0
    %3093 = vmatprep.subr.mxu0 0.0
    %3094 = vmatpush1.msra.mxu0 0.0
    %3095 = vmatprep.subr.mxu0 0.0
    %3096 = vmatpush1.msra.mxu0 0.0
    %3097 = vmatprep.subr.mxu0 0.0
    %3098 = vmatpush1.msra.mxu0 0.0
    %3099 = vmatprep.subr.mxu0 0.0
    %3100 = vmatpush1.msra.mxu0 0.0
    %3101 = vmatprep.subr.mxu0 0.0
    %3102 = vmatpush1.msra.mxu0 0.0
    %3103 = vmatprep.subr.mxu0 0.0
    %3104 = vmatpush1.msra.mxu0 0.0
    %3105 = vmatprep.subr.mxu0 0.0
    %3106 = vmatpush1.msra.mxu0 0.0
    %3107 = vmatprep.subr.mxu0 0.0
    %3108 = vmatpush1.msra.mxu0 0.0
    %3109 = vmatprep.subr.mxu0 0.0
    %3110 = vmatpush1.msra.mxu0 0.0
    %3111 = vmatprep.subr.mxu0 0.0
    %3112 = vmatpush1.msra.mxu0 0.0
    %3113 = vmatprep.subr.mxu0 0.0
    %3114 = vmatpush1.msra.mxu0 0.0
    %3115 = vmatprep.subr.mxu0 0.0
    %3116 = vmatpush1.msra.mxu0 0.0
    %3117 = vmatprep.subr.mxu0 0.0
    %3118 = vmatpush1.msra.mxu0 0.0
    %3119 = vmatprep.subr.mxu0 0.0
    %3120 = vmatpush1.msra.mxu0 0.0
    %3121 = vmatprep.subr.mxu0 0.0
    %3122 = vmatpush1.msra.mxu0 0.0
    %3123 = vmatprep.subr.mxu0 0.0
    %3124 = vmatpush1.msra.mxu0 0.0
    %3125 = vmatprep.subr.mxu0 0.0
    %3126 = vmatpush1.msra.mxu0 0.0
    %3127 = vmatprep.subr.mxu0 0.0
    %3128 = vmatpush1.msra.mxu0 0.0
    %3129 = vmatprep.subr.mxu0 0.0
    %3130 = vmatpush1.msra.mxu0 0.0
    %3131 = vmatprep.subr.mxu0 0.0
    %3132 = vmatpush1.msra.mxu0 0.0
    %3133 = vmatprep.subr.mxu0 0.0
    %3134 = vmatpush1.msra.mxu0 0.0
    %3135 = vmatprep.subr.mxu0 0.0
    %3136 = vmatpush1.msra.mxu0 0.0
    %3137 = vmatprep.mubr.f32.mxu0 0.0
    %v3138 = vand.u32 %v2560, 4294901760
    %3139 = vmatmul.mubr.f32.gmra.mrb[0].mxu0 %v3138
    %v3140 = vpop.f32.mrb[0].mxu0
    %v3141 = vadd.f32 %v3015, %v3140
    %v3142 = vpop.f32.mrb[0].mxu0
    %v3143 = vadd.f32 %v3017, %v3142
    %3144 = vdwg.mxu0
    %v3145 = vand.u32 %v2488, 4294901760
    %3146 = vmatprep.subr.mxu0 %v3145
    %v3147 = vand.u32 %v2487, 4294901760
    %3148 = vmatpush1.msra.mxu0 %v3147
    %v3149 = vand.u32 %v2492, 4294901760
    %3150 = vmatprep.subr.mxu0 %v3149
    %v3151 = vand.u32 %v2491, 4294901760
    %3152 = vmatpush1.msra.mxu0 %v3151
    %v3153 = vand.u32 %v2496, 4294901760
    %3154 = vmatprep.subr.mxu0 %v3153
    %v3155 = vand.u32 %v2495, 4294901760
    %3156 = vmatpush1.msra.mxu0 %v3155
    %v3157 = vand.u32 %v2500, 4294901760
    %3158 = vmatprep.subr.mxu0 %v3157
    %v3159 = vand.u32 %v2499, 4294901760
    %3160 = vmatpush1.msra.mxu0 %v3159
    %v3161 = vand.u32 %v2504, 4294901760
    %3162 = vmatprep.subr.mxu0 %v3161
    %v3163 = vand.u32 %v2503, 4294901760
    %3164 = vmatpush1.msra.mxu0 %v3163
    %v3165 = vand.u32 %v2508, 4294901760
    %3166 = vmatprep.subr.mxu0 %v3165
    %v3167 = vand.u32 %v2507, 4294901760
    %3168 = vmatpush1.msra.mxu0 %v3167
    %v3169 = vand.u32 %v2512, 4294901760
    %3170 = vmatprep.subr.mxu0 %v3169
    %v3171 = vand.u32 %v2511, 4294901760
    %3172 = vmatpush1.msra.mxu0 %v3171
    %v3173 = vand.u32 %v2516, 4294901760
    %3174 = vmatprep.subr.mxu0 %v3173
    %v3175 = vand.u32 %v2515, 4294901760
    %3176 = vmatpush1.msra.mxu0 %v3175
    %v3177 = vand.u32 %v2520, 4294901760
    %3178 = vmatprep.subr.mxu0 %v3177
    %v3179 = vand.u32 %v2519, 4294901760
    %3180 = vmatpush1.msra.mxu0 %v3179
    %3181 = vmatprep.subr.mxu0 0.0
    %3182 = vmatpush1.msra.mxu0 0.0
    %3183 = vmatprep.subr.mxu0 0.0
    %3184 = vmatpush1.msra.mxu0 0.0
    %3185 = vmatprep.subr.mxu0 0.0
    %3186 = vmatpush1.msra.mxu0 0.0
    %3187 = vmatprep.subr.mxu0 0.0
    %3188 = vmatpush1.msra.mxu0 0.0
    %3189 = vmatprep.subr.mxu0 0.0
    %3190 = vmatpush1.msra.mxu0 0.0
    %3191 = vmatprep.subr.mxu0 0.0
    %3192 = vmatpush1.msra.mxu0 0.0
    %3193 = vmatprep.subr.mxu0 0.0
    %3194 = vmatpush1.msra.mxu0 0.0
    %3195 = vmatprep.subr.mxu0 0.0
    %3196 = vmatpush1.msra.mxu0 0.0
    %3197 = vmatprep.subr.mxu0 0.0
    %3198 = vmatpush1.msra.mxu0 0.0
    %3199 = vmatprep.subr.mxu0 0.0
    %3200 = vmatpush1.msra.mxu0 0.0
    %3201 = vmatprep.subr.mxu0 0.0
    %3202 = vmatpush1.msra.mxu0 0.0
    %3203 = vmatprep.subr.mxu0 0.0
    %3204 = vmatpush1.msra.mxu0 0.0
    %3205 = vmatprep.subr.mxu0 0.0
    %3206 = vmatpush1.msra.mxu0 0.0
    %3207 = vmatprep.subr.mxu0 0.0
    %3208 = vmatpush1.msra.mxu0 0.0
    %3209 = vmatprep.subr.mxu0 0.0
    %3210 = vmatpush1.msra.mxu0 0.0
    %3211 = vmatprep.subr.mxu0 0.0
    %3212 = vmatpush1.msra.mxu0 0.0
    %3213 = vmatprep.subr.mxu0 0.0
    %3214 = vmatpush1.msra.mxu0 0.0
    %3215 = vmatprep.subr.mxu0 0.0
    %3216 = vmatpush1.msra.mxu0 0.0
    %3217 = vmatprep.subr.mxu0 0.0
    %3218 = vmatpush1.msra.mxu0 0.0
    %3219 = vmatprep.subr.mxu0 0.0
    %3220 = vmatpush1.msra.mxu0 0.0
    %3221 = vmatprep.subr.mxu0 0.0
    %3222 = vmatpush1.msra.mxu0 0.0
    %3223 = vmatprep.subr.mxu0 0.0
    %3224 = vmatpush1.msra.mxu0 0.0
    %3225 = vmatprep.subr.mxu0 0.0
    %3226 = vmatpush1.msra.mxu0 0.0
    %3227 = vmatprep.mubr.f32.mxu0 0.0
    %v3228 = vand.u32 %v2560, 4294901760
    %3229 = vmatmul.mubr.f32.gmra.mrb[0].mxu0 %v3228
    %v3230 = vpop.f32.mrb[0].mxu0
    %v3231 = vadd.f32 %v3141, %v3230
    %v3232 = vpop.f32.mrb[0].mxu0
    %v3233 = vadd.f32 %v3143, %v3232
    %3234 = vdwg.mxu0
    %v3235 = vand.u32 %v2490, 4294901760
    %3236 = vmatprep.subr.mxu0 %v3235
    %v3237 = vand.u32 %v2489, 4294901760
    %3238 = vmatpush1.msra.mxu0 %v3237
    %v3239 = vand.u32 %v2494, 4294901760
    %3240 = vmatprep.subr.mxu0 %v3239
    %v3241 = vand.u32 %v2493, 4294901760
    %3242 = vmatpush1.msra.mxu0 %v3241
    %v3243 = vand.u32 %v2498, 4294901760
    %3244 = vmatprep.subr.mxu0 %v3243
    %v3245 = vand.u32 %v2497, 4294901760
    %3246 = vmatpush1.msra.mxu0 %v3245
    %v3247 = vand.u32 %v2502, 4294901760
    %3248 = vmatprep.subr.mxu0 %v3247
    %v3249 = vand.u32 %v2501, 4294901760
    %3250 = vmatpush1.msra.mxu0 %v3249
    %v3251 = vand.u32 %v2506, 4294901760
    %3252 = vmatprep.subr.mxu0 %v3251
    %v3253 = vand.u32 %v2505, 4294901760
    %3254 = vmatpush1.msra.mxu0 %v3253
    %v3255 = vand.u32 %v2510, 4294901760
    %3256 = vmatprep.subr.mxu0 %v3255
    %v3257 = vand.u32 %v2509, 4294901760
    %3258 = vmatpush1.msra.mxu0 %v3257
    %v3259 = vand.u32 %v2514, 4294901760
    %3260 = vmatprep.subr.mxu0 %v3259
    %v3261 = vand.u32 %v2513, 4294901760
    %3262 = vmatpush1.msra.mxu0 %v3261
    %v3263 = vand.u32 %v2518, 4294901760
    %3264 = vmatprep.subr.mxu0 %v3263
    %v3265 = vand.u32 %v2517, 4294901760
    %3266 = vmatpush1.msra.mxu0 %v3265
    %v3267 = vand.u32 %v2522, 4294901760
    %3268 = vmatprep.subr.mxu0 %v3267
    %v3269 = vand.u32 %v2521, 4294901760
    %3270 = vmatpush1.msra.mxu0 %v3269
    %3271 = vmatprep.subr.mxu0 0.0
    %3272 = vmatpush1.msra.mxu0 0.0
    %3273 = vmatprep.subr.mxu0 0.0
    %3274 = vmatpush1.msra.mxu0 0.0
    %3275 = vmatprep.subr.mxu0 0.0
    %3276 = vmatpush1.msra.mxu0 0.0
    %3277 = vmatprep.subr.mxu0 0.0
    %3278 = vmatpush1.msra.mxu0 0.0
    %3279 = vmatprep.subr.mxu0 0.0
    %3280 = vmatpush1.msra.mxu0 0.0
    %3281 = vmatprep.subr.mxu0 0.0
    %3282 = vmatpush1.msra.mxu0 0.0
    %3283 = vmatprep.subr.mxu0 0.0
    %3284 = vmatpush1.msra.mxu0 0.0
    %3285 = vmatprep.subr.mxu0 0.0
    %3286 = vmatpush1.msra.mxu0 0.0
    %3287 = vmatprep.subr.mxu0 0.0
    %3288 = vmatpush1.msra.mxu0 0.0
    %3289 = vmatprep.subr.mxu0 0.0
    %3290 = vmatpush1.msra.mxu0 0.0
    %3291 = vmatprep.subr.mxu0 0.0
    %3292 = vmatpush1.msra.mxu0 0.0
    %3293 = vmatprep.subr.mxu0 0.0
    %3294 = vmatpush1.msra.mxu0 0.0
    %3295 = vmatprep.subr.mxu0 0.0
    %3296 = vmatpush1.msra.mxu0 0.0
    %3297 = vmatprep.subr.mxu0 0.0
    %3298 = vmatpush1.msra.mxu0 0.0
    %3299 = vmatprep.subr.mxu0 0.0
    %3300 = vmatpush1.msra.mxu0 0.0
    %3301 = vmatprep.subr.mxu0 0.0
    %3302 = vmatpush1.msra.mxu0 0.0
    %3303 = vmatprep.subr.mxu0 0.0
    %3304 = vmatpush1.msra.mxu0 0.0
    %3305 = vmatprep.subr.mxu0 0.0
    %3306 = vmatpush1.msra.mxu0 0.0
    %3307 = vmatprep.subr.mxu0 0.0
    %3308 = vmatpush1.msra.mxu0 0.0
    %3309 = vmatprep.subr.mxu0 0.0
    %3310 = vmatpush1.msra.mxu0 0.0
    %3311 = vmatprep.subr.mxu0 0.0
    %3312 = vmatpush1.msra.mxu0 0.0
    %3313 = vmatprep.subr.mxu0 0.0
    %3314 = vmatpush1.msra.mxu0 0.0
    %3315 = vmatprep.subr.mxu0 0.0
    %3316 = vmatpush1.msra.mxu0 0.0
    %3317 = vmatprep.mubr.f32.mxu0 0.0
    %v3318 = vand.u32 %v2560, 4294901760
    %v3319 = vsub.f32 %v2560, %v3318
    %v3320 = vand.u32 %v3319, 4294901760
    %v3321 = vsub.f32 %v3319, %v3320
    %v3322 = vand.u32 %v3321, 4294901760
    %3323 = vmatmul.mubr.f32.gmra.mrb[0].mxu0 %v3322
    %v3324 = vpop.f32.mrb[0].mxu0
    %v3325 = vadd.f32 %v2350, %v3324
    %v3326 = vpop.f32.mrb[0].mxu0
    %v3327 = vadd.f32 %v2350, %v3326
    %3328 = vdwg.mxu0
    %v3329 = vand.u32 %v2490, 4294901760
    %v3330 = vsub.f32 %v2490, %v3329
    %v3331 = vand.u32 %v3330, 4294901760
    %v3332 = vsub.f32 %v3330, %v3331
    %v3333 = vand.u32 %v3332, 4294901760
    %3334 = vmatprep.subr.mxu0 %v3333
    %v3335 = vand.u32 %v2489, 4294901760
    %v3336 = vsub.f32 %v2489, %v3335
    %v3337 = vand.u32 %v3336, 4294901760
    %v3338 = vsub.f32 %v3336, %v3337
    %v3339 = vand.u32 %v3338, 4294901760
    %3340 = vmatpush1.msra.mxu0 %v3339
    %v3341 = vand.u32 %v2494, 4294901760
    %v3342 = vsub.f32 %v2494, %v3341
    %v3343 = vand.u32 %v3342, 4294901760
    %v3344 = vsub.f32 %v3342, %v3343
    %v3345 = vand.u32 %v3344, 4294901760
    %3346 = vmatprep.subr.mxu0 %v3345
    %v3347 = vand.u32 %v2493, 4294901760
    %v3348 = vsub.f32 %v2493, %v3347
    %v3349 = vand.u32 %v3348, 4294901760
    %v3350 = vsub.f32 %v3348, %v3349
    %v3351 = vand.u32 %v3350, 4294901760
    %3352 = vmatpush1.msra.mxu0 %v3351
    %v3353 = vand.u32 %v2498, 4294901760
    %v3354 = vsub.f32 %v2498, %v3353
    %v3355 = vand.u32 %v3354, 4294901760
    %v3356 = vsub.f32 %v3354, %v3355
    %v3357 = vand.u32 %v3356, 4294901760
    %3358 = vmatprep.subr.mxu0 %v3357
    %v3359 = vand.u32 %v2497, 4294901760
    %v3360 = vsub.f32 %v2497, %v3359
    %v3361 = vand.u32 %v3360, 4294901760
    %v3362 = vsub.f32 %v3360, %v3361
    %v3363 = vand.u32 %v3362, 4294901760
    %3364 = vmatpush1.msra.mxu0 %v3363
    %v3365 = vand.u32 %v2502, 4294901760
    %v3366 = vsub.f32 %v2502, %v3365
    %v3367 = vand.u32 %v3366, 4294901760
    %v3368 = vsub.f32 %v3366, %v3367
    %v3369 = vand.u32 %v3368, 4294901760
    %3370 = vmatprep.subr.mxu0 %v3369
    %v3371 = vand.u32 %v2501, 4294901760
    %v3372 = vsub.f32 %v2501, %v3371
    %v3373 = vand.u32 %v3372, 4294901760
    %v3374 = vsub.f32 %v3372, %v3373
    %v3375 = vand.u32 %v3374, 4294901760
    %3376 = vmatpush1.msra.mxu0 %v3375
    %v3377 = vand.u32 %v2506, 4294901760
    %v3378 = vsub.f32 %v2506, %v3377
    %v3379 = vand.u32 %v3378, 4294901760
    %v3380 = vsub.f32 %v3378, %v3379
    %v3381 = vand.u32 %v3380, 4294901760
    %3382 = vmatprep.subr.mxu0 %v3381
    %v3383 = vand.u32 %v2505, 4294901760
    %v3384 = vsub.f32 %v2505, %v3383
    %v3385 = vand.u32 %v3384, 4294901760
    %v3386 = vsub.f32 %v3384, %v3385
    %v3387 = vand.u32 %v3386, 4294901760
    %3388 = vmatpush1.msra.mxu0 %v3387
    %v3389 = vand.u32 %v2510, 4294901760
    %v3390 = vsub.f32 %v2510, %v3389
    %v3391 = vand.u32 %v3390, 4294901760
    %v3392 = vsub.f32 %v3390, %v3391
    %v3393 = vand.u32 %v3392, 4294901760
    %3394 = vmatprep.subr.mxu0 %v3393
    %v3395 = vand.u32 %v2509, 4294901760
    %v3396 = vsub.f32 %v2509, %v3395
    %v3397 = vand.u32 %v3396, 4294901760
    %v3398 = vsub.f32 %v3396, %v3397
    %v3399 = vand.u32 %v3398, 4294901760
    %3400 = vmatpush1.msra.mxu0 %v3399
    %v3401 = vand.u32 %v2514, 4294901760
    %v3402 = vsub.f32 %v2514, %v3401
    %v3403 = vand.u32 %v3402, 4294901760
    %v3404 = vsub.f32 %v3402, %v3403
    %v3405 = vand.u32 %v3404, 4294901760
    %3406 = vmatprep.subr.mxu0 %v3405
    %v3407 = vand.u32 %v2513, 4294901760
    %v3408 = vsub.f32 %v2513, %v3407
    %v3409 = vand.u32 %v3408, 4294901760
    %v3410 = vsub.f32 %v3408, %v3409
    %v3411 = vand.u32 %v3410, 4294901760
    %3412 = vmatpush1.msra.mxu0 %v3411
    %v3413 = vand.u32 %v2518, 4294901760
    %v3414 = vsub.f32 %v2518, %v3413
    %v3415 = vand.u32 %v3414, 4294901760
    %v3416 = vsub.f32 %v3414, %v3415
    %v3417 = vand.u32 %v3416, 4294901760
    %3418 = vmatprep.subr.mxu0 %v3417
    %v3419 = vand.u32 %v2517, 4294901760
    %v3420 = vsub.f32 %v2517, %v3419
    %v3421 = vand.u32 %v3420, 4294901760
    %v3422 = vsub.f32 %v3420, %v3421
    %v3423 = vand.u32 %v3422, 4294901760
    %3424 = vmatpush1.msra.mxu0 %v3423
    %v3425 = vand.u32 %v2522, 4294901760
    %v3426 = vsub.f32 %v2522, %v3425
    %v3427 = vand.u32 %v3426, 4294901760
    %v3428 = vsub.f32 %v3426, %v3427
    %v3429 = vand.u32 %v3428, 4294901760
    %3430 = vmatprep.subr.mxu0 %v3429
    %v3431 = vand.u32 %v2521, 4294901760
    %v3432 = vsub.f32 %v2521, %v3431
    %v3433 = vand.u32 %v3432, 4294901760
    %v3434 = vsub.f32 %v3432, %v3433
    %v3435 = vand.u32 %v3434, 4294901760
    %3436 = vmatpush1.msra.mxu0 %v3435
    %3437 = vmatprep.subr.mxu0 0.0
    %3438 = vmatpush1.msra.mxu0 0.0
    %3439 = vmatprep.subr.mxu0 0.0
    %3440 = vmatpush1.msra.mxu0 0.0
    %3441 = vmatprep.subr.mxu0 0.0
    %3442 = vmatpush1.msra.mxu0 0.0
    %3443 = vmatprep.subr.mxu0 0.0
    %3444 = vmatpush1.msra.mxu0 0.0
    %3445 = vmatprep.subr.mxu0 0.0
    %3446 = vmatpush1.msra.mxu0 0.0
    %3447 = vmatprep.subr.mxu0 0.0
    %3448 = vmatpush1.msra.mxu0 0.0
    %3449 = vmatprep.subr.mxu0 0.0
    %3450 = vmatpush1.msra.mxu0 0.0
    %3451 = vmatprep.subr.mxu0 0.0
    %3452 = vmatpush1.msra.mxu0 0.0
    %3453 = vmatprep.subr.mxu0 0.0
    %3454 = vmatpush1.msra.mxu0 0.0
    %3455 = vmatprep.subr.mxu0 0.0
    %3456 = vmatpush1.msra.mxu0 0.0
    %3457 = vmatprep.subr.mxu0 0.0
    %3458 = vmatpush1.msra.mxu0 0.0
    %3459 = vmatprep.subr.mxu0 0.0
    %3460 = vmatpush1.msra.mxu0 0.0
    %3461 = vmatprep.subr.mxu0 0.0
    %3462 = vmatpush1.msra.mxu0 0.0
    %3463 = vmatprep.subr.mxu0 0.0
    %3464 = vmatpush1.msra.mxu0 0.0
    %3465 = vmatprep.subr.mxu0 0.0
    %3466 = vmatpush1.msra.mxu0 0.0
    %3467 = vmatprep.subr.mxu0 0.0
    %3468 = vmatpush1.msra.mxu0 0.0
    %3469 = vmatprep.subr.mxu0 0.0
    %3470 = vmatpush1.msra.mxu0 0.0
    %3471 = vmatprep.subr.mxu0 0.0
    %3472 = vmatpush1.msra.mxu0 0.0
    %3473 = vmatprep.subr.mxu0 0.0
    %3474 = vmatpush1.msra.mxu0 0.0
    %3475 = vmatprep.subr.mxu0 0.0
    %3476 = vmatpush1.msra.mxu0 0.0
    %3477 = vmatprep.subr.mxu0 0.0
    %3478 = vmatpush1.msra.mxu0 0.0
    %3479 = vmatprep.subr.mxu0 0.0
    %3480 = vmatpush1.msra.mxu0 0.0
    %3481 = vmatprep.subr.mxu0 0.0
    %3482 = vmatpush1.msra.mxu0 0.0
    %3483 = vmatprep.mubr.f32.mxu0 0.0
    %v3484 = vand.u32 %v2560, 4294901760
    %3485 = vmatmul.mubr.f32.gmra.mrb[0].mxu0 %v3484
    %v3486 = vpop.f32.mrb[0].mxu0
    %v3487 = vadd.f32 %v3325, %v3486
    %v3488 = vpop.f32.mrb[0].mxu0
    %v3489 = vadd.f32 %v3327, %v3488
    %3490 = vdwg.mxu0
    %v3491 = vand.u32 %v2490, 4294901760
    %v3492 = vsub.f32 %v2490, %v3491
    %3493 = vmatprep.subr.mxu0 %v3492
    %v3494 = vand.u32 %v2489, 4294901760
    %v3495 = vsub.f32 %v2489, %v3494
    %3496 = vmatpush1.msra.mxu0 %v3495
    %v3497 = vand.u32 %v2494, 4294901760
    %v3498 = vsub.f32 %v2494, %v3497
    %3499 = vmatprep.subr.mxu0 %v3498
    %v3500 = vand.u32 %v2493, 4294901760
    %v3501 = vsub.f32 %v2493, %v3500
    %3502 = vmatpush1.msra.mxu0 %v3501
    %v3503 = vand.u32 %v2498, 4294901760
    %v3504 = vsub.f32 %v2498, %v3503
    %3505 = vmatprep.subr.mxu0 %v3504
    %v3506 = vand.u32 %v2497, 4294901760
    %v3507 = vsub.f32 %v2497, %v3506
    %3508 = vmatpush1.msra.mxu0 %v3507
    %v3509 = vand.u32 %v2502, 4294901760
    %v3510 = vsub.f32 %v2502, %v3509
    %3511 = vmatprep.subr.mxu0 %v3510
    %v3512 = vand.u32 %v2501, 4294901760
    %v3513 = vsub.f32 %v2501, %v3512
    %3514 = vmatpush1.msra.mxu0 %v3513
    %v3515 = vand.u32 %v2506, 4294901760
    %v3516 = vsub.f32 %v2506, %v3515
    %3517 = vmatprep.subr.mxu0 %v3516
    %v3518 = vand.u32 %v2505, 4294901760
    %v3519 = vsub.f32 %v2505, %v3518
    %3520 = vmatpush1.msra.mxu0 %v3519
    %v3521 = vand.u32 %v2510, 4294901760
    %v3522 = vsub.f32 %v2510, %v3521
    %3523 = vmatprep.subr.mxu0 %v3522
    %v3524 = vand.u32 %v2509, 4294901760
    %v3525 = vsub.f32 %v2509, %v3524
    %3526 = vmatpush1.msra.mxu0 %v3525
    %v3527 = vand.u32 %v2514, 4294901760
    %v3528 = vsub.f32 %v2514, %v3527
    %3529 = vmatprep.subr.mxu0 %v3528
    %v3530 = vand.u32 %v2513, 4294901760
    %v3531 = vsub.f32 %v2513, %v3530
    %3532 = vmatpush1.msra.mxu0 %v3531
    %v3533 = vand.u32 %v2518, 4294901760
    %v3534 = vsub.f32 %v2518, %v3533
    %3535 = vmatprep.subr.mxu0 %v3534
    %v3536 = vand.u32 %v2517, 4294901760
    %v3537 = vsub.f32 %v2517, %v3536
    %3538 = vmatpush1.msra.mxu0 %v3537
    %v3539 = vand.u32 %v2522, 4294901760
    %v3540 = vsub.f32 %v2522, %v3539
    %3541 = vmatprep.subr.mxu0 %v3540
    %v3542 = vand.u32 %v2521, 4294901760
    %v3543 = vsub.f32 %v2521, %v3542
    %3544 = vmatpush1.msra.mxu0 %v3543
    %3545 = vmatprep.subr.mxu0 0.0
    %3546 = vmatpush1.msra.mxu0 0.0
    %3547 = vmatprep.subr.mxu0 0.0
    %3548 = vmatpush1.msra.mxu0 0.0
    %3549 = vmatprep.subr.mxu0 0.0
    %3550 = vmatpush1.msra.mxu0 0.0
    %3551 = vmatprep.subr.mxu0 0.0
    %3552 = vmatpush1.msra.mxu0 0.0
    %3553 = vmatprep.subr.mxu0 0.0
    %3554 = vmatpush1.msra.mxu0 0.0
    %3555 = vmatprep.subr.mxu0 0.0
    %3556 = vmatpush1.msra.mxu0 0.0
    %3557 = vmatprep.subr.mxu0 0.0
    %3558 = vmatpush1.msra.mxu0 0.0
    %3559 = vmatprep.subr.mxu0 0.0
    %3560 = vmatpush1.msra.mxu0 0.0
    %3561 = vmatprep.subr.mxu0 0.0
    %3562 = vmatpush1.msra.mxu0 0.0
    %3563 = vmatprep.subr.mxu0 0.0
    %3564 = vmatpush1.msra.mxu0 0.0
    %3565 = vmatprep.subr.mxu0 0.0
    %3566 = vmatpush1.msra.mxu0 0.0
    %3567 = vmatprep.subr.mxu0 0.0
    %3568 = vmatpush1.msra.mxu0 0.0
    %3569 = vmatprep.subr.mxu0 0.0
    %3570 = vmatpush1.msra.mxu0 0.0
    %3571 = vmatprep.subr.mxu0 0.0
    %3572 = vmatpush1.msra.mxu0 0.0
    %3573 = vmatprep.subr.mxu0 0.0
    %3574 = vmatpush1.msra.mxu0 0.0
    %3575 = vmatprep.subr.mxu0 0.0
    %3576 = vmatpush1.msra.mxu0 0.0
    %3577 = vmatprep.subr.mxu0 0.0
    %3578 = vmatpush1.msra.mxu0 0.0
    %3579 = vmatprep.subr.mxu0 0.0
    %3580 = vmatpush1.msra.mxu0 0.0
    %3581 = vmatprep.subr.mxu0 0.0
    %3582 = vmatpush1.msra.mxu0 0.0
    %3583 = vmatprep.subr.mxu0 0.0
    %3584 = vmatpush1.msra.mxu0 0.0
    %3585 = vmatprep.subr.mxu0 0.0
    %3586 = vmatpush1.msra.mxu0 0.0
    %3587 = vmatprep.subr.mxu0 0.0
    %3588 = vmatpush1.msra.mxu0 0.0
    %3589 = vmatprep.subr.mxu0 0.0
    %3590 = vmatpush1.msra.mxu0 0.0
    %3591 = vmatprep.mubr.f32.mxu0 0.0
    %v3592 = vand.u32 %v2560, 4294901760
    %v3593 = vsub.f32 %v2560, %v3592
    %3594 = vmatmul.mubr.f32.gmra.mrb[0].mxu0 %v3593
    %v3595 = vpop.f32.mrb[0].mxu0
    %v3596 = vadd.f32 %v3487, %v3595
    %v3597 = vpop.f32.mrb[0].mxu0
    %v3598 = vadd.f32 %v3489, %v3597
    %3599 = vdwg.mxu0
    %v3600 = vand.u32 %v2490, 4294901760
    %3601 = vmatprep.subr.mxu0 %v3600
    %v3602 = vand.u32 %v2489, 4294901760
    %3603 = vmatpush1.msra.mxu0 %v3602
    %v3604 = vand.u32 %v2494, 4294901760
    %3605 = vmatprep.subr.mxu0 %v3604
    %v3606 = vand.u32 %v2493, 4294901760
    %3607 = vmatpush1.msra.mxu0 %v3606
    %v3608 = vand.u32 %v2498, 4294901760
    %3609 = vmatprep.subr.mxu0 %v3608
    %v3610 = vand.u32 %v2497, 4294901760
    %3611 = vmatpush1.msra.mxu0 %v3610
    %v3612 = vand.u32 %v2502, 4294901760
    %3613 = vmatprep.subr.mxu0 %v3612
    %v3614 = vand.u32 %v2501, 4294901760
    %3615 = vmatpush1.msra.mxu0 %v3614
    %v3616 = vand.u32 %v2506, 4294901760
    %3617 = vmatprep.subr.mxu0 %v3616
    %v3618 = vand.u32 %v2505, 4294901760
    %3619 = vmatpush1.msra.mxu0 %v3618
    %v3620 = vand.u32 %v2510, 4294901760
    %3621 = vmatprep.subr.mxu0 %v3620
    %v3622 = vand.u32 %v2509, 4294901760
    %3623 = vmatpush1.msra.mxu0 %v3622
    %v3624 = vand.u32 %v2514, 4294901760
    %3625 = vmatprep.subr.mxu0 %v3624
    %v3626 = vand.u32 %v2513, 4294901760
    %3627 = vmatpush1.msra.mxu0 %v3626
    %v3628 = vand.u32 %v2518, 4294901760
    %3629 = vmatprep.subr.mxu0 %v3628
    %v3630 = vand.u32 %v2517, 4294901760
    %3631 = vmatpush1.msra.mxu0 %v3630
    %v3632 = vand.u32 %v2522, 4294901760
    %3633 = vmatprep.subr.mxu0 %v3632
    %v3634 = vand.u32 %v2521, 4294901760
    %3635 = vmatpush1.msra.mxu0 %v3634
    %3636 = vmatprep.subr.mxu0 0.0
    %3637 = vmatpush1.msra.mxu0 0.0
    %3638 = vmatprep.subr.mxu0 0.0
    %3639 = vmatpush1.msra.mxu0 0.0
    %3640 = vmatprep.subr.mxu0 0.0
    %3641 = vmatpush1.msra.mxu0 0.0
    %3642 = vmatprep.subr.mxu0 0.0
    %3643 = vmatpush1.msra.mxu0 0.0
    %3644 = vmatprep.subr.mxu0 0.0
    %3645 = vmatpush1.msra.mxu0 0.0
    %3646 = vmatprep.subr.mxu0 0.0
    %3647 = vmatpush1.msra.mxu0 0.0
    %3648 = vmatprep.subr.mxu0 0.0
    %3649 = vmatpush1.msra.mxu0 0.0
    %3650 = vmatprep.subr.mxu0 0.0
    %3651 = vmatpush1.msra.mxu0 0.0
    %3652 = vmatprep.subr.mxu0 0.0
    %3653 = vmatpush1.msra.mxu0 0.0
    %3654 = vmatprep.subr.mxu0 0.0
    %3655 = vmatpush1.msra.mxu0 0.0
    %3656 = vmatprep.subr.mxu0 0.0
    %3657 = vmatpush1.msra.mxu0 0.0
    %3658 = vmatprep.subr.mxu0 0.0
    %3659 = vmatpush1.msra.mxu0 0.0
    %3660 = vmatprep.subr.mxu0 0.0
    %3661 = vmatpush1.msra.mxu0 0.0
    %3662 = vmatprep.subr.mxu0 0.0
    %3663 = vmatpush1.msra.mxu0 0.0
    %3664 = vmatprep.subr.mxu0 0.0
    %3665 = vmatpush1.msra.mxu0 0.0
    %3666 = vmatprep.subr.mxu0 0.0
    %3667 = vmatpush1.msra.mxu0 0.0
    %3668 = vmatprep.subr.mxu0 0.0
    %3669 = vmatpush1.msra.mxu0 0.0
    %3670 = vmatprep.subr.mxu0 0.0
    %3671 = vmatpush1.msra.mxu0 0.0
    %3672 = vmatprep.subr.mxu0 0.0
    %3673 = vmatpush1.msra.mxu0 0.0
    %3674 = vmatprep.subr.mxu0 0.0
    %3675 = vmatpush1.msra.mxu0 0.0
    %3676 = vmatprep.subr.mxu0 0.0
    %3677 = vmatpush1.msra.mxu0 0.0
    %3678 = vmatprep.subr.mxu0 0.0
    %3679 = vmatpush1.msra.mxu0 0.0
    %3680 = vmatprep.subr.mxu0 0.0
    %3681 = vmatpush1.msra.mxu0 0.0
    %3682 = vmatprep.mubr.f32.mxu0 0.0
    %v3683 = vand.u32 %v2560, 4294901760
    %v3684 = vsub.f32 %v2560, %v3683
    %v3685 = vand.u32 %v3684, 4294901760
    %3686 = vmatmul.mubr.f32.gmra.mrb[0].mxu0 %v3685
    %v3687 = vpop.f32.mrb[0].mxu0
    %v3688 = vadd.f32 %v3596, %v3687
    %v3689 = vpop.f32.mrb[0].mxu0
    %v3690 = vadd.f32 %v3598, %v3689
    %3691 = vdwg.mxu0
    %v3692 = vand.u32 %v2490, 4294901760
    %v3693 = vsub.f32 %v2490, %v3692
    %v3694 = vand.u32 %v3693, 4294901760
    %3695 = vmatprep.subr.mxu0 %v3694
    %v3696 = vand.u32 %v2489, 4294901760
    %v3697 = vsub.f32 %v2489, %v3696
    %v3698 = vand.u32 %v3697, 4294901760
    %3699 = vmatpush1.msra.mxu0 %v3698
    %v3700 = vand.u32 %v2494, 4294901760
    %v3701 = vsub.f32 %v2494, %v3700
    %v3702 = vand.u32 %v3701, 4294901760
    %3703 = vmatprep.subr.mxu0 %v3702
    %v3704 = vand.u32 %v2493, 4294901760
    %v3705 = vsub.f32 %v2493, %v3704
    %v3706 = vand.u32 %v3705, 4294901760
    %3707 = vmatpush1.msra.mxu0 %v3706
    %v3708 = vand.u32 %v2498, 4294901760
    %v3709 = vsub.f32 %v2498, %v3708
    %v3710 = vand.u32 %v3709, 4294901760
    %3711 = vmatprep.subr.mxu0 %v3710
    %v3712 = vand.u32 %v2497, 4294901760
    %v3713 = vsub.f32 %v2497, %v3712
    %v3714 = vand.u32 %v3713, 4294901760
    %3715 = vmatpush1.msra.mxu0 %v3714
    %v3716 = vand.u32 %v2502, 4294901760
    %v3717 = vsub.f32 %v2502, %v3716
    %v3718 = vand.u32 %v3717, 4294901760
    %3719 = vmatprep.subr.mxu0 %v3718
    %v3720 = vand.u32 %v2501, 4294901760
    %v3721 = vsub.f32 %v2501, %v3720
    %v3722 = vand.u32 %v3721, 4294901760
    %3723 = vmatpush1.msra.mxu0 %v3722
    %v3724 = vand.u32 %v2506, 4294901760
    %v3725 = vsub.f32 %v2506, %v3724
    %v3726 = vand.u32 %v3725, 4294901760
    %3727 = vmatprep.subr.mxu0 %v3726
    %v3728 = vand.u32 %v2505, 4294901760
    %v3729 = vsub.f32 %v2505, %v3728
    %v3730 = vand.u32 %v3729, 4294901760
    %3731 = vmatpush1.msra.mxu0 %v3730
    %v3732 = vand.u32 %v2510, 4294901760
    %v3733 = vsub.f32 %v2510, %v3732
    %v3734 = vand.u32 %v3733, 4294901760
    %3735 = vmatprep.subr.mxu0 %v3734
    %v3736 = vand.u32 %v2509, 4294901760
    %v3737 = vsub.f32 %v2509, %v3736
    %v3738 = vand.u32 %v3737, 4294901760
    %3739 = vmatpush1.msra.mxu0 %v3738
    %v3740 = vand.u32 %v2514, 4294901760
    %v3741 = vsub.f32 %v2514, %v3740
    %v3742 = vand.u32 %v3741, 4294901760
    %3743 = vmatprep.subr.mxu0 %v3742
    %v3744 = vand.u32 %v2513, 4294901760
    %v3745 = vsub.f32 %v2513, %v3744
    %v3746 = vand.u32 %v3745, 4294901760
    %3747 = vmatpush1.msra.mxu0 %v3746
    %v3748 = vand.u32 %v2518, 4294901760
    %v3749 = vsub.f32 %v2518, %v3748
    %v3750 = vand.u32 %v3749, 4294901760
    %3751 = vmatprep.subr.mxu0 %v3750
    %v3752 = vand.u32 %v2517, 4294901760
    %v3753 = vsub.f32 %v2517, %v3752
    %v3754 = vand.u32 %v3753, 4294901760
    %3755 = vmatpush1.msra.mxu0 %v3754
    %v3756 = vand.u32 %v2522, 4294901760
    %v3757 = vsub.f32 %v2522, %v3756
    %v3758 = vand.u32 %v3757, 4294901760
    %3759 = vmatprep.subr.mxu0 %v3758
    %v3760 = vand.u32 %v2521, 4294901760
    %v3761 = vsub.f32 %v2521, %v3760
    %v3762 = vand.u32 %v3761, 4294901760
    %3763 = vmatpush1.msra.mxu0 %v3762
    %3764 = vmatprep.subr.mxu0 0.0
    %3765 = vmatpush1.msra.mxu0 0.0
    %3766 = vmatprep.subr.mxu0 0.0
    %3767 = vmatpush1.msra.mxu0 0.0
    %3768 = vmatprep.subr.mxu0 0.0
    %3769 = vmatpush1.msra.mxu0 0.0
    %3770 = vmatprep.subr.mxu0 0.0
    %3771 = vmatpush1.msra.mxu0 0.0
    %3772 = vmatprep.subr.mxu0 0.0
    %3773 = vmatpush1.msra.mxu0 0.0
    %3774 = vmatprep.subr.mxu0 0.0
    %3775 = vmatpush1.msra.mxu0 0.0
    %3776 = vmatprep.subr.mxu0 0.0
    %3777 = vmatpush1.msra.mxu0 0.0
    %3778 = vmatprep.subr.mxu0 0.0
    %3779 = vmatpush1.msra.mxu0 0.0
    %3780 = vmatprep.subr.mxu0 0.0
    %3781 = vmatpush1.msra.mxu0 0.0
    %3782 = vmatprep.subr.mxu0 0.0
    %3783 = vmatpush1.msra.mxu0 0.0
    %3784 = vmatprep.subr.mxu0 0.0
    %3785 = vmatpush1.msra.mxu0 0.0
    %3786 = vmatprep.subr.mxu0 0.0
    %3787 = vmatpush1.msra.mxu0 0.0
    %3788 = vmatprep.subr.mxu0 0.0
    %3789 = vmatpush1.msra.mxu0 0.0
    %3790 = vmatprep.subr.mxu0 0.0
    %3791 = vmatpush1.msra.mxu0 0.0
    %3792 = vmatprep.subr.mxu0 0.0
    %3793 = vmatpush1.msra.mxu0 0.0
    %3794 = vmatprep.subr.mxu0 0.0
    %3795 = vmatpush1.msra.mxu0 0.0
    %3796 = vmatprep.subr.mxu0 0.0
    %3797 = vmatpush1.msra.mxu0 0.0
    %3798 = vmatprep.subr.mxu0 0.0
    %3799 = vmatpush1.msra.mxu0 0.0
    %3800 = vmatprep.subr.mxu0 0.0
    %3801 = vmatpush1.msra.mxu0 0.0
    %3802 = vmatprep.subr.mxu0 0.0
    %3803 = vmatpush1.msra.mxu0 0.0
    %3804 = vmatprep.subr.mxu0 0.0
    %3805 = vmatpush1.msra.mxu0 0.0
    %3806 = vmatprep.subr.mxu0 0.0
    %3807 = vmatpush1.msra.mxu0 0.0
    %3808 = vmatprep.subr.mxu0 0.0
    %3809 = vmatpush1.msra.mxu0 0.0
    %3810 = vmatprep.mubr.f32.mxu0 0.0
    %v3811 = vand.u32 %v2560, 4294901760
    %3812 = vmatmul.mubr.f32.gmra.mrb[0].mxu0 %v3811
    %v3813 = vpop.f32.mrb[0].mxu0
    %v3814 = vadd.f32 %v3688, %v3813
    %v3815 = vpop.f32.mrb[0].mxu0
    %v3816 = vadd.f32 %v3690, %v3815
    %3817 = vdwg.mxu0
    %v3818 = vand.u32 %v2490, 4294901760
    %3819 = vmatprep.subr.mxu0 %v3818
    %v3820 = vand.u32 %v2489, 4294901760
    %3821 = vmatpush1.msra.mxu0 %v3820
    %v3822 = vand.u32 %v2494, 4294901760
    %3823 = vmatprep.subr.mxu0 %v3822
    %v3824 = vand.u32 %v2493, 4294901760
    %3825 = vmatpush1.msra.mxu0 %v3824
    %v3826 = vand.u32 %v2498, 4294901760
    %3827 = vmatprep.subr.mxu0 %v3826
    %v3828 = vand.u32 %v2497, 4294901760
    %3829 = vmatpush1.msra.mxu0 %v3828
    %v3830 = vand.u32 %v2502, 4294901760
    %3831 = vmatprep.subr.mxu0 %v3830
    %v3832 = vand.u32 %v2501, 4294901760
    %3833 = vmatpush1.msra.mxu0 %v3832
    %v3834 = vand.u32 %v2506, 4294901760
    %3835 = vmatprep.subr.mxu0 %v3834
    %v3836 = vand.u32 %v2505, 4294901760
    %3837 = vmatpush1.msra.mxu0 %v3836
    %v3838 = vand.u32 %v2510, 4294901760
    %3839 = vmatprep.subr.mxu0 %v3838
    %v3840 = vand.u32 %v2509, 4294901760
    %3841 = vmatpush1.msra.mxu0 %v3840
    %v3842 = vand.u32 %v2514, 4294901760
    %3843 = vmatprep.subr.mxu0 %v3842
    %v3844 = vand.u32 %v2513, 4294901760
    %3845 = vmatpush1.msra.mxu0 %v3844
    %v3846 = vand.u32 %v2518, 4294901760
    %3847 = vmatprep.subr.mxu0 %v3846
    %v3848 = vand.u32 %v2517, 4294901760
    %3849 = vmatpush1.msra.mxu0 %v3848
    %v3850 = vand.u32 %v2522, 4294901760
    %3851 = vmatprep.subr.mxu0 %v3850
    %v3852 = vand.u32 %v2521, 4294901760
    %3853 = vmatpush1.msra.mxu0 %v3852
    %3854 = vmatprep.subr.mxu0 0.0
    %3855 = vmatpush1.msra.mxu0 0.0
    %3856 = vmatprep.subr.mxu0 0.0
    %3857 = vmatpush1.msra.mxu0 0.0
    %3858 = vmatprep.subr.mxu0 0.0
    %3859 = vmatpush1.msra.mxu0 0.0
    %3860 = vmatprep.subr.mxu0 0.0
    %3861 = vmatpush1.msra.mxu0 0.0
    %3862 = vmatprep.subr.mxu0 0.0
    %3863 = vmatpush1.msra.mxu0 0.0
    %3864 = vmatprep.subr.mxu0 0.0
    %3865 = vmatpush1.msra.mxu0 0.0
    %3866 = vmatprep.subr.mxu0 0.0
    %3867 = vmatpush1.msra.mxu0 0.0
    %3868 = vmatprep.subr.mxu0 0.0
    %3869 = vmatpush1.msra.mxu0 0.0
    %3870 = vmatprep.subr.mxu0 0.0
    %3871 = vmatpush1.msra.mxu0 0.0
    %3872 = vmatprep.subr.mxu0 0.0
    %3873 = vmatpush1.msra.mxu0 0.0
    %3874 = vmatprep.subr.mxu0 0.0
    %3875 = vmatpush1.msra.mxu0 0.0
    %3876 = vmatprep.subr.mxu0 0.0
    %3877 = vmatpush1.msra.mxu0 0.0
    %3878 = vmatprep.subr.mxu0 0.0
    %3879 = vmatpush1.msra.mxu0 0.0
    %3880 = vmatprep.subr.mxu0 0.0
    %3881 = vmatpush1.msra.mxu0 0.0
    %3882 = vmatprep.subr.mxu0 0.0
    %3883 = vmatpush1.msra.mxu0 0.0
    %3884 = vmatprep.subr.mxu0 0.0
    %3885 = vmatpush1.msra.mxu0 0.0
    %3886 = vmatprep.subr.mxu0 0.0
    %3887 = vmatpush1.msra.mxu0 0.0
    %3888 = vmatprep.subr.mxu0 0.0
    %3889 = vmatpush1.msra.mxu0 0.0
    %3890 = vmatprep.subr.mxu0 0.0
    %3891 = vmatpush1.msra.mxu0 0.0
    %3892 = vmatprep.subr.mxu0 0.0
    %3893 = vmatpush1.msra.mxu0 0.0
    %3894 = vmatprep.subr.mxu0 0.0
    %3895 = vmatpush1.msra.mxu0 0.0
    %3896 = vmatprep.subr.mxu0 0.0
    %3897 = vmatpush1.msra.mxu0 0.0
    %3898 = vmatprep.subr.mxu0 0.0
    %3899 = vmatpush1.msra.mxu0 0.0
    %3900 = vmatprep.mubr.f32.mxu0 0.0
    %v3901 = vand.u32 %v2560, 4294901760
    %3902 = vmatmul.mubr.f32.gmra.mrb[0].mxu0 %v3901
    %v3903 = vpop.f32.mrb[0].mxu0
    %v3904 = vadd.f32 %v3814, %v3903
    %v3905 = vpop.f32.mrb[0].mxu0
    %v3906 = vadd.f32 %v3816, %v3905
    %3907 = vdwg.mxu0
    %v3908 = vadd.f32 %v3231, %v3233
    %v3909 = vadd.f32 %v3908, %v3904
    %v3910 = vadd.f32 %v3909, %v3906
    %3911 = vadd.xlane.f32.xlu0 %v3910
    %v3912 = vpop.xlane.xlu0 %3911
    %v3913 = vmul.f32 %v3912, 0.001953125
    %v3914 = vsub.f32 %v3231, %v3913
    %v3915 = vsub.f32 %v3233, %v3913
    %v3916 = vsub.f32 %v3904, %v3913
    %v3917 = vsub.f32 %v3906, %v3913
    %v3918 = vmul.f32 %v3914, %v3914
    %v3919 = vmul.f32 %v3915, %v3915
    %v3920 = vmul.f32 %v3916, %v3916
    %v3921 = vmul.f32 %v3917, %v3917
    %v3922 = vadd.f32 %v3918, %v3919
    %v3923 = vadd.f32 %v3922, %v3920
    %v3924 = vadd.f32 %v3923, %v3921
    %3925 = vadd.xlane.f32.xlu0 %v3924
    %v3926 = vpop.xlane.xlu0 %3925
    %v3927 = vmul.f32 %v3926, 0.001953125
    %v3928 = vadd.f32 %v3927, 1e-05
    %v3929 = vrsqrt.pop %v3928
    %v3930 = vmul.f32 %v3914, %v3929
    %v3931 = vmul.f32 %v3915, %v3929
    %v3932 = vmul.f32 %v3916, %v3929
    %v3933 = vmul.f32 %v3917, %v3929
    %3935 = vset.pattern.permute.xlu0 0
    %3936 = vperm.xlu0 %3935, %v2130
    %v3937 = vpop.permute.xlu0 %3936
    %v3939 = vmul.f32 %v3930, %v3937
    %v3940 = vmul.f32 %v3931, %v3937
    %v3941 = vmul.f32 %v3932, %v3937
    %v3942 = vmul.f32 %v3933, %v3937
    %3944 = vset.pattern.permute.xlu0 0
    %3945 = vperm.xlu0 %3944, %v2131
    %v3946 = vpop.permute.xlu0 %3945
    %v3948 = vadd.f32 %v3939, %v3946
    %v3949 = vadd.f32 %v3940, %v3946
    %v3950 = vadd.f32 %v3941, %v3946
    %v3951 = vadd.f32 %v3942, %v3946
    %v3952 = vld [vmem:[#allocation2 + $0x8] sm:$0xff]
    %v3953 = vld [vmem:[#allocation2 + $0x10] sm:$0xff]
    %v3954 = vld [vmem:[#allocation2 + $0x18] sm:$0xff]
    %v3955 = vld [vmem:[#allocation2 + $0x20] sm:$0xff]
    %v3956 = vadd.f32 %v3948, %v3952
    %v3957 = vadd.f32 %v3949, %v3953
    %v3958 = vadd.f32 %v3950, %v3954
    %v3959 = vadd.f32 %v3951, %v3955
    %v3960 = vmax.f32 %v3956, 0.0
    %v3961 = vmax.f32 %v3957, 0.0
    %v3962 = vmax.f32 %v3958, 0.0
    %v3963 = vmax.f32 %v3959, 0.0
    %3964 = vst [vmem:[#allocation7] sm:$0xf] %v3960
    %3965 = vst [vmem:[#allocation7 + $0x8] sm:$0xf] %v3961
    %v3968 = vrot.slane %v3962, 4
    %v3969 = vrot.slane %v3963, 4
    %3972 = vst [vmem:[#allocation7] sm:$0xf0] %v3968
    %3973 = vst [vmem:[#allocation7 + $0x8] sm:$0xf0] %v3969
    // Predicated region
    $region46: #{tpu_custom_call.1} parent=1 // pred_check
      _
    $region47: #{tpu_custom_call.1} parent=1 // pred_check_branch
      %3975 = sbr.rel (0) target = $region49
    $region48: #{tpu_custom_call.1} parent=1 // pred_region
      %s3977 = ssub.s32 256, 256
      %3978 = vsyncadd [#allocation6], %s3977
      %s3980 = sshll.u32 [#allocation7], 4
      %s3981 = int_to_ptr.vmem [resolvable:$true] %s3980
      %3983 = dma.vmem_to_hbm [thread:$0]  %s3981, 256, %s10, [#allocation6]
    $region49: #{tpu_custom_call.1} parent=1 // pred_fallthru
      _
    // Predicated region
    $region50: #{tpu_custom_call.1} parent=1 // pred_check
      _
    $region51: #{tpu_custom_call.1} parent=1 // pred_check_branch
      %3985 = sbr.rel (0) target = $region53
    $region52: #{tpu_custom_call.1} parent=1 // pred_region
      %3986 = dma.done [#allocation6], 256
    $region53: #{tpu_custom_call.1} parent=1 // pred_fallthru
      _
    %3987 = vsyncpa [#allocation5], 1
    %3988 = vsyncpa [#allocation6], 1

</llo_original>
